<compile_context>
chip_gen: v6e
topology: v6e:2x2x1
jax: 0.10.0
libtpu: 0.0.40
codegen_flags: <defaults>
</compile_context>

<pallas_src>
import jax
import jax.numpy as jnp
from jax import lax
from jax.experimental import pallas as pl
from jax.experimental.pallas import tpu as pltpu

NEG_FILL = -10000.0


def _roberta_head_kernel(ids_ref, emb_ref, w1_ref, b1_ref, w2_ref, b2_ref, out_ref):
    n_tok = ids_ref.shape[0]                 # b_tile * seq_len tokens in this batch tile
    vocab_pad, hidden = emb_ref.shape
    b_tile = out_ref.shape[0]
    seq_len = n_tok // b_tile

    # ---- fused embedding gather on the MXU: one-hot(ids) @ table (table is VMEM-resident) ----
    # Masked / padded tokens were remapped (wrapper-side) to a sentinel row whose features are
    # all -10000, so masked_fill(~mask, -10000) happens "for free" inside the gather.
    ids = ids_ref[...]                                                     # (n_tok, 1) int32
    vocab_iota = lax.broadcasted_iota(jnp.int32, (n_tok, vocab_pad), 1)
    onehot = (ids == vocab_iota).astype(jnp.float32)                       # (n_tok, vocab_pad)
    emb = jnp.dot(onehot, emb_ref[...],
                  preferred_element_type=jnp.float32)                      # (n_tok, hidden)

    # ---- max over the sequence dim (sublane reduction per batch row) ----
    feat = jnp.max(emb.reshape(b_tile, seq_len, hidden), axis=1)           # (b_tile, hidden)

    # ---- FFN: Linear -> ReLU -> (Dropout(0.3): identity in eval) -> Linear ----
    h = jnp.dot(feat, w1_ref[...], preferred_element_type=jnp.float32) + b1_ref[...]
    h = jnp.maximum(h, 0.0)
    out = jnp.dot(h, w2_ref[...], preferred_element_type=jnp.float32) + b2_ref[...]
    out_ref[...] = out.astype(out_ref.dtype)                               # lane-dense store


def _round_up(x, m):
    return (x + m - 1) // m * m


def _pick_b_tile(b_pad, s_pad, vocab_pad, hidden):
    """Largest multiple-of-8 batch tile that fits a VMEM budget; prefer >=2 grid steps (v7x)."""
    budget = 8 * 1024 * 1024
    cands = [t for t in range(8, min(128, b_pad) + 1, 8) if b_pad % t == 0]
    pref = [t for t in cands if b_pad // t >= 2] or cands
    fits = [t for t in pref if t * s_pad * (vocab_pad + hidden) * 4 <= budget]
    return max(fits) if fits else min(pref)


def roberta_forward(text_indices, text_mask, emb_table, w1, b1, w2, b2, *, b_tile=None):
    """Masked max-pool over token embeddings + 2-layer FFN (Roberta.forward hot path)."""
    B, S = text_indices.shape
    V, H = emb_table.shape
    P = w2.shape[1]

    S_pad = _round_up(S, 8)                       # keeps the in-kernel (b,s,H) reshape tile-aligned
    B_pad = _round_up(B, 8)
    vocab_pad = _round_up(V + 1, 128)             # +1 sentinel row; lane-dense contraction dim
    p_pad = _round_up(P, 128)                     # lane-dense output / MXU tile

    if b_tile is None:
        b_tile = _pick_b_tile(B_pad, S_pad, vocab_pad, H)
    assert B_pad % b_tile == 0 and b_tile % 8 == 0

    # --- wrapper-side layout plumbing (free): sentinel remap + token-major column for ids ---
    sentinel = jnp.int32(V)                                       # table row V == all -10000
    ids_eff = jnp.where(text_mask.astype(bool),
                        text_indices.astype(jnp.int32), sentinel)  # masked tokens -> sentinel
    ids_full = jnp.full((B_pad, S_pad), sentinel, dtype=jnp.int32)
    ids_full = ids_full.at[:B, :S].set(ids_eff)                    # padded rows/cols -> sentinel
    ids_col = ids_full.reshape(B_pad * S_pad, 1)                   # token-major column

    embp = jnp.zeros((vocab_pad, H), jnp.float32)
    embp = embp.at[:V, :].set(emb_table.astype(jnp.float32))
    embp = embp.at[V, :].set(jnp.float32(NEG_FILL))                # sentinel row = -10000

    w1f = w1.astype(jnp.float32)
    b1_2d = b1.reshape(1, H).astype(jnp.float32)
    w2p = jnp.zeros((H, p_pad), jnp.float32).at[:, :P].set(w2.astype(jnp.float32))
    b2p = jnp.zeros((1, p_pad), jnp.float32).at[0, :P].set(b2.astype(jnp.float32))

    n_tok = b_tile * S_pad
    grid = (B_pad // b_tile,)

    out_pad = pl.pallas_call(
        _roberta_head_kernel,
        out_shape=jax.ShapeDtypeStruct((B_pad, p_pad), jnp.float32),
        grid=grid,
        in_specs=[
            pl.BlockSpec((n_tok, 1), lambda bi: (bi, 0)),          # token-id column (per batch tile)
            pl.BlockSpec((vocab_pad, H), lambda bi: (0, 0)),       # embedding table (VMEM-resident)
            pl.BlockSpec((H, H), lambda bi: (0, 0)),               # w1 (resident)
            pl.BlockSpec((1, H), lambda bi: (0, 0)),               # b1
            pl.BlockSpec((H, p_pad), lambda bi: (0, 0)),           # w2 (lane padded)
            pl.BlockSpec((1, p_pad), lambda bi: (0, 0)),           # b2 (lane padded)
        ],
        out_specs=pl.BlockSpec((b_tile, p_pad), lambda bi: (bi, 0)),
        compiler_params=pltpu.CompilerParams(
            dimension_semantics=("parallel",),                     # batch tiles -> v7x megacore
            vmem_limit_bytes=24 * 1024 * 1024,                     # right-sized (footprint ~6 MiB)
        ),
    )(ids_col, embp, w1f, b1_2d, w2p, b2p)

    return out_pad[:B, :P]


if __name__ == "__main__":
    # Small, deterministic shapes consistent with the module (bert_size=H, polarity_size=P).
    B, S, H, P, VOCAB = 16, 256, 128, 3, 64

    key = jax.random.PRNGKey(0)
    k_emb, k_ids, k_w1, k_b1, k_w2, k_b2 = jax.random.split(key, 6)

    emb_table = jax.random.normal(k_emb, (VOCAB, H), dtype=jnp.float32) * 0.1
    text_indices = jax.random.randint(k_ids, (B, S), 0, VOCAB, dtype=jnp.int32)

    # Deterministic ragged lengths -> prefix padding mask.
    lens = (jnp.arange(B, dtype=jnp.int32) * 37) % S + 1
    text_mask = (jnp.arange(S)[None, :] < lens[:, None]).astype(jnp.int32)   # (B, S)

    w1 = jax.random.normal(k_w1, (H, H), dtype=jnp.float32) * 0.05
    b1 = jax.random.normal(k_b1, (H,), dtype=jnp.float32) * 0.01
    w2 = jax.random.normal(k_w2, (H, P), dtype=jnp.float32) * 0.05
    b2 = jax.random.normal(k_b2, (P,), dtype=jnp.float32) * 0.01

    out = roberta_forward(text_indices, text_mask, emb_table, w1, b1, w2, b2)
    out = jax.block_until_ready(out)

    # Pure-JAX reference of the same math.
    txt_embed = jnp.take(emb_table, text_indices, axis=0)
    masked = jnp.where(text_mask[:, :, None] > 0, txt_embed, -10000.0)
    feat = jnp.max(masked, axis=1)
    h = jnp.maximum(jnp.dot(feat, w1, precision=jax.lax.Precision.HIGHEST) + b1, 0.0)
    ref = jnp.dot(h, w2, precision=jax.lax.Precision.HIGHEST) + b2

    assert out.shape == (B, P)
    assert jnp.allclose(out, ref, atol=2e-3, rtol=2e-3), "mismatch vs reference"

    print("KERNEL_OK")
</pallas_src>

<mosaic_0001>
module attributes {stable_mosaic.version = 11 : i64} {
  func.func @_roberta_head_kernel(%arg0: i32, %arg1: memref<2048x1xi32, #tpu.memory_space<vmem>>, %arg2: memref<128x128xf32, #tpu.memory_space<vmem>>, %arg3: memref<128x128xf32, #tpu.memory_space<vmem>>, %arg4: memref<1x128xf32, #tpu.memory_space<vmem>>, %arg5: memref<128x128xf32, #tpu.memory_space<vmem>>, %arg6: memref<1x128xf32, #tpu.memory_space<vmem>>, %arg7: memref<8x128xf32, #tpu.memory_space<vmem>>) attributes {dimension_semantics = [#tpu.dimension_semantics<parallel>], iteration_bounds = array<i64: 2>, scalar_prefetch = 0 : i64, scratch_operands = 0 : i64, tpu.core_type = #tpu.core_type<tc>, window_params = [{transform_indices = @transform_0, window_bounds = array<i64: 2048, 1>}, {pipeline_mode = #tpu.pipeline_mode<synchronous>, transform_indices = @transform_1, window_bounds = array<i64: 128, 128>}, {pipeline_mode = #tpu.pipeline_mode<synchronous>, transform_indices = @transform_2, window_bounds = array<i64: 128, 128>}, {pipeline_mode = #tpu.pipeline_mode<synchronous>, transform_indices = @transform_3, window_bounds = array<i64: 1, 128>}, {pipeline_mode = #tpu.pipeline_mode<synchronous>, transform_indices = @transform_4, window_bounds = array<i64: 128, 128>}, {pipeline_mode = #tpu.pipeline_mode<synchronous>, transform_indices = @transform_5, window_bounds = array<i64: 1, 128>}, {transform_indices = @transform_6, window_bounds = array<i64: 8, 128>}]} {
    %c0 = arith.constant 0 : index
    %c0_0 = arith.constant 0 : index
    %0 = vector.load %arg1[%c0, %c0_0] : memref<2048x1xi32, #tpu.memory_space<vmem>>, vector<2048x1xi32>
    %1 = tpu.iota {dimensions = array<i32: 1>} : vector<2048x128xi32>
    %2 = vector.broadcast %0 : vector<2048x1xi32> to vector<2048x128xi32>
    %3 = arith.cmpi eq, %2, %1 : vector<2048x128xi32>
    %4 = arith.extui %3 : vector<2048x128xi1> to vector<2048x128xi32>
    %5 = arith.sitofp %4 : vector<2048x128xi32> to vector<2048x128xf32>
    %c0_1 = arith.constant 0 : index
    %c0_2 = arith.constant 0 : index
    %6 = vector.load %arg2[%c0_1, %c0_2] : memref<128x128xf32, #tpu.memory_space<vmem>>, vector<128x128xf32>
    %cst = arith.constant dense<0.000000e+00> : vector<2048x128xf32>
    %7 = tpu.matmul %5, %6, %cst {dimension_numbers = #tpu.dot_dimension_numbers<[1], [0], [0], [1], [0, 0, 1, 1], [], []>} : vector<2048x128xf32>, vector<128x128xf32>, vector<2048x128xf32> -> vector<2048x128xf32>
    %8 = vector.shape_cast %7 : vector<2048x128xf32> to vector<8x256x128xf32>
    %cst_3 = arith.constant dense<0xFF800000> : vector<8x128xf32>
    %9 = vector.multi_reduction <maximumf>, %8, %cst_3 [1] : vector<8x256x128xf32> to vector<8x128xf32>
    %c0_4 = arith.constant 0 : index
    %c0_5 = arith.constant 0 : index
    %10 = vector.load %arg3[%c0_4, %c0_5] : memref<128x128xf32, #tpu.memory_space<vmem>>, vector<128x128xf32>
    %cst_6 = arith.constant dense<0.000000e+00> : vector<8x128xf32>
    %11 = tpu.matmul %9, %10, %cst_6 {dimension_numbers = #tpu.dot_dimension_numbers<[1], [0], [0], [1], [0, 0, 1, 1], [], []>} : vector<8x128xf32>, vector<128x128xf32>, vector<8x128xf32> -> vector<8x128xf32>
    %c0_7 = arith.constant 0 : index
    %c0_8 = arith.constant 0 : index
    %12 = vector.load %arg4[%c0_7, %c0_8] : memref<1x128xf32, #tpu.memory_space<vmem>>, vector<1x128xf32>
    %13 = vector.broadcast %12 : vector<1x128xf32> to vector<8x128xf32>
    %14 = arith.addf %11, %13 : vector<8x128xf32>
    %cst_9 = arith.constant 0.000000e+00 : f32
    %15 = vector.broadcast %cst_9 : f32 to vector<8x128xf32>
    %16 = arith.maximumf %14, %15 : vector<8x128xf32>
    %c0_10 = arith.constant 0 : index
    %c0_11 = arith.constant 0 : index
    %17 = vector.load %arg5[%c0_10, %c0_11] : memref<128x128xf32, #tpu.memory_space<vmem>>, vector<128x128xf32>
    %cst_12 = arith.constant dense<0.000000e+00> : vector<8x128xf32>
    %18 = tpu.matmul %16, %17, %cst_12 {dimension_numbers = #tpu.dot_dimension_numbers<[1], [0], [0], [1], [0, 0, 1, 1], [], []>} : vector<8x128xf32>, vector<128x128xf32>, vector<8x128xf32> -> vector<8x128xf32>
    %c0_13 = arith.constant 0 : index
    %c0_14 = arith.constant 0 : index
    %19 = vector.load %arg6[%c0_13, %c0_14] : memref<1x128xf32, #tpu.memory_space<vmem>>, vector<1x128xf32>
    %20 = vector.broadcast %19 : vector<1x128xf32> to vector<8x128xf32>
    %21 = arith.addf %18, %20 : vector<8x128xf32>
    %c0_15 = arith.constant 0 : index
    %c0_16 = arith.constant 0 : index
    %22 = vector.load %arg7[%c0_15, %c0_16] : memref<8x128xf32, #tpu.memory_space<vmem>>, vector<8x128xf32>
    tpu.vector_store %arg7[%c0_15, %c0_16], %21 {strides = array<i32>} : memref<8x128xf32, #tpu.memory_space<vmem>>, vector<8x128xf32>,
    return
  }
  func.func @transform_0(%arg0: i32) -> (i32, i32) {
    %c0_i32 = arith.constant 0 : i32
    %c0_i32_0 = arith.constant 0 : i32
    return %arg0, %c0_i32 : i32, i32
  }
  func.func @transform_1(%arg0: i32) -> (i32, i32) {
    %c0_i32 = arith.constant 0 : i32
    %c0_i32_0 = arith.constant 0 : i32
    %c0_i32_1 = arith.constant 0 : i32
    return %c0_i32, %c0_i32_0 : i32, i32
  }
  func.func @transform_2(%arg0: i32) -> (i32, i32) {
    %c0_i32 = arith.constant 0 : i32
    %c0_i32_0 = arith.constant 0 : i32
    %c0_i32_1 = arith.constant 0 : i32
    return %c0_i32, %c0_i32_0 : i32, i32
  }
  func.func @transform_3(%arg0: i32) -> (i32, i32) {
    %c0_i32 = arith.constant 0 : i32
    %c0_i32_0 = arith.constant 0 : i32
    %c0_i32_1 = arith.constant 0 : i32
    return %c0_i32, %c0_i32_0 : i32, i32
  }
  func.func @transform_4(%arg0: i32) -> (i32, i32) {
    %c0_i32 = arith.constant 0 : i32
    %c0_i32_0 = arith.constant 0 : i32
    %c0_i32_1 = arith.constant 0 : i32
    return %c0_i32, %c0_i32_0 : i32, i32
  }
  func.func @transform_5(%arg0: i32) -> (i32, i32) {
    %c0_i32 = arith.constant 0 : i32
    %c0_i32_0 = arith.constant 0 : i32
    %c0_i32_1 = arith.constant 0 : i32
    return %c0_i32, %c0_i32_0 : i32, i32
  }
  func.func @transform_6(%arg0: i32) -> (i32, i32) {
    %c0_i32 = arith.constant 0 : i32
    %c0_i32_0 = arith.constant 0 : i32
    return %arg0, %c0_i32 : i32, i32
  }
}

</mosaic_0001>

<llo_original>
// kernel: tpu_custom_call.1
$region0: #{tpu_custom_call.1}
  #allocation0 [shape = 'u32[]', space=smem, size = 0x4, offset = 0x4, fixed_abs, tag = 'smem constant byte address 0x4 - core index']
  #allocation1 [shape = 'u32[144,128]{1,0:T(1,128)}', space=vmem, size = 0x12000, scoped, tag = 'internal scratch']
  %s0 = inlined_call_operand.vmem [shape: s32[4096,1], index: 0, kind: input, shape index: {}]
  %s1 = inlined_call_operand.vmem [shape: f32[128,128], index: 1, kind: input, shape index: {}]
  %s2 = inlined_call_operand.vmem [shape: f32[128,128], index: 2, kind: input, shape index: {}]
  %s3 = inlined_call_operand.vmem [shape: f32[1,128], index: 3, kind: input, shape index: {}]
  %s4 = inlined_call_operand.vmem [shape: f32[128,128], index: 4, kind: input, shape index: {}]
  %s5 = inlined_call_operand.vmem [shape: f32[1,128], index: 5, kind: input, shape index: {}]
  %s6 = inlined_call_operand.hbm [shape: f32[16,128], index: 6, kind: output, shape index: {}]
  %s7 = sld [smem:[#allocation0]]
  $region57: #{tpu_custom_call.1} parent=0
    _
  %s9 = ssub.s32 1, %s7
  %s10 = scalar_select 0, %s9, %s7
  $region1: #{tpu_custom_call.1} parent=0
    #allocation2 [shape = 'u8[8192]{0}', space=vmem, size = 0x2000, scoped, tag = 'output window, operand 0']
    #allocation3 [shape = 's32[2]{0}', space=sflag, size = 0x8, scoped, tag = 'scoped memory for tpu_custom_call.1']
    %11 = vsyncpa [#allocation3], 0
    %s12 = scalar_lea.sflag [#allocation3], 1
    %13 = vsyncpa %s12, 0
    loop: start=0, step=1, limit=4
    $region2: #{tpu_custom_call.1} parent=1 // loop_pre_header
      _
    $region3: #{tpu_custom_call.1} parent=1 // loop_header
      %s15 = sphi 0, %s19
      %p16 = scmp.ge.s32.totalorder %s15, 4
      %s25 = sphi 0, %s27
      %s28 = sphi 0, %s25
      %s29 = sphi 0, %s28
      %s45 = sphi 0, %s29
      %s49 = sphi 0, %s49
      %s51 = sphi 0, %s49
      %s52 = sphi 0, %s51
      %s66 = sphi 0, %s52
      %s70 = sphi 0, %s70
      %s72 = sphi 0, %s70
      %s73 = sphi 0, %s72
      %s87 = sphi 0, %s73
      %s91 = sphi 0, %s91
      %s93 = sphi 0, %s91
      %s94 = sphi 0, %s93
      %s108 = sphi 0, %s94
      %s112 = sphi 0, %s112
      %s114 = sphi 0, %s112
      %s115 = sphi 0, %s114
      %s129 = sphi 0, %s115
      %s133 = sphi 0, %s133
      %s135 = sphi 0, %s133
      %s136 = sphi 0, %s135
      %s150 = sphi 0, %s136
      %s156 = sphi 0, %s158
      %s159 = sphi 0, %s156
      %s160 = sphi 0, %s159
      %s176 = sphi 0, %s160
    $region4: #{tpu_custom_call.1} parent=1 // loop_header_branch
      %18 = sbr.rel (%p16) target = $region8
    $region5: #{tpu_custom_call.1} parent=1 // loop_body
      %s20 = ssub.s32 %s15, 1
      %s21 = ssub.s32 %s15, 2
      %s22 = sadd.s32 %s15, 1
      %s23 = ssub.s32 %s15, %s22
      %p24 = scmp.eq.s32.totalorder %s23, 0
      %s26 = sadd.s32 %s25, 1
      %s27 = scalar_select %p24, %s25, %s26
      %p30 = pneg %p24
      %p31 = scmp.eq.s32.totalorder %s15, 1
      %p32 = por %p30, %p31
      %p33 = scmp.ne.s32.totalorder %s25, %s28
      %p34 = scmp.eq.s32.totalorder %s15, 0
      %p35 = por %p33, %p34
      %p36 = scmp.ne.s32.totalorder %s25, %s28
      %p37 = scmp.eq.s32.totalorder %s20, 1
      %p38 = por %p36, %p37
      %p39 = scmp.ne.s32.totalorder %s28, %s29
      %p40 = scmp.eq.s32.totalorder %s20, 0
      %p41 = por %p39, %p40
      %p42 = scmp.ne.s32.totalorder %s28, %s29
      %p43 = scmp.eq.s32.totalorder %s21, 1
      %p44 = por %p42, %p43
      %p46 = scmp.ne.s32.totalorder %s29, %s45
      %p47 = scmp.eq.s32.totalorder %s21, 0
      %p48 = por %p46, %p47
      %s50 = sadd.s32 %s49, 1
      %p53 = scmp.eq.s32.totalorder %s15, 1
      %p54 = scmp.ne.s32.totalorder %s49, %s51
      %p55 = scmp.eq.s32.totalorder %s15, 0
      %p56 = por %p54, %p55
      %p57 = scmp.ne.s32.totalorder %s49, %s51
      %p58 = scmp.eq.s32.totalorder %s20, 1
      %p59 = por %p57, %p58
      %p60 = scmp.ne.s32.totalorder %s51, %s52
      %p61 = scmp.eq.s32.totalorder %s20, 0
      %p62 = por %p60, %p61
      %p63 = scmp.ne.s32.totalorder %s51, %s52
      %p64 = scmp.eq.s32.totalorder %s21, 1
      %p65 = por %p63, %p64
      %p67 = scmp.ne.s32.totalorder %s52, %s66
      %p68 = scmp.eq.s32.totalorder %s21, 0
      %p69 = por %p67, %p68
      %s71 = sadd.s32 %s70, 1
      %p74 = scmp.eq.s32.totalorder %s15, 1
      %p75 = scmp.ne.s32.totalorder %s70, %s72
      %p76 = scmp.eq.s32.totalorder %s15, 0
      %p77 = por %p75, %p76
      %p78 = scmp.ne.s32.totalorder %s70, %s72
      %p79 = scmp.eq.s32.totalorder %s20, 1
      %p80 = por %p78, %p79
      %p81 = scmp.ne.s32.totalorder %s72, %s73
      %p82 = scmp.eq.s32.totalorder %s20, 0
      %p83 = por %p81, %p82
      %p84 = scmp.ne.s32.totalorder %s72, %s73
      %p85 = scmp.eq.s32.totalorder %s21, 1
      %p86 = por %p84, %p85
      %p88 = scmp.ne.s32.totalorder %s73, %s87
      %p89 = scmp.eq.s32.totalorder %s21, 0
      %p90 = por %p88, %p89
      %s92 = sadd.s32 %s91, 1
      %p95 = scmp.eq.s32.totalorder %s15, 1
      %p96 = scmp.ne.s32.totalorder %s91, %s93
      %p97 = scmp.eq.s32.totalorder %s15, 0
      %p98 = por %p96, %p97
      %p99 = scmp.ne.s32.totalorder %s91, %s93
      %p100 = scmp.eq.s32.totalorder %s20, 1
      %p101 = por %p99, %p100
      %p102 = scmp.ne.s32.totalorder %s93, %s94
      %p103 = scmp.eq.s32.totalorder %s20, 0
      %p104 = por %p102, %p103
      %p105 = scmp.ne.s32.totalorder %s93, %s94
      %p106 = scmp.eq.s32.totalorder %s21, 1
      %p107 = por %p105, %p106
      %p109 = scmp.ne.s32.totalorder %s94, %s108
      %p110 = scmp.eq.s32.totalorder %s21, 0
      %p111 = por %p109, %p110
      %s113 = sadd.s32 %s112, 1
      %p116 = scmp.eq.s32.totalorder %s15, 1
      %p117 = scmp.ne.s32.totalorder %s112, %s114
      %p118 = scmp.eq.s32.totalorder %s15, 0
      %p119 = por %p117, %p118
      %p120 = scmp.ne.s32.totalorder %s112, %s114
      %p121 = scmp.eq.s32.totalorder %s20, 1
      %p122 = por %p120, %p121
      %p123 = scmp.ne.s32.totalorder %s114, %s115
      %p124 = scmp.eq.s32.totalorder %s20, 0
      %p125 = por %p123, %p124
      %p126 = scmp.ne.s32.totalorder %s114, %s115
      %p127 = scmp.eq.s32.totalorder %s21, 1
      %p128 = por %p126, %p127
      %p130 = scmp.ne.s32.totalorder %s115, %s129
      %p131 = scmp.eq.s32.totalorder %s21, 0
      %p132 = por %p130, %p131
      %s134 = sadd.s32 %s133, 1
      %p137 = scmp.eq.s32.totalorder %s15, 1
      %p138 = scmp.ne.s32.totalorder %s133, %s135
      %p139 = scmp.eq.s32.totalorder %s15, 0
      %p140 = por %p138, %p139
      %p141 = scmp.ne.s32.totalorder %s133, %s135
      %p142 = scmp.eq.s32.totalorder %s20, 1
      %p143 = por %p141, %p142
      %p144 = scmp.ne.s32.totalorder %s135, %s136
      %p145 = scmp.eq.s32.totalorder %s20, 0
      %p146 = por %p144, %p145
      %p147 = scmp.ne.s32.totalorder %s135, %s136
      %p148 = scmp.eq.s32.totalorder %s21, 1
      %p149 = por %p147, %p148
      %p151 = scmp.ne.s32.totalorder %s136, %s150
      %p152 = scmp.eq.s32.totalorder %s21, 0
      %p153 = por %p151, %p152
      %s154 = ssub.s32 %s15, %s22
      %p155 = scmp.eq.s32.totalorder %s154, 0
      %s157 = sadd.s32 %s156, 1
      %s158 = scalar_select %p155, %s156, %s157
      %p161 = pneg %p155
      %p162 = scmp.eq.s32.totalorder %s15, 1
      %p163 = por %p161, %p162
      %p164 = scmp.ne.s32.totalorder %s156, %s159
      %p165 = scmp.eq.s32.totalorder %s15, 0
      %p166 = por %p164, %p165
      %p167 = scmp.ne.s32.totalorder %s156, %s159
      %p168 = scmp.eq.s32.totalorder %s20, 1
      %p169 = por %p167, %p168
      %p170 = scmp.ne.s32.totalorder %s159, %s160
      %p171 = scmp.eq.s32.totalorder %s20, 0
      %p172 = por %p170, %p171
      %p173 = scmp.ne.s32.totalorder %s159, %s160
      %p174 = scmp.eq.s32.totalorder %s21, 1
      %p175 = por %p173, %p174
      %p177 = scmp.ne.s32.totalorder %s160, %s176
      %p178 = scmp.eq.s32.totalorder %s21, 0
      %p179 = por %p177, %p178
      %p180 = scmp.le.s32.totalorder 1, %s15
      %p181 = scmp.lt.s32.totalorder %s15, 3
      %p182 = pnand %p180, %p181
      %p183 = pneg %p182
      // Predicated region
      $region9: #{tpu_custom_call.1} parent=5 // pred_check
        _
      $region10: #{tpu_custom_call.1} parent=5 // pred_check_branch
        %185 = sbr.rel (%p182) target = $region12
      $region11: #{tpu_custom_call.1} parent=5 // pred_region
        %s186 = ssub.s32 %s15, 1
        // Predicated region
        $region13: #{tpu_custom_call.1} parent=11 // pred_check
          %p187 = pneg %p62
        $region14: #{tpu_custom_call.1} parent=11 // pred_check_branch
          %189 = sbr.rel (%p187) target = $region16
        $region15: #{tpu_custom_call.1} parent=11 // pred_region
          _
        $region16: #{tpu_custom_call.1} parent=11 // pred_fallthru
          _
        // Predicated region
        $region17: #{tpu_custom_call.1} parent=11 // pred_check
          %p190 = pneg %p83
        $region18: #{tpu_custom_call.1} parent=11 // pred_check_branch
          %192 = sbr.rel (%p190) target = $region20
        $region19: #{tpu_custom_call.1} parent=11 // pred_region
          _
        $region20: #{tpu_custom_call.1} parent=11 // pred_fallthru
          _
        // Predicated region
        $region21: #{tpu_custom_call.1} parent=11 // pred_check
          %p193 = pneg %p104
        $region22: #{tpu_custom_call.1} parent=11 // pred_check_branch
          %195 = sbr.rel (%p193) target = $region24
        $region23: #{tpu_custom_call.1} parent=11 // pred_region
          _
        $region24: #{tpu_custom_call.1} parent=11 // pred_fallthru
          _
        // Predicated region
        $region25: #{tpu_custom_call.1} parent=11 // pred_check
          %p196 = pneg %p125
        $region26: #{tpu_custom_call.1} parent=11 // pred_check_branch
          %198 = sbr.rel (%p196) target = $region28
        $region27: #{tpu_custom_call.1} parent=11 // pred_region
          _
        $region28: #{tpu_custom_call.1} parent=11 // pred_fallthru
          _
        // Predicated region
        $region29: #{tpu_custom_call.1} parent=11 // pred_check
          %p199 = pneg %p146
        $region30: #{tpu_custom_call.1} parent=11 // pred_check_branch
          %201 = sbr.rel (%p199) target = $region32
        $region31: #{tpu_custom_call.1} parent=11 // pred_region
          _
        $region32: #{tpu_custom_call.1} parent=11 // pred_fallthru
          _
      $region12: #{tpu_custom_call.1} parent=5 // pred_fallthru
        _
      %p202 = scmp.lt.s32.totalorder %s15, 2
      // Predicated region
      $region33: #{tpu_custom_call.1} parent=5 // pred_check
        %p203 = pneg %p202
      $region34: #{tpu_custom_call.1} parent=5 // pred_check_branch
        %205 = sbr.rel (%p203) target = $region36
      $region35: #{tpu_custom_call.1} parent=5 // pred_region
        // Predicated region
        $region37: #{tpu_custom_call.1} parent=35 // pred_check
          %p206 = pneg %p35
        $region38: #{tpu_custom_call.1} parent=35 // pred_check_branch
          %208 = sbr.rel (%p206) target = $region40
        $region39: #{tpu_custom_call.1} parent=35 // pred_region
          %s209 = smul.u32 256, %s15
          %p210 = scmp.lt.s32.totalorder %s209, 511
          %s211 = scalar_select %p210, %s209, 511
          %s212 = smul.addr %s211, 8
          %s213 = scalar_lea.vmem %s0, %s212
          %s214 = smul.u32 256, %s15
        $region40: #{tpu_custom_call.1} parent=35 // pred_fallthru
          _
      $region36: #{tpu_custom_call.1} parent=5 // pred_fallthru
        _
      %p215 = scmp.le.s32.totalorder 1, %s15
      %p216 = scmp.lt.s32.totalorder %s15, 3
      %p217 = pnand %p215, %p216
      %p218 = pneg %p217
      // Predicated region
      $region41: #{tpu_custom_call.1} parent=5 // pred_check
        _
      $region42: #{tpu_custom_call.1} parent=5 // pred_check_branch
        %220 = sbr.rel (%p217) target = $region44
      $region43: #{tpu_custom_call.1} parent=5 // pred_region
        %s221 = ssub.s32 %s15, 1
        %s222 = smul.u32 256, %s20
        %p223 = scmp.lt.s32.totalorder %s222, 511
        %s224 = scalar_select %p223, %s222, 511
        %s225 = smul.addr %s224, 8
        %s226 = scalar_lea.vmem %s0, %s225
        %p227 = pneg %p41
        %p228 = pneg %p38
        %p229 = pneg %p62
        %p230 = pneg %p59
        %p231 = pneg %p83
        %p232 = pneg %p80
        %p233 = pneg %p104
        %p234 = pneg %p101
        %p235 = pneg %p125
        %p236 = pneg %p122
        %p237 = pneg %p146
        %p238 = pneg %p143
        %p239 = pneg %p172
        %p240 = pneg %p169
        %s241 = sand.u32 %s159, 1
        %s242 = scalar_lea.sflag [#allocation3], %s241
        %s243 = sand.u32 %s159, 1
        %s244 = smul.addr %s243, 8
        %s245 = scalar_lea.vmem [#allocation2], %s244
        %s246 = smul.u32 256, %s20
        %p247 = scmp.lt.s32.totalorder %s246, 511
        %s248 = scalar_select %p247, %s246, 511
        %s249 = smul.addr %s248, 8
        %s250 = scalar_lea.vmem %s0, %s249
        %s251 = smul.u32 256, %s20
        %v252 = vld [vmem:[%s250] sm:$0xff]
        %v253 = vld [vmem:[%s250 + $0x8] sm:$0xff]
        %v254 = vld [vmem:[%s250 + $0x10] sm:$0xff]
        %v255 = vld [vmem:[%s250 + $0x18] sm:$0xff]
        %v256 = vld [vmem:[%s250 + $0x20] sm:$0xff]
        %v257 = vld [vmem:[%s250 + $0x28] sm:$0xff]
        %v258 = vld [vmem:[%s250 + $0x30] sm:$0xff]
        %v259 = vld [vmem:[%s250 + $0x38] sm:$0xff]
        %v260 = vld [vmem:[%s250 + $0x40] sm:$0xff]
        %v261 = vld [vmem:[%s250 + $0x48] sm:$0xff]
        %v262 = vld [vmem:[%s250 + $0x50] sm:$0xff]
        %v263 = vld [vmem:[%s250 + $0x58] sm:$0xff]
        %v264 = vld [vmem:[%s250 + $0x60] sm:$0xff]
        %v265 = vld [vmem:[%s250 + $0x68] sm:$0xff]
        %v266 = vld [vmem:[%s250 + $0x70] sm:$0xff]
        %v267 = vld [vmem:[%s250 + $0x78] sm:$0xff]
        %v268 = vld [vmem:[%s250 + $0x80] sm:$0xff]
        %v269 = vld [vmem:[%s250 + $0x88] sm:$0xff]
        %v270 = vld [vmem:[%s250 + $0x90] sm:$0xff]
        %v271 = vld [vmem:[%s250 + $0x98] sm:$0xff]
        %v272 = vld [vmem:[%s250 + $0xa0] sm:$0xff]
        %v273 = vld [vmem:[%s250 + $0xa8] sm:$0xff]
        %v274 = vld [vmem:[%s250 + $0xb0] sm:$0xff]
        %v275 = vld [vmem:[%s250 + $0xb8] sm:$0xff]
        %v276 = vld [vmem:[%s250 + $0xc0] sm:$0xff]
        %v277 = vld [vmem:[%s250 + $0xc8] sm:$0xff]
        %v278 = vld [vmem:[%s250 + $0xd0] sm:$0xff]
        %v279 = vld [vmem:[%s250 + $0xd8] sm:$0xff]
        %v280 = vld [vmem:[%s250 + $0xe0] sm:$0xff]
        %v281 = vld [vmem:[%s250 + $0xe8] sm:$0xff]
        %v282 = vld [vmem:[%s250 + $0xf0] sm:$0xff]
        %v283 = vld [vmem:[%s250 + $0xf8] sm:$0xff]
        %v284 = vld [vmem:[%s250 + $0x100] sm:$0xff]
        %v285 = vld [vmem:[%s250 + $0x108] sm:$0xff]
        %v286 = vld [vmem:[%s250 + $0x110] sm:$0xff]
        %v287 = vld [vmem:[%s250 + $0x118] sm:$0xff]
        %v288 = vld [vmem:[%s250 + $0x120] sm:$0xff]
        %v289 = vld [vmem:[%s250 + $0x128] sm:$0xff]
        %v290 = vld [vmem:[%s250 + $0x130] sm:$0xff]
        %v291 = vld [vmem:[%s250 + $0x138] sm:$0xff]
        %v292 = vld [vmem:[%s250 + $0x140] sm:$0xff]
        %v293 = vld [vmem:[%s250 + $0x148] sm:$0xff]
        %v294 = vld [vmem:[%s250 + $0x150] sm:$0xff]
        %v295 = vld [vmem:[%s250 + $0x158] sm:$0xff]
        %v296 = vld [vmem:[%s250 + $0x160] sm:$0xff]
        %v297 = vld [vmem:[%s250 + $0x168] sm:$0xff]
        %v298 = vld [vmem:[%s250 + $0x170] sm:$0xff]
        %v299 = vld [vmem:[%s250 + $0x178] sm:$0xff]
        %v300 = vld [vmem:[%s250 + $0x180] sm:$0xff]
        %v301 = vld [vmem:[%s250 + $0x188] sm:$0xff]
        %v302 = vld [vmem:[%s250 + $0x190] sm:$0xff]
        %v303 = vld [vmem:[%s250 + $0x198] sm:$0xff]
        %v304 = vld [vmem:[%s250 + $0x1a0] sm:$0xff]
        %v305 = vld [vmem:[%s250 + $0x1a8] sm:$0xff]
        %v306 = vld [vmem:[%s250 + $0x1b0] sm:$0xff]
        %v307 = vld [vmem:[%s250 + $0x1b8] sm:$0xff]
        %v308 = vld [vmem:[%s250 + $0x1c0] sm:$0xff]
        %v309 = vld [vmem:[%s250 + $0x1c8] sm:$0xff]
        %v310 = vld [vmem:[%s250 + $0x1d0] sm:$0xff]
        %v311 = vld [vmem:[%s250 + $0x1d8] sm:$0xff]
        %v312 = vld [vmem:[%s250 + $0x1e0] sm:$0xff]
        %v313 = vld [vmem:[%s250 + $0x1e8] sm:$0xff]
        %v314 = vld [vmem:[%s250 + $0x1f0] sm:$0xff]
        %v315 = vld [vmem:[%s250 + $0x1f8] sm:$0xff]
        %v316 = vld [vmem:[%s250 + $0x200] sm:$0xff]
        %v317 = vld [vmem:[%s250 + $0x208] sm:$0xff]
        %v318 = vld [vmem:[%s250 + $0x210] sm:$0xff]
        %v319 = vld [vmem:[%s250 + $0x218] sm:$0xff]
        %v320 = vld [vmem:[%s250 + $0x220] sm:$0xff]
        %v321 = vld [vmem:[%s250 + $0x228] sm:$0xff]
        %v322 = vld [vmem:[%s250 + $0x230] sm:$0xff]
        %v323 = vld [vmem:[%s250 + $0x238] sm:$0xff]
        %v324 = vld [vmem:[%s250 + $0x240] sm:$0xff]
        %v325 = vld [vmem:[%s250 + $0x248] sm:$0xff]
        %v326 = vld [vmem:[%s250 + $0x250] sm:$0xff]
        %v327 = vld [vmem:[%s250 + $0x258] sm:$0xff]
        %v328 = vld [vmem:[%s250 + $0x260] sm:$0xff]
        %v329 = vld [vmem:[%s250 + $0x268] sm:$0xff]
        %v330 = vld [vmem:[%s250 + $0x270] sm:$0xff]
        %v331 = vld [vmem:[%s250 + $0x278] sm:$0xff]
        %v332 = vld [vmem:[%s250 + $0x280] sm:$0xff]
        %v333 = vld [vmem:[%s250 + $0x288] sm:$0xff]
        %v334 = vld [vmem:[%s250 + $0x290] sm:$0xff]
        %v335 = vld [vmem:[%s250 + $0x298] sm:$0xff]
        %v336 = vld [vmem:[%s250 + $0x2a0] sm:$0xff]
        %v337 = vld [vmem:[%s250 + $0x2a8] sm:$0xff]
        %v338 = vld [vmem:[%s250 + $0x2b0] sm:$0xff]
        %v339 = vld [vmem:[%s250 + $0x2b8] sm:$0xff]
        %v340 = vld [vmem:[%s250 + $0x2c0] sm:$0xff]
        %v341 = vld [vmem:[%s250 + $0x2c8] sm:$0xff]
        %v342 = vld [vmem:[%s250 + $0x2d0] sm:$0xff]
        %v343 = vld [vmem:[%s250 + $0x2d8] sm:$0xff]
        %v344 = vld [vmem:[%s250 + $0x2e0] sm:$0xff]
        %v345 = vld [vmem:[%s250 + $0x2e8] sm:$0xff]
        %v346 = vld [vmem:[%s250 + $0x2f0] sm:$0xff]
        %v347 = vld [vmem:[%s250 + $0x2f8] sm:$0xff]
        %v348 = vld [vmem:[%s250 + $0x300] sm:$0xff]
        %v349 = vld [vmem:[%s250 + $0x308] sm:$0xff]
        %v350 = vld [vmem:[%s250 + $0x310] sm:$0xff]
        %v351 = vld [vmem:[%s250 + $0x318] sm:$0xff]
        %v352 = vld [vmem:[%s250 + $0x320] sm:$0xff]
        %v353 = vld [vmem:[%s250 + $0x328] sm:$0xff]
        %v354 = vld [vmem:[%s250 + $0x330] sm:$0xff]
        %v355 = vld [vmem:[%s250 + $0x338] sm:$0xff]
        %v356 = vld [vmem:[%s250 + $0x340] sm:$0xff]
        %v357 = vld [vmem:[%s250 + $0x348] sm:$0xff]
        %v358 = vld [vmem:[%s250 + $0x350] sm:$0xff]
        %v359 = vld [vmem:[%s250 + $0x358] sm:$0xff]
        %v360 = vld [vmem:[%s250 + $0x360] sm:$0xff]
        %v361 = vld [vmem:[%s250 + $0x368] sm:$0xff]
        %v362 = vld [vmem:[%s250 + $0x370] sm:$0xff]
        %v363 = vld [vmem:[%s250 + $0x378] sm:$0xff]
        %v364 = vld [vmem:[%s250 + $0x380] sm:$0xff]
        %v365 = vld [vmem:[%s250 + $0x388] sm:$0xff]
        %v366 = vld [vmem:[%s250 + $0x390] sm:$0xff]
        %v367 = vld [vmem:[%s250 + $0x398] sm:$0xff]
        %v368 = vld [vmem:[%s250 + $0x3a0] sm:$0xff]
        %v369 = vld [vmem:[%s250 + $0x3a8] sm:$0xff]
        %v370 = vld [vmem:[%s250 + $0x3b0] sm:$0xff]
        %v371 = vld [vmem:[%s250 + $0x3b8] sm:$0xff]
        %v372 = vld [vmem:[%s250 + $0x3c0] sm:$0xff]
        %v373 = vld [vmem:[%s250 + $0x3c8] sm:$0xff]
        %v374 = vld [vmem:[%s250 + $0x3d0] sm:$0xff]
        %v375 = vld [vmem:[%s250 + $0x3d8] sm:$0xff]
        %v376 = vld [vmem:[%s250 + $0x3e0] sm:$0xff]
        %v377 = vld [vmem:[%s250 + $0x3e8] sm:$0xff]
        %v378 = vld [vmem:[%s250 + $0x3f0] sm:$0xff]
        %v379 = vld [vmem:[%s250 + $0x3f8] sm:$0xff]
        %v380 = vld [vmem:[%s250 + $0x400] sm:$0xff]
        %v381 = vld [vmem:[%s250 + $0x408] sm:$0xff]
        %v382 = vld [vmem:[%s250 + $0x410] sm:$0xff]
        %v383 = vld [vmem:[%s250 + $0x418] sm:$0xff]
        %v384 = vld [vmem:[%s250 + $0x420] sm:$0xff]
        %v385 = vld [vmem:[%s250 + $0x428] sm:$0xff]
        %v386 = vld [vmem:[%s250 + $0x430] sm:$0xff]
        %v387 = vld [vmem:[%s250 + $0x438] sm:$0xff]
        %v388 = vld [vmem:[%s250 + $0x440] sm:$0xff]
        %v389 = vld [vmem:[%s250 + $0x448] sm:$0xff]
        %v390 = vld [vmem:[%s250 + $0x450] sm:$0xff]
        %v391 = vld [vmem:[%s250 + $0x458] sm:$0xff]
        %v392 = vld [vmem:[%s250 + $0x460] sm:$0xff]
        %v393 = vld [vmem:[%s250 + $0x468] sm:$0xff]
        %v394 = vld [vmem:[%s250 + $0x470] sm:$0xff]
        %v395 = vld [vmem:[%s250 + $0x478] sm:$0xff]
        %v396 = vld [vmem:[%s250 + $0x480] sm:$0xff]
        %v397 = vld [vmem:[%s250 + $0x488] sm:$0xff]
        %v398 = vld [vmem:[%s250 + $0x490] sm:$0xff]
        %v399 = vld [vmem:[%s250 + $0x498] sm:$0xff]
        %v400 = vld [vmem:[%s250 + $0x4a0] sm:$0xff]
        %v401 = vld [vmem:[%s250 + $0x4a8] sm:$0xff]
        %v402 = vld [vmem:[%s250 + $0x4b0] sm:$0xff]
        %v403 = vld [vmem:[%s250 + $0x4b8] sm:$0xff]
        %v404 = vld [vmem:[%s250 + $0x4c0] sm:$0xff]
        %v405 = vld [vmem:[%s250 + $0x4c8] sm:$0xff]
        %v406 = vld [vmem:[%s250 + $0x4d0] sm:$0xff]
        %v407 = vld [vmem:[%s250 + $0x4d8] sm:$0xff]
        %v408 = vld [vmem:[%s250 + $0x4e0] sm:$0xff]
        %v409 = vld [vmem:[%s250 + $0x4e8] sm:$0xff]
        %v410 = vld [vmem:[%s250 + $0x4f0] sm:$0xff]
        %v411 = vld [vmem:[%s250 + $0x4f8] sm:$0xff]
        %v412 = vld [vmem:[%s250 + $0x500] sm:$0xff]
        %v413 = vld [vmem:[%s250 + $0x508] sm:$0xff]
        %v414 = vld [vmem:[%s250 + $0x510] sm:$0xff]
        %v415 = vld [vmem:[%s250 + $0x518] sm:$0xff]
        %v416 = vld [vmem:[%s250 + $0x520] sm:$0xff]
        %v417 = vld [vmem:[%s250 + $0x528] sm:$0xff]
        %v418 = vld [vmem:[%s250 + $0x530] sm:$0xff]
        %v419 = vld [vmem:[%s250 + $0x538] sm:$0xff]
        %v420 = vld [vmem:[%s250 + $0x540] sm:$0xff]
        %v421 = vld [vmem:[%s250 + $0x548] sm:$0xff]
        %v422 = vld [vmem:[%s250 + $0x550] sm:$0xff]
        %v423 = vld [vmem:[%s250 + $0x558] sm:$0xff]
        %v424 = vld [vmem:[%s250 + $0x560] sm:$0xff]
        %v425 = vld [vmem:[%s250 + $0x568] sm:$0xff]
        %v426 = vld [vmem:[%s250 + $0x570] sm:$0xff]
        %v427 = vld [vmem:[%s250 + $0x578] sm:$0xff]
        %v428 = vld [vmem:[%s250 + $0x580] sm:$0xff]
        %v429 = vld [vmem:[%s250 + $0x588] sm:$0xff]
        %v430 = vld [vmem:[%s250 + $0x590] sm:$0xff]
        %v431 = vld [vmem:[%s250 + $0x598] sm:$0xff]
        %v432 = vld [vmem:[%s250 + $0x5a0] sm:$0xff]
        %v433 = vld [vmem:[%s250 + $0x5a8] sm:$0xff]
        %v434 = vld [vmem:[%s250 + $0x5b0] sm:$0xff]
        %v435 = vld [vmem:[%s250 + $0x5b8] sm:$0xff]
        %v436 = vld [vmem:[%s250 + $0x5c0] sm:$0xff]
        %v437 = vld [vmem:[%s250 + $0x5c8] sm:$0xff]
        %v438 = vld [vmem:[%s250 + $0x5d0] sm:$0xff]
        %v439 = vld [vmem:[%s250 + $0x5d8] sm:$0xff]
        %v440 = vld [vmem:[%s250 + $0x5e0] sm:$0xff]
        %v441 = vld [vmem:[%s250 + $0x5e8] sm:$0xff]
        %v442 = vld [vmem:[%s250 + $0x5f0] sm:$0xff]
        %v443 = vld [vmem:[%s250 + $0x5f8] sm:$0xff]
        %v444 = vld [vmem:[%s250 + $0x600] sm:$0xff]
        %v445 = vld [vmem:[%s250 + $0x608] sm:$0xff]
        %v446 = vld [vmem:[%s250 + $0x610] sm:$0xff]
        %v447 = vld [vmem:[%s250 + $0x618] sm:$0xff]
        %v448 = vld [vmem:[%s250 + $0x620] sm:$0xff]
        %v449 = vld [vmem:[%s250 + $0x628] sm:$0xff]
        %v450 = vld [vmem:[%s250 + $0x630] sm:$0xff]
        %v451 = vld [vmem:[%s250 + $0x638] sm:$0xff]
        %v452 = vld [vmem:[%s250 + $0x640] sm:$0xff]
        %v453 = vld [vmem:[%s250 + $0x648] sm:$0xff]
        %v454 = vld [vmem:[%s250 + $0x650] sm:$0xff]
        %v455 = vld [vmem:[%s250 + $0x658] sm:$0xff]
        %v456 = vld [vmem:[%s250 + $0x660] sm:$0xff]
        %v457 = vld [vmem:[%s250 + $0x668] sm:$0xff]
        %v458 = vld [vmem:[%s250 + $0x670] sm:$0xff]
        %v459 = vld [vmem:[%s250 + $0x678] sm:$0xff]
        %v460 = vld [vmem:[%s250 + $0x680] sm:$0xff]
        %v461 = vld [vmem:[%s250 + $0x688] sm:$0xff]
        %v462 = vld [vmem:[%s250 + $0x690] sm:$0xff]
        %v463 = vld [vmem:[%s250 + $0x698] sm:$0xff]
        %v464 = vld [vmem:[%s250 + $0x6a0] sm:$0xff]
        %v465 = vld [vmem:[%s250 + $0x6a8] sm:$0xff]
        %v466 = vld [vmem:[%s250 + $0x6b0] sm:$0xff]
        %v467 = vld [vmem:[%s250 + $0x6b8] sm:$0xff]
        %v468 = vld [vmem:[%s250 + $0x6c0] sm:$0xff]
        %v469 = vld [vmem:[%s250 + $0x6c8] sm:$0xff]
        %v470 = vld [vmem:[%s250 + $0x6d0] sm:$0xff]
        %v471 = vld [vmem:[%s250 + $0x6d8] sm:$0xff]
        %v472 = vld [vmem:[%s250 + $0x6e0] sm:$0xff]
        %v473 = vld [vmem:[%s250 + $0x6e8] sm:$0xff]
        %v474 = vld [vmem:[%s250 + $0x6f0] sm:$0xff]
        %v475 = vld [vmem:[%s250 + $0x6f8] sm:$0xff]
        %v476 = vld [vmem:[%s250 + $0x700] sm:$0xff]
        %v477 = vld [vmem:[%s250 + $0x708] sm:$0xff]
        %v478 = vld [vmem:[%s250 + $0x710] sm:$0xff]
        %v479 = vld [vmem:[%s250 + $0x718] sm:$0xff]
        %v480 = vld [vmem:[%s250 + $0x720] sm:$0xff]
        %v481 = vld [vmem:[%s250 + $0x728] sm:$0xff]
        %v482 = vld [vmem:[%s250 + $0x730] sm:$0xff]
        %v483 = vld [vmem:[%s250 + $0x738] sm:$0xff]
        %v484 = vld [vmem:[%s250 + $0x740] sm:$0xff]
        %v485 = vld [vmem:[%s250 + $0x748] sm:$0xff]
        %v486 = vld [vmem:[%s250 + $0x750] sm:$0xff]
        %v487 = vld [vmem:[%s250 + $0x758] sm:$0xff]
        %v488 = vld [vmem:[%s250 + $0x760] sm:$0xff]
        %v489 = vld [vmem:[%s250 + $0x768] sm:$0xff]
        %v490 = vld [vmem:[%s250 + $0x770] sm:$0xff]
        %v491 = vld [vmem:[%s250 + $0x778] sm:$0xff]
        %v492 = vld [vmem:[%s250 + $0x780] sm:$0xff]
        %v493 = vld [vmem:[%s250 + $0x788] sm:$0xff]
        %v494 = vld [vmem:[%s250 + $0x790] sm:$0xff]
        %v495 = vld [vmem:[%s250 + $0x798] sm:$0xff]
        %v496 = vld [vmem:[%s250 + $0x7a0] sm:$0xff]
        %v497 = vld [vmem:[%s250 + $0x7a8] sm:$0xff]
        %v498 = vld [vmem:[%s250 + $0x7b0] sm:$0xff]
        %v499 = vld [vmem:[%s250 + $0x7b8] sm:$0xff]
        %v500 = vld [vmem:[%s250 + $0x7c0] sm:$0xff]
        %v501 = vld [vmem:[%s250 + $0x7c8] sm:$0xff]
        %v502 = vld [vmem:[%s250 + $0x7d0] sm:$0xff]
        %v503 = vld [vmem:[%s250 + $0x7d8] sm:$0xff]
        %v504 = vld [vmem:[%s250 + $0x7e0] sm:$0xff]
        %v505 = vld [vmem:[%s250 + $0x7e8] sm:$0xff]
        %v506 = vld [vmem:[%s250 + $0x7f0] sm:$0xff]
        %v507 = vld [vmem:[%s250 + $0x7f8] sm:$0xff]
        %v508 = vlaneseq
        %v509 = vand.u32 %v508, 127
        %510 = vset.pattern.permute.xlu0 0
        %511 = vperm.xlu0 %510, %v252
        %v512 = vpop.permute.xlu0 %511
        %513 = vset.pattern.permute.xlu0 0
        %514 = vperm.xlu0 %513, %v253
        %v515 = vpop.permute.xlu0 %514
        %516 = vset.pattern.permute.xlu0 0
        %517 = vperm.xlu0 %516, %v254
        %v518 = vpop.permute.xlu0 %517
        %519 = vset.pattern.permute.xlu0 0
        %520 = vperm.xlu0 %519, %v255
        %v521 = vpop.permute.xlu0 %520
        %522 = vset.pattern.permute.xlu0 0
        %523 = vperm.xlu0 %522, %v256
        %v524 = vpop.permute.xlu0 %523
        %525 = vset.pattern.permute.xlu0 0
        %526 = vperm.xlu0 %525, %v257
        %v527 = vpop.permute.xlu0 %526
        %528 = vset.pattern.permute.xlu0 0
        %529 = vperm.xlu0 %528, %v258
        %v530 = vpop.permute.xlu0 %529
        %531 = vset.pattern.permute.xlu0 0
        %532 = vperm.xlu0 %531, %v259
        %v533 = vpop.permute.xlu0 %532
        %534 = vset.pattern.permute.xlu0 0
        %535 = vperm.xlu0 %534, %v260
        %v536 = vpop.permute.xlu0 %535
        %537 = vset.pattern.permute.xlu0 0
        %538 = vperm.xlu0 %537, %v261
        %v539 = vpop.permute.xlu0 %538
        %540 = vset.pattern.permute.xlu0 0
        %541 = vperm.xlu0 %540, %v262
        %v542 = vpop.permute.xlu0 %541
        %543 = vset.pattern.permute.xlu0 0
        %544 = vperm.xlu0 %543, %v263
        %v545 = vpop.permute.xlu0 %544
        %546 = vset.pattern.permute.xlu0 0
        %547 = vperm.xlu0 %546, %v264
        %v548 = vpop.permute.xlu0 %547
        %549 = vset.pattern.permute.xlu0 0
        %550 = vperm.xlu0 %549, %v265
        %v551 = vpop.permute.xlu0 %550
        %552 = vset.pattern.permute.xlu0 0
        %553 = vperm.xlu0 %552, %v266
        %v554 = vpop.permute.xlu0 %553
        %555 = vset.pattern.permute.xlu0 0
        %556 = vperm.xlu0 %555, %v267
        %v557 = vpop.permute.xlu0 %556
        %558 = vset.pattern.permute.xlu0 0
        %559 = vperm.xlu0 %558, %v268
        %v560 = vpop.permute.xlu0 %559
        %561 = vset.pattern.permute.xlu0 0
        %562 = vperm.xlu0 %561, %v269
        %v563 = vpop.permute.xlu0 %562
        %564 = vset.pattern.permute.xlu0 0
        %565 = vperm.xlu0 %564, %v270
        %v566 = vpop.permute.xlu0 %565
        %567 = vset.pattern.permute.xlu0 0
        %568 = vperm.xlu0 %567, %v271
        %v569 = vpop.permute.xlu0 %568
        %570 = vset.pattern.permute.xlu0 0
        %571 = vperm.xlu0 %570, %v272
        %v572 = vpop.permute.xlu0 %571
        %573 = vset.pattern.permute.xlu0 0
        %574 = vperm.xlu0 %573, %v273
        %v575 = vpop.permute.xlu0 %574
        %576 = vset.pattern.permute.xlu0 0
        %577 = vperm.xlu0 %576, %v274
        %v578 = vpop.permute.xlu0 %577
        %579 = vset.pattern.permute.xlu0 0
        %580 = vperm.xlu0 %579, %v275
        %v581 = vpop.permute.xlu0 %580
        %582 = vset.pattern.permute.xlu0 0
        %583 = vperm.xlu0 %582, %v276
        %v584 = vpop.permute.xlu0 %583
        %585 = vset.pattern.permute.xlu0 0
        %586 = vperm.xlu0 %585, %v277
        %v587 = vpop.permute.xlu0 %586
        %588 = vset.pattern.permute.xlu0 0
        %589 = vperm.xlu0 %588, %v278
        %v590 = vpop.permute.xlu0 %589
        %591 = vset.pattern.permute.xlu0 0
        %592 = vperm.xlu0 %591, %v279
        %v593 = vpop.permute.xlu0 %592
        %594 = vset.pattern.permute.xlu0 0
        %595 = vperm.xlu0 %594, %v280
        %v596 = vpop.permute.xlu0 %595
        %597 = vset.pattern.permute.xlu0 0
        %598 = vperm.xlu0 %597, %v281
        %v599 = vpop.permute.xlu0 %598
        %600 = vset.pattern.permute.xlu0 0
        %601 = vperm.xlu0 %600, %v282
        %v602 = vpop.permute.xlu0 %601
        %603 = vset.pattern.permute.xlu0 0
        %604 = vperm.xlu0 %603, %v283
        %v605 = vpop.permute.xlu0 %604
        %606 = vset.pattern.permute.xlu0 0
        %607 = vperm.xlu0 %606, %v284
        %v608 = vpop.permute.xlu0 %607
        %609 = vset.pattern.permute.xlu0 0
        %610 = vperm.xlu0 %609, %v285
        %v611 = vpop.permute.xlu0 %610
        %612 = vset.pattern.permute.xlu0 0
        %613 = vperm.xlu0 %612, %v286
        %v614 = vpop.permute.xlu0 %613
        %615 = vset.pattern.permute.xlu0 0
        %616 = vperm.xlu0 %615, %v287
        %v617 = vpop.permute.xlu0 %616
        %618 = vset.pattern.permute.xlu0 0
        %619 = vperm.xlu0 %618, %v288
        %v620 = vpop.permute.xlu0 %619
        %621 = vset.pattern.permute.xlu0 0
        %622 = vperm.xlu0 %621, %v289
        %v623 = vpop.permute.xlu0 %622
        %624 = vset.pattern.permute.xlu0 0
        %625 = vperm.xlu0 %624, %v290
        %v626 = vpop.permute.xlu0 %625
        %627 = vset.pattern.permute.xlu0 0
        %628 = vperm.xlu0 %627, %v291
        %v629 = vpop.permute.xlu0 %628
        %630 = vset.pattern.permute.xlu0 0
        %631 = vperm.xlu0 %630, %v292
        %v632 = vpop.permute.xlu0 %631
        %633 = vset.pattern.permute.xlu0 0
        %634 = vperm.xlu0 %633, %v293
        %v635 = vpop.permute.xlu0 %634
        %636 = vset.pattern.permute.xlu0 0
        %637 = vperm.xlu0 %636, %v294
        %v638 = vpop.permute.xlu0 %637
        %639 = vset.pattern.permute.xlu0 0
        %640 = vperm.xlu0 %639, %v295
        %v641 = vpop.permute.xlu0 %640
        %642 = vset.pattern.permute.xlu0 0
        %643 = vperm.xlu0 %642, %v296
        %v644 = vpop.permute.xlu0 %643
        %645 = vset.pattern.permute.xlu0 0
        %646 = vperm.xlu0 %645, %v297
        %v647 = vpop.permute.xlu0 %646
        %648 = vset.pattern.permute.xlu0 0
        %649 = vperm.xlu0 %648, %v298
        %v650 = vpop.permute.xlu0 %649
        %651 = vset.pattern.permute.xlu0 0
        %652 = vperm.xlu0 %651, %v299
        %v653 = vpop.permute.xlu0 %652
        %654 = vset.pattern.permute.xlu0 0
        %655 = vperm.xlu0 %654, %v300
        %v656 = vpop.permute.xlu0 %655
        %657 = vset.pattern.permute.xlu0 0
        %658 = vperm.xlu0 %657, %v301
        %v659 = vpop.permute.xlu0 %658
        %660 = vset.pattern.permute.xlu0 0
        %661 = vperm.xlu0 %660, %v302
        %v662 = vpop.permute.xlu0 %661
        %663 = vset.pattern.permute.xlu0 0
        %664 = vperm.xlu0 %663, %v303
        %v665 = vpop.permute.xlu0 %664
        %666 = vset.pattern.permute.xlu0 0
        %667 = vperm.xlu0 %666, %v304
        %v668 = vpop.permute.xlu0 %667
        %669 = vset.pattern.permute.xlu0 0
        %670 = vperm.xlu0 %669, %v305
        %v671 = vpop.permute.xlu0 %670
        %672 = vset.pattern.permute.xlu0 0
        %673 = vperm.xlu0 %672, %v306
        %v674 = vpop.permute.xlu0 %673
        %675 = vset.pattern.permute.xlu0 0
        %676 = vperm.xlu0 %675, %v307
        %v677 = vpop.permute.xlu0 %676
        %678 = vset.pattern.permute.xlu0 0
        %679 = vperm.xlu0 %678, %v308
        %v680 = vpop.permute.xlu0 %679
        %681 = vset.pattern.permute.xlu0 0
        %682 = vperm.xlu0 %681, %v309
        %v683 = vpop.permute.xlu0 %682
        %684 = vset.pattern.permute.xlu0 0
        %685 = vperm.xlu0 %684, %v310
        %v686 = vpop.permute.xlu0 %685
        %687 = vset.pattern.permute.xlu0 0
        %688 = vperm.xlu0 %687, %v311
        %v689 = vpop.permute.xlu0 %688
        %690 = vset.pattern.permute.xlu0 0
        %691 = vperm.xlu0 %690, %v312
        %v692 = vpop.permute.xlu0 %691
        %693 = vset.pattern.permute.xlu0 0
        %694 = vperm.xlu0 %693, %v313
        %v695 = vpop.permute.xlu0 %694
        %696 = vset.pattern.permute.xlu0 0
        %697 = vperm.xlu0 %696, %v314
        %v698 = vpop.permute.xlu0 %697
        %699 = vset.pattern.permute.xlu0 0
        %700 = vperm.xlu0 %699, %v315
        %v701 = vpop.permute.xlu0 %700
        %702 = vset.pattern.permute.xlu0 0
        %703 = vperm.xlu0 %702, %v316
        %v704 = vpop.permute.xlu0 %703
        %705 = vset.pattern.permute.xlu0 0
        %706 = vperm.xlu0 %705, %v317
        %v707 = vpop.permute.xlu0 %706
        %708 = vset.pattern.permute.xlu0 0
        %709 = vperm.xlu0 %708, %v318
        %v710 = vpop.permute.xlu0 %709
        %711 = vset.pattern.permute.xlu0 0
        %712 = vperm.xlu0 %711, %v319
        %v713 = vpop.permute.xlu0 %712
        %714 = vset.pattern.permute.xlu0 0
        %715 = vperm.xlu0 %714, %v320
        %v716 = vpop.permute.xlu0 %715
        %717 = vset.pattern.permute.xlu0 0
        %718 = vperm.xlu0 %717, %v321
        %v719 = vpop.permute.xlu0 %718
        %720 = vset.pattern.permute.xlu0 0
        %721 = vperm.xlu0 %720, %v322
        %v722 = vpop.permute.xlu0 %721
        %723 = vset.pattern.permute.xlu0 0
        %724 = vperm.xlu0 %723, %v323
        %v725 = vpop.permute.xlu0 %724
        %726 = vset.pattern.permute.xlu0 0
        %727 = vperm.xlu0 %726, %v324
        %v728 = vpop.permute.xlu0 %727
        %729 = vset.pattern.permute.xlu0 0
        %730 = vperm.xlu0 %729, %v325
        %v731 = vpop.permute.xlu0 %730
        %732 = vset.pattern.permute.xlu0 0
        %733 = vperm.xlu0 %732, %v326
        %v734 = vpop.permute.xlu0 %733
        %735 = vset.pattern.permute.xlu0 0
        %736 = vperm.xlu0 %735, %v327
        %v737 = vpop.permute.xlu0 %736
        %738 = vset.pattern.permute.xlu0 0
        %739 = vperm.xlu0 %738, %v328
        %v740 = vpop.permute.xlu0 %739
        %741 = vset.pattern.permute.xlu0 0
        %742 = vperm.xlu0 %741, %v329
        %v743 = vpop.permute.xlu0 %742
        %744 = vset.pattern.permute.xlu0 0
        %745 = vperm.xlu0 %744, %v330
        %v746 = vpop.permute.xlu0 %745
        %747 = vset.pattern.permute.xlu0 0
        %748 = vperm.xlu0 %747, %v331
        %v749 = vpop.permute.xlu0 %748
        %750 = vset.pattern.permute.xlu0 0
        %751 = vperm.xlu0 %750, %v332
        %v752 = vpop.permute.xlu0 %751
        %753 = vset.pattern.permute.xlu0 0
        %754 = vperm.xlu0 %753, %v333
        %v755 = vpop.permute.xlu0 %754
        %756 = vset.pattern.permute.xlu0 0
        %757 = vperm.xlu0 %756, %v334
        %v758 = vpop.permute.xlu0 %757
        %759 = vset.pattern.permute.xlu0 0
        %760 = vperm.xlu0 %759, %v335
        %v761 = vpop.permute.xlu0 %760
        %762 = vset.pattern.permute.xlu0 0
        %763 = vperm.xlu0 %762, %v336
        %v764 = vpop.permute.xlu0 %763
        %765 = vset.pattern.permute.xlu0 0
        %766 = vperm.xlu0 %765, %v337
        %v767 = vpop.permute.xlu0 %766
        %768 = vset.pattern.permute.xlu0 0
        %769 = vperm.xlu0 %768, %v338
        %v770 = vpop.permute.xlu0 %769
        %771 = vset.pattern.permute.xlu0 0
        %772 = vperm.xlu0 %771, %v339
        %v773 = vpop.permute.xlu0 %772
        %774 = vset.pattern.permute.xlu0 0
        %775 = vperm.xlu0 %774, %v340
        %v776 = vpop.permute.xlu0 %775
        %777 = vset.pattern.permute.xlu0 0
        %778 = vperm.xlu0 %777, %v341
        %v779 = vpop.permute.xlu0 %778
        %780 = vset.pattern.permute.xlu0 0
        %781 = vperm.xlu0 %780, %v342
        %v782 = vpop.permute.xlu0 %781
        %783 = vset.pattern.permute.xlu0 0
        %784 = vperm.xlu0 %783, %v343
        %v785 = vpop.permute.xlu0 %784
        %786 = vset.pattern.permute.xlu0 0
        %787 = vperm.xlu0 %786, %v344
        %v788 = vpop.permute.xlu0 %787
        %789 = vset.pattern.permute.xlu0 0
        %790 = vperm.xlu0 %789, %v345
        %v791 = vpop.permute.xlu0 %790
        %792 = vset.pattern.permute.xlu0 0
        %793 = vperm.xlu0 %792, %v346
        %v794 = vpop.permute.xlu0 %793
        %795 = vset.pattern.permute.xlu0 0
        %796 = vperm.xlu0 %795, %v347
        %v797 = vpop.permute.xlu0 %796
        %798 = vset.pattern.permute.xlu0 0
        %799 = vperm.xlu0 %798, %v348
        %v800 = vpop.permute.xlu0 %799
        %801 = vset.pattern.permute.xlu0 0
        %802 = vperm.xlu0 %801, %v349
        %v803 = vpop.permute.xlu0 %802
        %804 = vset.pattern.permute.xlu0 0
        %805 = vperm.xlu0 %804, %v350
        %v806 = vpop.permute.xlu0 %805
        %807 = vset.pattern.permute.xlu0 0
        %808 = vperm.xlu0 %807, %v351
        %v809 = vpop.permute.xlu0 %808
        %810 = vset.pattern.permute.xlu0 0
        %811 = vperm.xlu0 %810, %v352
        %v812 = vpop.permute.xlu0 %811
        %813 = vset.pattern.permute.xlu0 0
        %814 = vperm.xlu0 %813, %v353
        %v815 = vpop.permute.xlu0 %814
        %816 = vset.pattern.permute.xlu0 0
        %817 = vperm.xlu0 %816, %v354
        %v818 = vpop.permute.xlu0 %817
        %819 = vset.pattern.permute.xlu0 0
        %820 = vperm.xlu0 %819, %v355
        %v821 = vpop.permute.xlu0 %820
        %822 = vset.pattern.permute.xlu0 0
        %823 = vperm.xlu0 %822, %v356
        %v824 = vpop.permute.xlu0 %823
        %825 = vset.pattern.permute.xlu0 0
        %826 = vperm.xlu0 %825, %v357
        %v827 = vpop.permute.xlu0 %826
        %828 = vset.pattern.permute.xlu0 0
        %829 = vperm.xlu0 %828, %v358
        %v830 = vpop.permute.xlu0 %829
        %831 = vset.pattern.permute.xlu0 0
        %832 = vperm.xlu0 %831, %v359
        %v833 = vpop.permute.xlu0 %832
        %834 = vset.pattern.permute.xlu0 0
        %835 = vperm.xlu0 %834, %v360
        %v836 = vpop.permute.xlu0 %835
        %837 = vset.pattern.permute.xlu0 0
        %838 = vperm.xlu0 %837, %v361
        %v839 = vpop.permute.xlu0 %838
        %840 = vset.pattern.permute.xlu0 0
        %841 = vperm.xlu0 %840, %v362
        %v842 = vpop.permute.xlu0 %841
        %843 = vset.pattern.permute.xlu0 0
        %844 = vperm.xlu0 %843, %v363
        %v845 = vpop.permute.xlu0 %844
        %846 = vset.pattern.permute.xlu0 0
        %847 = vperm.xlu0 %846, %v364
        %v848 = vpop.permute.xlu0 %847
        %849 = vset.pattern.permute.xlu0 0
        %850 = vperm.xlu0 %849, %v365
        %v851 = vpop.permute.xlu0 %850
        %852 = vset.pattern.permute.xlu0 0
        %853 = vperm.xlu0 %852, %v366
        %v854 = vpop.permute.xlu0 %853
        %855 = vset.pattern.permute.xlu0 0
        %856 = vperm.xlu0 %855, %v367
        %v857 = vpop.permute.xlu0 %856
        %858 = vset.pattern.permute.xlu0 0
        %859 = vperm.xlu0 %858, %v368
        %v860 = vpop.permute.xlu0 %859
        %861 = vset.pattern.permute.xlu0 0
        %862 = vperm.xlu0 %861, %v369
        %v863 = vpop.permute.xlu0 %862
        %864 = vset.pattern.permute.xlu0 0
        %865 = vperm.xlu0 %864, %v370
        %v866 = vpop.permute.xlu0 %865
        %867 = vset.pattern.permute.xlu0 0
        %868 = vperm.xlu0 %867, %v371
        %v869 = vpop.permute.xlu0 %868
        %870 = vset.pattern.permute.xlu0 0
        %871 = vperm.xlu0 %870, %v372
        %v872 = vpop.permute.xlu0 %871
        %873 = vset.pattern.permute.xlu0 0
        %874 = vperm.xlu0 %873, %v373
        %v875 = vpop.permute.xlu0 %874
        %876 = vset.pattern.permute.xlu0 0
        %877 = vperm.xlu0 %876, %v374
        %v878 = vpop.permute.xlu0 %877
        %879 = vset.pattern.permute.xlu0 0
        %880 = vperm.xlu0 %879, %v375
        %v881 = vpop.permute.xlu0 %880
        %882 = vset.pattern.permute.xlu0 0
        %883 = vperm.xlu0 %882, %v376
        %v884 = vpop.permute.xlu0 %883
        %885 = vset.pattern.permute.xlu0 0
        %886 = vperm.xlu0 %885, %v377
        %v887 = vpop.permute.xlu0 %886
        %888 = vset.pattern.permute.xlu0 0
        %889 = vperm.xlu0 %888, %v378
        %v890 = vpop.permute.xlu0 %889
        %891 = vset.pattern.permute.xlu0 0
        %892 = vperm.xlu0 %891, %v379
        %v893 = vpop.permute.xlu0 %892
        %894 = vset.pattern.permute.xlu0 0
        %895 = vperm.xlu0 %894, %v380
        %v896 = vpop.permute.xlu0 %895
        %897 = vset.pattern.permute.xlu0 0
        %898 = vperm.xlu0 %897, %v381
        %v899 = vpop.permute.xlu0 %898
        %900 = vset.pattern.permute.xlu0 0
        %901 = vperm.xlu0 %900, %v382
        %v902 = vpop.permute.xlu0 %901
        %903 = vset.pattern.permute.xlu0 0
        %904 = vperm.xlu0 %903, %v383
        %v905 = vpop.permute.xlu0 %904
        %906 = vset.pattern.permute.xlu0 0
        %907 = vperm.xlu0 %906, %v384
        %v908 = vpop.permute.xlu0 %907
        %909 = vset.pattern.permute.xlu0 0
        %910 = vperm.xlu0 %909, %v385
        %v911 = vpop.permute.xlu0 %910
        %912 = vset.pattern.permute.xlu0 0
        %913 = vperm.xlu0 %912, %v386
        %v914 = vpop.permute.xlu0 %913
        %915 = vset.pattern.permute.xlu0 0
        %916 = vperm.xlu0 %915, %v387
        %v917 = vpop.permute.xlu0 %916
        %918 = vset.pattern.permute.xlu0 0
        %919 = vperm.xlu0 %918, %v388
        %v920 = vpop.permute.xlu0 %919
        %921 = vset.pattern.permute.xlu0 0
        %922 = vperm.xlu0 %921, %v389
        %v923 = vpop.permute.xlu0 %922
        %924 = vset.pattern.permute.xlu0 0
        %925 = vperm.xlu0 %924, %v390
        %v926 = vpop.permute.xlu0 %925
        %927 = vset.pattern.permute.xlu0 0
        %928 = vperm.xlu0 %927, %v391
        %v929 = vpop.permute.xlu0 %928
        %930 = vset.pattern.permute.xlu0 0
        %931 = vperm.xlu0 %930, %v392
        %v932 = vpop.permute.xlu0 %931
        %933 = vset.pattern.permute.xlu0 0
        %934 = vperm.xlu0 %933, %v393
        %v935 = vpop.permute.xlu0 %934
        %936 = vset.pattern.permute.xlu0 0
        %937 = vperm.xlu0 %936, %v394
        %v938 = vpop.permute.xlu0 %937
        %939 = vset.pattern.permute.xlu0 0
        %940 = vperm.xlu0 %939, %v395
        %v941 = vpop.permute.xlu0 %940
        %942 = vset.pattern.permute.xlu0 0
        %943 = vperm.xlu0 %942, %v396
        %v944 = vpop.permute.xlu0 %943
        %945 = vset.pattern.permute.xlu0 0
        %946 = vperm.xlu0 %945, %v397
        %v947 = vpop.permute.xlu0 %946
        %948 = vset.pattern.permute.xlu0 0
        %949 = vperm.xlu0 %948, %v398
        %v950 = vpop.permute.xlu0 %949
        %951 = vset.pattern.permute.xlu0 0
        %952 = vperm.xlu0 %951, %v399
        %v953 = vpop.permute.xlu0 %952
        %954 = vset.pattern.permute.xlu0 0
        %955 = vperm.xlu0 %954, %v400
        %v956 = vpop.permute.xlu0 %955
        %957 = vset.pattern.permute.xlu0 0
        %958 = vperm.xlu0 %957, %v401
        %v959 = vpop.permute.xlu0 %958
        %960 = vset.pattern.permute.xlu0 0
        %961 = vperm.xlu0 %960, %v402
        %v962 = vpop.permute.xlu0 %961
        %963 = vset.pattern.permute.xlu0 0
        %964 = vperm.xlu0 %963, %v403
        %v965 = vpop.permute.xlu0 %964
        %966 = vset.pattern.permute.xlu0 0
        %967 = vperm.xlu0 %966, %v404
        %v968 = vpop.permute.xlu0 %967
        %969 = vset.pattern.permute.xlu0 0
        %970 = vperm.xlu0 %969, %v405
        %v971 = vpop.permute.xlu0 %970
        %972 = vset.pattern.permute.xlu0 0
        %973 = vperm.xlu0 %972, %v406
        %v974 = vpop.permute.xlu0 %973
        %975 = vset.pattern.permute.xlu0 0
        %976 = vperm.xlu0 %975, %v407
        %v977 = vpop.permute.xlu0 %976
        %978 = vset.pattern.permute.xlu0 0
        %979 = vperm.xlu0 %978, %v408
        %v980 = vpop.permute.xlu0 %979
        %981 = vset.pattern.permute.xlu0 0
        %982 = vperm.xlu0 %981, %v409
        %v983 = vpop.permute.xlu0 %982
        %984 = vset.pattern.permute.xlu0 0
        %985 = vperm.xlu0 %984, %v410
        %v986 = vpop.permute.xlu0 %985
        %987 = vset.pattern.permute.xlu0 0
        %988 = vperm.xlu0 %987, %v411
        %v989 = vpop.permute.xlu0 %988
        %990 = vset.pattern.permute.xlu0 0
        %991 = vperm.xlu0 %990, %v412
        %v992 = vpop.permute.xlu0 %991
        %993 = vset.pattern.permute.xlu0 0
        %994 = vperm.xlu0 %993, %v413
        %v995 = vpop.permute.xlu0 %994
        %996 = vset.pattern.permute.xlu0 0
        %997 = vperm.xlu0 %996, %v414
        %v998 = vpop.permute.xlu0 %997
        %999 = vset.pattern.permute.xlu0 0
        %1000 = vperm.xlu0 %999, %v415
        %v1001 = vpop.permute.xlu0 %1000
        %1002 = vset.pattern.permute.xlu0 0
        %1003 = vperm.xlu0 %1002, %v416
        %v1004 = vpop.permute.xlu0 %1003
        %1005 = vset.pattern.permute.xlu0 0
        %1006 = vperm.xlu0 %1005, %v417
        %v1007 = vpop.permute.xlu0 %1006
        %1008 = vset.pattern.permute.xlu0 0
        %1009 = vperm.xlu0 %1008, %v418
        %v1010 = vpop.permute.xlu0 %1009
        %1011 = vset.pattern.permute.xlu0 0
        %1012 = vperm.xlu0 %1011, %v419
        %v1013 = vpop.permute.xlu0 %1012
        %1014 = vset.pattern.permute.xlu0 0
        %1015 = vperm.xlu0 %1014, %v420
        %v1016 = vpop.permute.xlu0 %1015
        %1017 = vset.pattern.permute.xlu0 0
        %1018 = vperm.xlu0 %1017, %v421
        %v1019 = vpop.permute.xlu0 %1018
        %1020 = vset.pattern.permute.xlu0 0
        %1021 = vperm.xlu0 %1020, %v422
        %v1022 = vpop.permute.xlu0 %1021
        %1023 = vset.pattern.permute.xlu0 0
        %1024 = vperm.xlu0 %1023, %v423
        %v1025 = vpop.permute.xlu0 %1024
        %1026 = vset.pattern.permute.xlu0 0
        %1027 = vperm.xlu0 %1026, %v424
        %v1028 = vpop.permute.xlu0 %1027
        %1029 = vset.pattern.permute.xlu0 0
        %1030 = vperm.xlu0 %1029, %v425
        %v1031 = vpop.permute.xlu0 %1030
        %1032 = vset.pattern.permute.xlu0 0
        %1033 = vperm.xlu0 %1032, %v426
        %v1034 = vpop.permute.xlu0 %1033
        %1035 = vset.pattern.permute.xlu0 0
        %1036 = vperm.xlu0 %1035, %v427
        %v1037 = vpop.permute.xlu0 %1036
        %1038 = vset.pattern.permute.xlu0 0
        %1039 = vperm.xlu0 %1038, %v428
        %v1040 = vpop.permute.xlu0 %1039
        %1041 = vset.pattern.permute.xlu0 0
        %1042 = vperm.xlu0 %1041, %v429
        %v1043 = vpop.permute.xlu0 %1042
        %1044 = vset.pattern.permute.xlu0 0
        %1045 = vperm.xlu0 %1044, %v430
        %v1046 = vpop.permute.xlu0 %1045
        %1047 = vset.pattern.permute.xlu0 0
        %1048 = vperm.xlu0 %1047, %v431
        %v1049 = vpop.permute.xlu0 %1048
        %1050 = vset.pattern.permute.xlu0 0
        %1051 = vperm.xlu0 %1050, %v432
        %v1052 = vpop.permute.xlu0 %1051
        %1053 = vset.pattern.permute.xlu0 0
        %1054 = vperm.xlu0 %1053, %v433
        %v1055 = vpop.permute.xlu0 %1054
        %1056 = vset.pattern.permute.xlu0 0
        %1057 = vperm.xlu0 %1056, %v434
        %v1058 = vpop.permute.xlu0 %1057
        %1059 = vset.pattern.permute.xlu0 0
        %1060 = vperm.xlu0 %1059, %v435
        %v1061 = vpop.permute.xlu0 %1060
        %1062 = vset.pattern.permute.xlu0 0
        %1063 = vperm.xlu0 %1062, %v436
        %v1064 = vpop.permute.xlu0 %1063
        %1065 = vset.pattern.permute.xlu0 0
        %1066 = vperm.xlu0 %1065, %v437
        %v1067 = vpop.permute.xlu0 %1066
        %1068 = vset.pattern.permute.xlu0 0
        %1069 = vperm.xlu0 %1068, %v438
        %v1070 = vpop.permute.xlu0 %1069
        %1071 = vset.pattern.permute.xlu0 0
        %1072 = vperm.xlu0 %1071, %v439
        %v1073 = vpop.permute.xlu0 %1072
        %1074 = vset.pattern.permute.xlu0 0
        %1075 = vperm.xlu0 %1074, %v440
        %v1076 = vpop.permute.xlu0 %1075
        %1077 = vset.pattern.permute.xlu0 0
        %1078 = vperm.xlu0 %1077, %v441
        %v1079 = vpop.permute.xlu0 %1078
        %1080 = vset.pattern.permute.xlu0 0
        %1081 = vperm.xlu0 %1080, %v442
        %v1082 = vpop.permute.xlu0 %1081
        %1083 = vset.pattern.permute.xlu0 0
        %1084 = vperm.xlu0 %1083, %v443
        %v1085 = vpop.permute.xlu0 %1084
        %1086 = vset.pattern.permute.xlu0 0
        %1087 = vperm.xlu0 %1086, %v444
        %v1088 = vpop.permute.xlu0 %1087
        %1089 = vset.pattern.permute.xlu0 0
        %1090 = vperm.xlu0 %1089, %v445
        %v1091 = vpop.permute.xlu0 %1090
        %1092 = vset.pattern.permute.xlu0 0
        %1093 = vperm.xlu0 %1092, %v446
        %v1094 = vpop.permute.xlu0 %1093
        %1095 = vset.pattern.permute.xlu0 0
        %1096 = vperm.xlu0 %1095, %v447
        %v1097 = vpop.permute.xlu0 %1096
        %1098 = vset.pattern.permute.xlu0 0
        %1099 = vperm.xlu0 %1098, %v448
        %v1100 = vpop.permute.xlu0 %1099
        %1101 = vset.pattern.permute.xlu0 0
        %1102 = vperm.xlu0 %1101, %v449
        %v1103 = vpop.permute.xlu0 %1102
        %1104 = vset.pattern.permute.xlu0 0
        %1105 = vperm.xlu0 %1104, %v450
        %v1106 = vpop.permute.xlu0 %1105
        %1107 = vset.pattern.permute.xlu0 0
        %1108 = vperm.xlu0 %1107, %v451
        %v1109 = vpop.permute.xlu0 %1108
        %1110 = vset.pattern.permute.xlu0 0
        %1111 = vperm.xlu0 %1110, %v452
        %v1112 = vpop.permute.xlu0 %1111
        %1113 = vset.pattern.permute.xlu0 0
        %1114 = vperm.xlu0 %1113, %v453
        %v1115 = vpop.permute.xlu0 %1114
        %1116 = vset.pattern.permute.xlu0 0
        %1117 = vperm.xlu0 %1116, %v454
        %v1118 = vpop.permute.xlu0 %1117
        %1119 = vset.pattern.permute.xlu0 0
        %1120 = vperm.xlu0 %1119, %v455
        %v1121 = vpop.permute.xlu0 %1120
        %1122 = vset.pattern.permute.xlu0 0
        %1123 = vperm.xlu0 %1122, %v456
        %v1124 = vpop.permute.xlu0 %1123
        %1125 = vset.pattern.permute.xlu0 0
        %1126 = vperm.xlu0 %1125, %v457
        %v1127 = vpop.permute.xlu0 %1126
        %1128 = vset.pattern.permute.xlu0 0
        %1129 = vperm.xlu0 %1128, %v458
        %v1130 = vpop.permute.xlu0 %1129
        %1131 = vset.pattern.permute.xlu0 0
        %1132 = vperm.xlu0 %1131, %v459
        %v1133 = vpop.permute.xlu0 %1132
        %1134 = vset.pattern.permute.xlu0 0
        %1135 = vperm.xlu0 %1134, %v460
        %v1136 = vpop.permute.xlu0 %1135
        %1137 = vset.pattern.permute.xlu0 0
        %1138 = vperm.xlu0 %1137, %v461
        %v1139 = vpop.permute.xlu0 %1138
        %1140 = vset.pattern.permute.xlu0 0
        %1141 = vperm.xlu0 %1140, %v462
        %v1142 = vpop.permute.xlu0 %1141
        %1143 = vset.pattern.permute.xlu0 0
        %1144 = vperm.xlu0 %1143, %v463
        %v1145 = vpop.permute.xlu0 %1144
        %1146 = vset.pattern.permute.xlu0 0
        %1147 = vperm.xlu0 %1146, %v464
        %v1148 = vpop.permute.xlu0 %1147
        %1149 = vset.pattern.permute.xlu0 0
        %1150 = vperm.xlu0 %1149, %v465
        %v1151 = vpop.permute.xlu0 %1150
        %1152 = vset.pattern.permute.xlu0 0
        %1153 = vperm.xlu0 %1152, %v466
        %v1154 = vpop.permute.xlu0 %1153
        %1155 = vset.pattern.permute.xlu0 0
        %1156 = vperm.xlu0 %1155, %v467
        %v1157 = vpop.permute.xlu0 %1156
        %1158 = vset.pattern.permute.xlu0 0
        %1159 = vperm.xlu0 %1158, %v468
        %v1160 = vpop.permute.xlu0 %1159
        %1161 = vset.pattern.permute.xlu0 0
        %1162 = vperm.xlu0 %1161, %v469
        %v1163 = vpop.permute.xlu0 %1162
        %1164 = vset.pattern.permute.xlu0 0
        %1165 = vperm.xlu0 %1164, %v470
        %v1166 = vpop.permute.xlu0 %1165
        %1167 = vset.pattern.permute.xlu0 0
        %1168 = vperm.xlu0 %1167, %v471
        %v1169 = vpop.permute.xlu0 %1168
        %1170 = vset.pattern.permute.xlu0 0
        %1171 = vperm.xlu0 %1170, %v472
        %v1172 = vpop.permute.xlu0 %1171
        %1173 = vset.pattern.permute.xlu0 0
        %1174 = vperm.xlu0 %1173, %v473
        %v1175 = vpop.permute.xlu0 %1174
        %1176 = vset.pattern.permute.xlu0 0
        %1177 = vperm.xlu0 %1176, %v474
        %v1178 = vpop.permute.xlu0 %1177
        %1179 = vset.pattern.permute.xlu0 0
        %1180 = vperm.xlu0 %1179, %v475
        %v1181 = vpop.permute.xlu0 %1180
        %1182 = vset.pattern.permute.xlu0 0
        %1183 = vperm.xlu0 %1182, %v476
        %v1184 = vpop.permute.xlu0 %1183
        %1185 = vset.pattern.permute.xlu0 0
        %1186 = vperm.xlu0 %1185, %v477
        %v1187 = vpop.permute.xlu0 %1186
        %1188 = vset.pattern.permute.xlu0 0
        %1189 = vperm.xlu0 %1188, %v478
        %v1190 = vpop.permute.xlu0 %1189
        %1191 = vset.pattern.permute.xlu0 0
        %1192 = vperm.xlu0 %1191, %v479
        %v1193 = vpop.permute.xlu0 %1192
        %1194 = vset.pattern.permute.xlu0 0
        %1195 = vperm.xlu0 %1194, %v480
        %v1196 = vpop.permute.xlu0 %1195
        %1197 = vset.pattern.permute.xlu0 0
        %1198 = vperm.xlu0 %1197, %v481
        %v1199 = vpop.permute.xlu0 %1198
        %1200 = vset.pattern.permute.xlu0 0
        %1201 = vperm.xlu0 %1200, %v482
        %v1202 = vpop.permute.xlu0 %1201
        %1203 = vset.pattern.permute.xlu0 0
        %1204 = vperm.xlu0 %1203, %v483
        %v1205 = vpop.permute.xlu0 %1204
        %1206 = vset.pattern.permute.xlu0 0
        %1207 = vperm.xlu0 %1206, %v484
        %v1208 = vpop.permute.xlu0 %1207
        %1209 = vset.pattern.permute.xlu0 0
        %1210 = vperm.xlu0 %1209, %v485
        %v1211 = vpop.permute.xlu0 %1210
        %1212 = vset.pattern.permute.xlu0 0
        %1213 = vperm.xlu0 %1212, %v486
        %v1214 = vpop.permute.xlu0 %1213
        %1215 = vset.pattern.permute.xlu0 0
        %1216 = vperm.xlu0 %1215, %v487
        %v1217 = vpop.permute.xlu0 %1216
        %1218 = vset.pattern.permute.xlu0 0
        %1219 = vperm.xlu0 %1218, %v488
        %v1220 = vpop.permute.xlu0 %1219
        %1221 = vset.pattern.permute.xlu0 0
        %1222 = vperm.xlu0 %1221, %v489
        %v1223 = vpop.permute.xlu0 %1222
        %1224 = vset.pattern.permute.xlu0 0
        %1225 = vperm.xlu0 %1224, %v490
        %v1226 = vpop.permute.xlu0 %1225
        %1227 = vset.pattern.permute.xlu0 0
        %1228 = vperm.xlu0 %1227, %v491
        %v1229 = vpop.permute.xlu0 %1228
        %1230 = vset.pattern.permute.xlu0 0
        %1231 = vperm.xlu0 %1230, %v492
        %v1232 = vpop.permute.xlu0 %1231
        %1233 = vset.pattern.permute.xlu0 0
        %1234 = vperm.xlu0 %1233, %v493
        %v1235 = vpop.permute.xlu0 %1234
        %1236 = vset.pattern.permute.xlu0 0
        %1237 = vperm.xlu0 %1236, %v494
        %v1238 = vpop.permute.xlu0 %1237
        %1239 = vset.pattern.permute.xlu0 0
        %1240 = vperm.xlu0 %1239, %v495
        %v1241 = vpop.permute.xlu0 %1240
        %1242 = vset.pattern.permute.xlu0 0
        %1243 = vperm.xlu0 %1242, %v496
        %v1244 = vpop.permute.xlu0 %1243
        %1245 = vset.pattern.permute.xlu0 0
        %1246 = vperm.xlu0 %1245, %v497
        %v1247 = vpop.permute.xlu0 %1246
        %1248 = vset.pattern.permute.xlu0 0
        %1249 = vperm.xlu0 %1248, %v498
        %v1250 = vpop.permute.xlu0 %1249
        %1251 = vset.pattern.permute.xlu0 0
        %1252 = vperm.xlu0 %1251, %v499
        %v1253 = vpop.permute.xlu0 %1252
        %1254 = vset.pattern.permute.xlu0 0
        %1255 = vperm.xlu0 %1254, %v500
        %v1256 = vpop.permute.xlu0 %1255
        %1257 = vset.pattern.permute.xlu0 0
        %1258 = vperm.xlu0 %1257, %v501
        %v1259 = vpop.permute.xlu0 %1258
        %1260 = vset.pattern.permute.xlu0 0
        %1261 = vperm.xlu0 %1260, %v502
        %v1262 = vpop.permute.xlu0 %1261
        %1263 = vset.pattern.permute.xlu0 0
        %1264 = vperm.xlu0 %1263, %v503
        %v1265 = vpop.permute.xlu0 %1264
        %1266 = vset.pattern.permute.xlu0 0
        %1267 = vperm.xlu0 %1266, %v504
        %v1268 = vpop.permute.xlu0 %1267
        %1269 = vset.pattern.permute.xlu0 0
        %1270 = vperm.xlu0 %1269, %v505
        %v1271 = vpop.permute.xlu0 %1270
        %1272 = vset.pattern.permute.xlu0 0
        %1273 = vperm.xlu0 %1272, %v506
        %v1274 = vpop.permute.xlu0 %1273
        %1275 = vset.pattern.permute.xlu0 0
        %1276 = vperm.xlu0 %1275, %v507
        %v1277 = vpop.permute.xlu0 %1276
        %vm1278 = vcmp.eq.s32.totalorder %v512, %v509
        %vm1279 = vcmp.eq.s32.totalorder %v515, %v509
        %vm1280 = vcmp.eq.s32.totalorder %v518, %v509
        %vm1281 = vcmp.eq.s32.totalorder %v521, %v509
        %vm1282 = vcmp.eq.s32.totalorder %v524, %v509
        %vm1283 = vcmp.eq.s32.totalorder %v527, %v509
        %vm1284 = vcmp.eq.s32.totalorder %v530, %v509
        %vm1285 = vcmp.eq.s32.totalorder %v533, %v509
        %vm1286 = vcmp.eq.s32.totalorder %v536, %v509
        %vm1287 = vcmp.eq.s32.totalorder %v539, %v509
        %vm1288 = vcmp.eq.s32.totalorder %v542, %v509
        %vm1289 = vcmp.eq.s32.totalorder %v545, %v509
        %vm1290 = vcmp.eq.s32.totalorder %v548, %v509
        %vm1291 = vcmp.eq.s32.totalorder %v551, %v509
        %vm1292 = vcmp.eq.s32.totalorder %v554, %v509
        %vm1293 = vcmp.eq.s32.totalorder %v557, %v509
        %vm1294 = vcmp.eq.s32.totalorder %v560, %v509
        %vm1295 = vcmp.eq.s32.totalorder %v563, %v509
        %vm1296 = vcmp.eq.s32.totalorder %v566, %v509
        %vm1297 = vcmp.eq.s32.totalorder %v569, %v509
        %vm1298 = vcmp.eq.s32.totalorder %v572, %v509
        %vm1299 = vcmp.eq.s32.totalorder %v575, %v509
        %vm1300 = vcmp.eq.s32.totalorder %v578, %v509
        %vm1301 = vcmp.eq.s32.totalorder %v581, %v509
        %vm1302 = vcmp.eq.s32.totalorder %v584, %v509
        %vm1303 = vcmp.eq.s32.totalorder %v587, %v509
        %vm1304 = vcmp.eq.s32.totalorder %v590, %v509
        %vm1305 = vcmp.eq.s32.totalorder %v593, %v509
        %vm1306 = vcmp.eq.s32.totalorder %v596, %v509
        %vm1307 = vcmp.eq.s32.totalorder %v599, %v509
        %vm1308 = vcmp.eq.s32.totalorder %v602, %v509
        %vm1309 = vcmp.eq.s32.totalorder %v605, %v509
        %vm1310 = vcmp.eq.s32.totalorder %v608, %v509
        %vm1311 = vcmp.eq.s32.totalorder %v611, %v509
        %vm1312 = vcmp.eq.s32.totalorder %v614, %v509
        %vm1313 = vcmp.eq.s32.totalorder %v617, %v509
        %vm1314 = vcmp.eq.s32.totalorder %v620, %v509
        %vm1315 = vcmp.eq.s32.totalorder %v623, %v509
        %vm1316 = vcmp.eq.s32.totalorder %v626, %v509
        %vm1317 = vcmp.eq.s32.totalorder %v629, %v509
        %vm1318 = vcmp.eq.s32.totalorder %v632, %v509
        %vm1319 = vcmp.eq.s32.totalorder %v635, %v509
        %vm1320 = vcmp.eq.s32.totalorder %v638, %v509
        %vm1321 = vcmp.eq.s32.totalorder %v641, %v509
        %vm1322 = vcmp.eq.s32.totalorder %v644, %v509
        %vm1323 = vcmp.eq.s32.totalorder %v647, %v509
        %vm1324 = vcmp.eq.s32.totalorder %v650, %v509
        %vm1325 = vcmp.eq.s32.totalorder %v653, %v509
        %vm1326 = vcmp.eq.s32.totalorder %v656, %v509
        %vm1327 = vcmp.eq.s32.totalorder %v659, %v509
        %vm1328 = vcmp.eq.s32.totalorder %v662, %v509
        %vm1329 = vcmp.eq.s32.totalorder %v665, %v509
        %vm1330 = vcmp.eq.s32.totalorder %v668, %v509
        %vm1331 = vcmp.eq.s32.totalorder %v671, %v509
        %vm1332 = vcmp.eq.s32.totalorder %v674, %v509
        %vm1333 = vcmp.eq.s32.totalorder %v677, %v509
        %vm1334 = vcmp.eq.s32.totalorder %v680, %v509
        %vm1335 = vcmp.eq.s32.totalorder %v683, %v509
        %vm1336 = vcmp.eq.s32.totalorder %v686, %v509
        %vm1337 = vcmp.eq.s32.totalorder %v689, %v509
        %vm1338 = vcmp.eq.s32.totalorder %v692, %v509
        %vm1339 = vcmp.eq.s32.totalorder %v695, %v509
        %vm1340 = vcmp.eq.s32.totalorder %v698, %v509
        %vm1341 = vcmp.eq.s32.totalorder %v701, %v509
        %vm1342 = vcmp.eq.s32.totalorder %v704, %v509
        %vm1343 = vcmp.eq.s32.totalorder %v707, %v509
        %vm1344 = vcmp.eq.s32.totalorder %v710, %v509
        %vm1345 = vcmp.eq.s32.totalorder %v713, %v509
        %vm1346 = vcmp.eq.s32.totalorder %v716, %v509
        %vm1347 = vcmp.eq.s32.totalorder %v719, %v509
        %vm1348 = vcmp.eq.s32.totalorder %v722, %v509
        %vm1349 = vcmp.eq.s32.totalorder %v725, %v509
        %vm1350 = vcmp.eq.s32.totalorder %v728, %v509
        %vm1351 = vcmp.eq.s32.totalorder %v731, %v509
        %vm1352 = vcmp.eq.s32.totalorder %v734, %v509
        %vm1353 = vcmp.eq.s32.totalorder %v737, %v509
        %vm1354 = vcmp.eq.s32.totalorder %v740, %v509
        %vm1355 = vcmp.eq.s32.totalorder %v743, %v509
        %vm1356 = vcmp.eq.s32.totalorder %v746, %v509
        %vm1357 = vcmp.eq.s32.totalorder %v749, %v509
        %vm1358 = vcmp.eq.s32.totalorder %v752, %v509
        %vm1359 = vcmp.eq.s32.totalorder %v755, %v509
        %vm1360 = vcmp.eq.s32.totalorder %v758, %v509
        %vm1361 = vcmp.eq.s32.totalorder %v761, %v509
        %vm1362 = vcmp.eq.s32.totalorder %v764, %v509
        %vm1363 = vcmp.eq.s32.totalorder %v767, %v509
        %vm1364 = vcmp.eq.s32.totalorder %v770, %v509
        %vm1365 = vcmp.eq.s32.totalorder %v773, %v509
        %vm1366 = vcmp.eq.s32.totalorder %v776, %v509
        %vm1367 = vcmp.eq.s32.totalorder %v779, %v509
        %vm1368 = vcmp.eq.s32.totalorder %v782, %v509
        %vm1369 = vcmp.eq.s32.totalorder %v785, %v509
        %vm1370 = vcmp.eq.s32.totalorder %v788, %v509
        %vm1371 = vcmp.eq.s32.totalorder %v791, %v509
        %vm1372 = vcmp.eq.s32.totalorder %v794, %v509
        %vm1373 = vcmp.eq.s32.totalorder %v797, %v509
        %vm1374 = vcmp.eq.s32.totalorder %v800, %v509
        %vm1375 = vcmp.eq.s32.totalorder %v803, %v509
        %vm1376 = vcmp.eq.s32.totalorder %v806, %v509
        %vm1377 = vcmp.eq.s32.totalorder %v809, %v509
        %vm1378 = vcmp.eq.s32.totalorder %v812, %v509
        %vm1379 = vcmp.eq.s32.totalorder %v815, %v509
        %vm1380 = vcmp.eq.s32.totalorder %v818, %v509
        %vm1381 = vcmp.eq.s32.totalorder %v821, %v509
        %vm1382 = vcmp.eq.s32.totalorder %v824, %v509
        %vm1383 = vcmp.eq.s32.totalorder %v827, %v509
        %vm1384 = vcmp.eq.s32.totalorder %v830, %v509
        %vm1385 = vcmp.eq.s32.totalorder %v833, %v509
        %vm1386 = vcmp.eq.s32.totalorder %v836, %v509
        %vm1387 = vcmp.eq.s32.totalorder %v839, %v509
        %vm1388 = vcmp.eq.s32.totalorder %v842, %v509
        %vm1389 = vcmp.eq.s32.totalorder %v845, %v509
        %vm1390 = vcmp.eq.s32.totalorder %v848, %v509
        %vm1391 = vcmp.eq.s32.totalorder %v851, %v509
        %vm1392 = vcmp.eq.s32.totalorder %v854, %v509
        %vm1393 = vcmp.eq.s32.totalorder %v857, %v509
        %vm1394 = vcmp.eq.s32.totalorder %v860, %v509
        %vm1395 = vcmp.eq.s32.totalorder %v863, %v509
        %vm1396 = vcmp.eq.s32.totalorder %v866, %v509
        %vm1397 = vcmp.eq.s32.totalorder %v869, %v509
        %vm1398 = vcmp.eq.s32.totalorder %v872, %v509
        %vm1399 = vcmp.eq.s32.totalorder %v875, %v509
        %vm1400 = vcmp.eq.s32.totalorder %v878, %v509
        %vm1401 = vcmp.eq.s32.totalorder %v881, %v509
        %vm1402 = vcmp.eq.s32.totalorder %v884, %v509
        %vm1403 = vcmp.eq.s32.totalorder %v887, %v509
        %vm1404 = vcmp.eq.s32.totalorder %v890, %v509
        %vm1405 = vcmp.eq.s32.totalorder %v893, %v509
        %vm1406 = vcmp.eq.s32.totalorder %v896, %v509
        %vm1407 = vcmp.eq.s32.totalorder %v899, %v509
        %vm1408 = vcmp.eq.s32.totalorder %v902, %v509
        %vm1409 = vcmp.eq.s32.totalorder %v905, %v509
        %vm1410 = vcmp.eq.s32.totalorder %v908, %v509
        %vm1411 = vcmp.eq.s32.totalorder %v911, %v509
        %vm1412 = vcmp.eq.s32.totalorder %v914, %v509
        %vm1413 = vcmp.eq.s32.totalorder %v917, %v509
        %vm1414 = vcmp.eq.s32.totalorder %v920, %v509
        %vm1415 = vcmp.eq.s32.totalorder %v923, %v509
        %vm1416 = vcmp.eq.s32.totalorder %v926, %v509
        %vm1417 = vcmp.eq.s32.totalorder %v929, %v509
        %vm1418 = vcmp.eq.s32.totalorder %v932, %v509
        %vm1419 = vcmp.eq.s32.totalorder %v935, %v509
        %vm1420 = vcmp.eq.s32.totalorder %v938, %v509
        %vm1421 = vcmp.eq.s32.totalorder %v941, %v509
        %vm1422 = vcmp.eq.s32.totalorder %v944, %v509
        %vm1423 = vcmp.eq.s32.totalorder %v947, %v509
        %vm1424 = vcmp.eq.s32.totalorder %v950, %v509
        %vm1425 = vcmp.eq.s32.totalorder %v953, %v509
        %vm1426 = vcmp.eq.s32.totalorder %v956, %v509
        %vm1427 = vcmp.eq.s32.totalorder %v959, %v509
        %vm1428 = vcmp.eq.s32.totalorder %v962, %v509
        %vm1429 = vcmp.eq.s32.totalorder %v965, %v509
        %vm1430 = vcmp.eq.s32.totalorder %v968, %v509
        %vm1431 = vcmp.eq.s32.totalorder %v971, %v509
        %vm1432 = vcmp.eq.s32.totalorder %v974, %v509
        %vm1433 = vcmp.eq.s32.totalorder %v977, %v509
        %vm1434 = vcmp.eq.s32.totalorder %v980, %v509
        %vm1435 = vcmp.eq.s32.totalorder %v983, %v509
        %vm1436 = vcmp.eq.s32.totalorder %v986, %v509
        %vm1437 = vcmp.eq.s32.totalorder %v989, %v509
        %vm1438 = vcmp.eq.s32.totalorder %v992, %v509
        %vm1439 = vcmp.eq.s32.totalorder %v995, %v509
        %vm1440 = vcmp.eq.s32.totalorder %v998, %v509
        %vm1441 = vcmp.eq.s32.totalorder %v1001, %v509
        %vm1442 = vcmp.eq.s32.totalorder %v1004, %v509
        %vm1443 = vcmp.eq.s32.totalorder %v1007, %v509
        %vm1444 = vcmp.eq.s32.totalorder %v1010, %v509
        %vm1445 = vcmp.eq.s32.totalorder %v1013, %v509
        %vm1446 = vcmp.eq.s32.totalorder %v1016, %v509
        %vm1447 = vcmp.eq.s32.totalorder %v1019, %v509
        %vm1448 = vcmp.eq.s32.totalorder %v1022, %v509
        %vm1449 = vcmp.eq.s32.totalorder %v1025, %v509
        %vm1450 = vcmp.eq.s32.totalorder %v1028, %v509
        %vm1451 = vcmp.eq.s32.totalorder %v1031, %v509
        %vm1452 = vcmp.eq.s32.totalorder %v1034, %v509
        %vm1453 = vcmp.eq.s32.totalorder %v1037, %v509
        %vm1454 = vcmp.eq.s32.totalorder %v1040, %v509
        %vm1455 = vcmp.eq.s32.totalorder %v1043, %v509
        %vm1456 = vcmp.eq.s32.totalorder %v1046, %v509
        %vm1457 = vcmp.eq.s32.totalorder %v1049, %v509
        %vm1458 = vcmp.eq.s32.totalorder %v1052, %v509
        %vm1459 = vcmp.eq.s32.totalorder %v1055, %v509
        %vm1460 = vcmp.eq.s32.totalorder %v1058, %v509
        %vm1461 = vcmp.eq.s32.totalorder %v1061, %v509
        %vm1462 = vcmp.eq.s32.totalorder %v1064, %v509
        %vm1463 = vcmp.eq.s32.totalorder %v1067, %v509
        %vm1464 = vcmp.eq.s32.totalorder %v1070, %v509
        %vm1465 = vcmp.eq.s32.totalorder %v1073, %v509
        %vm1466 = vcmp.eq.s32.totalorder %v1076, %v509
        %vm1467 = vcmp.eq.s32.totalorder %v1079, %v509
        %vm1468 = vcmp.eq.s32.totalorder %v1082, %v509
        %vm1469 = vcmp.eq.s32.totalorder %v1085, %v509
        %vm1470 = vcmp.eq.s32.totalorder %v1088, %v509
        %vm1471 = vcmp.eq.s32.totalorder %v1091, %v509
        %vm1472 = vcmp.eq.s32.totalorder %v1094, %v509
        %vm1473 = vcmp.eq.s32.totalorder %v1097, %v509
        %vm1474 = vcmp.eq.s32.totalorder %v1100, %v509
        %vm1475 = vcmp.eq.s32.totalorder %v1103, %v509
        %vm1476 = vcmp.eq.s32.totalorder %v1106, %v509
        %vm1477 = vcmp.eq.s32.totalorder %v1109, %v509
        %vm1478 = vcmp.eq.s32.totalorder %v1112, %v509
        %vm1479 = vcmp.eq.s32.totalorder %v1115, %v509
        %vm1480 = vcmp.eq.s32.totalorder %v1118, %v509
        %vm1481 = vcmp.eq.s32.totalorder %v1121, %v509
        %vm1482 = vcmp.eq.s32.totalorder %v1124, %v509
        %vm1483 = vcmp.eq.s32.totalorder %v1127, %v509
        %vm1484 = vcmp.eq.s32.totalorder %v1130, %v509
        %vm1485 = vcmp.eq.s32.totalorder %v1133, %v509
        %vm1486 = vcmp.eq.s32.totalorder %v1136, %v509
        %vm1487 = vcmp.eq.s32.totalorder %v1139, %v509
        %vm1488 = vcmp.eq.s32.totalorder %v1142, %v509
        %vm1489 = vcmp.eq.s32.totalorder %v1145, %v509
        %vm1490 = vcmp.eq.s32.totalorder %v1148, %v509
        %vm1491 = vcmp.eq.s32.totalorder %v1151, %v509
        %vm1492 = vcmp.eq.s32.totalorder %v1154, %v509
        %vm1493 = vcmp.eq.s32.totalorder %v1157, %v509
        %vm1494 = vcmp.eq.s32.totalorder %v1160, %v509
        %vm1495 = vcmp.eq.s32.totalorder %v1163, %v509
        %vm1496 = vcmp.eq.s32.totalorder %v1166, %v509
        %vm1497 = vcmp.eq.s32.totalorder %v1169, %v509
        %vm1498 = vcmp.eq.s32.totalorder %v1172, %v509
        %vm1499 = vcmp.eq.s32.totalorder %v1175, %v509
        %vm1500 = vcmp.eq.s32.totalorder %v1178, %v509
        %vm1501 = vcmp.eq.s32.totalorder %v1181, %v509
        %vm1502 = vcmp.eq.s32.totalorder %v1184, %v509
        %vm1503 = vcmp.eq.s32.totalorder %v1187, %v509
        %vm1504 = vcmp.eq.s32.totalorder %v1190, %v509
        %vm1505 = vcmp.eq.s32.totalorder %v1193, %v509
        %vm1506 = vcmp.eq.s32.totalorder %v1196, %v509
        %vm1507 = vcmp.eq.s32.totalorder %v1199, %v509
        %vm1508 = vcmp.eq.s32.totalorder %v1202, %v509
        %vm1509 = vcmp.eq.s32.totalorder %v1205, %v509
        %vm1510 = vcmp.eq.s32.totalorder %v1208, %v509
        %vm1511 = vcmp.eq.s32.totalorder %v1211, %v509
        %vm1512 = vcmp.eq.s32.totalorder %v1214, %v509
        %vm1513 = vcmp.eq.s32.totalorder %v1217, %v509
        %vm1514 = vcmp.eq.s32.totalorder %v1220, %v509
        %vm1515 = vcmp.eq.s32.totalorder %v1223, %v509
        %vm1516 = vcmp.eq.s32.totalorder %v1226, %v509
        %vm1517 = vcmp.eq.s32.totalorder %v1229, %v509
        %vm1518 = vcmp.eq.s32.totalorder %v1232, %v509
        %vm1519 = vcmp.eq.s32.totalorder %v1235, %v509
        %vm1520 = vcmp.eq.s32.totalorder %v1238, %v509
        %vm1521 = vcmp.eq.s32.totalorder %v1241, %v509
        %vm1522 = vcmp.eq.s32.totalorder %v1244, %v509
        %vm1523 = vcmp.eq.s32.totalorder %v1247, %v509
        %vm1524 = vcmp.eq.s32.totalorder %v1250, %v509
        %vm1525 = vcmp.eq.s32.totalorder %v1253, %v509
        %vm1526 = vcmp.eq.s32.totalorder %v1256, %v509
        %vm1527 = vcmp.eq.s32.totalorder %v1259, %v509
        %vm1528 = vcmp.eq.s32.totalorder %v1262, %v509
        %vm1529 = vcmp.eq.s32.totalorder %v1265, %v509
        %vm1530 = vcmp.eq.s32.totalorder %v1268, %v509
        %vm1531 = vcmp.eq.s32.totalorder %v1271, %v509
        %vm1532 = vcmp.eq.s32.totalorder %v1274, %v509
        %vm1533 = vcmp.eq.s32.totalorder %v1277, %v509
        %v1534 = vsel %vm1278, 1, 0
        %v1535 = vsel %vm1279, 1, 0
        %v1536 = vsel %vm1280, 1, 0
        %v1537 = vsel %vm1281, 1, 0
        %v1538 = vsel %vm1282, 1, 0
        %v1539 = vsel %vm1283, 1, 0
        %v1540 = vsel %vm1284, 1, 0
        %v1541 = vsel %vm1285, 1, 0
        %v1542 = vsel %vm1286, 1, 0
        %v1543 = vsel %vm1287, 1, 0
        %v1544 = vsel %vm1288, 1, 0
        %v1545 = vsel %vm1289, 1, 0
        %v1546 = vsel %vm1290, 1, 0
        %v1547 = vsel %vm1291, 1, 0
        %v1548 = vsel %vm1292, 1, 0
        %v1549 = vsel %vm1293, 1, 0
        %v1550 = vsel %vm1294, 1, 0
        %v1551 = vsel %vm1295, 1, 0
        %v1552 = vsel %vm1296, 1, 0
        %v1553 = vsel %vm1297, 1, 0
        %v1554 = vsel %vm1298, 1, 0
        %v1555 = vsel %vm1299, 1, 0
        %v1556 = vsel %vm1300, 1, 0
        %v1557 = vsel %vm1301, 1, 0
        %v1558 = vsel %vm1302, 1, 0
        %v1559 = vsel %vm1303, 1, 0
        %v1560 = vsel %vm1304, 1, 0
        %v1561 = vsel %vm1305, 1, 0
        %v1562 = vsel %vm1306, 1, 0
        %v1563 = vsel %vm1307, 1, 0
        %v1564 = vsel %vm1308, 1, 0
        %v1565 = vsel %vm1309, 1, 0
        %v1566 = vsel %vm1310, 1, 0
        %v1567 = vsel %vm1311, 1, 0
        %v1568 = vsel %vm1312, 1, 0
        %v1569 = vsel %vm1313, 1, 0
        %v1570 = vsel %vm1314, 1, 0
        %v1571 = vsel %vm1315, 1, 0
        %v1572 = vsel %vm1316, 1, 0
        %v1573 = vsel %vm1317, 1, 0
        %v1574 = vsel %vm1318, 1, 0
        %v1575 = vsel %vm1319, 1, 0
        %v1576 = vsel %vm1320, 1, 0
        %v1577 = vsel %vm1321, 1, 0
        %v1578 = vsel %vm1322, 1, 0
        %v1579 = vsel %vm1323, 1, 0
        %v1580 = vsel %vm1324, 1, 0
        %v1581 = vsel %vm1325, 1, 0
        %v1582 = vsel %vm1326, 1, 0
        %v1583 = vsel %vm1327, 1, 0
        %v1584 = vsel %vm1328, 1, 0
        %v1585 = vsel %vm1329, 1, 0
        %v1586 = vsel %vm1330, 1, 0
        %v1587 = vsel %vm1331, 1, 0
        %v1588 = vsel %vm1332, 1, 0
        %v1589 = vsel %vm1333, 1, 0
        %v1590 = vsel %vm1334, 1, 0
        %v1591 = vsel %vm1335, 1, 0
        %v1592 = vsel %vm1336, 1, 0
        %v1593 = vsel %vm1337, 1, 0
        %v1594 = vsel %vm1338, 1, 0
        %v1595 = vsel %vm1339, 1, 0
        %v1596 = vsel %vm1340, 1, 0
        %v1597 = vsel %vm1341, 1, 0
        %v1598 = vsel %vm1342, 1, 0
        %v1599 = vsel %vm1343, 1, 0
        %v1600 = vsel %vm1344, 1, 0
        %v1601 = vsel %vm1345, 1, 0
        %v1602 = vsel %vm1346, 1, 0
        %v1603 = vsel %vm1347, 1, 0
        %v1604 = vsel %vm1348, 1, 0
        %v1605 = vsel %vm1349, 1, 0
        %v1606 = vsel %vm1350, 1, 0
        %v1607 = vsel %vm1351, 1, 0
        %v1608 = vsel %vm1352, 1, 0
        %v1609 = vsel %vm1353, 1, 0
        %v1610 = vsel %vm1354, 1, 0
        %v1611 = vsel %vm1355, 1, 0
        %v1612 = vsel %vm1356, 1, 0
        %v1613 = vsel %vm1357, 1, 0
        %v1614 = vsel %vm1358, 1, 0
        %v1615 = vsel %vm1359, 1, 0
        %v1616 = vsel %vm1360, 1, 0
        %v1617 = vsel %vm1361, 1, 0
        %v1618 = vsel %vm1362, 1, 0
        %v1619 = vsel %vm1363, 1, 0
        %v1620 = vsel %vm1364, 1, 0
        %v1621 = vsel %vm1365, 1, 0
        %v1622 = vsel %vm1366, 1, 0
        %v1623 = vsel %vm1367, 1, 0
        %v1624 = vsel %vm1368, 1, 0
        %v1625 = vsel %vm1369, 1, 0
        %v1626 = vsel %vm1370, 1, 0
        %v1627 = vsel %vm1371, 1, 0
        %v1628 = vsel %vm1372, 1, 0
        %v1629 = vsel %vm1373, 1, 0
        %v1630 = vsel %vm1374, 1, 0
        %v1631 = vsel %vm1375, 1, 0
        %v1632 = vsel %vm1376, 1, 0
        %v1633 = vsel %vm1377, 1, 0
        %v1634 = vsel %vm1378, 1, 0
        %v1635 = vsel %vm1379, 1, 0
        %v1636 = vsel %vm1380, 1, 0
        %v1637 = vsel %vm1381, 1, 0
        %v1638 = vsel %vm1382, 1, 0
        %v1639 = vsel %vm1383, 1, 0
        %v1640 = vsel %vm1384, 1, 0
        %v1641 = vsel %vm1385, 1, 0
        %v1642 = vsel %vm1386, 1, 0
        %v1643 = vsel %vm1387, 1, 0
        %v1644 = vsel %vm1388, 1, 0
        %v1645 = vsel %vm1389, 1, 0
        %v1646 = vsel %vm1390, 1, 0
        %v1647 = vsel %vm1391, 1, 0
        %v1648 = vsel %vm1392, 1, 0
        %v1649 = vsel %vm1393, 1, 0
        %v1650 = vsel %vm1394, 1, 0
        %v1651 = vsel %vm1395, 1, 0
        %v1652 = vsel %vm1396, 1, 0
        %v1653 = vsel %vm1397, 1, 0
        %v1654 = vsel %vm1398, 1, 0
        %v1655 = vsel %vm1399, 1, 0
        %v1656 = vsel %vm1400, 1, 0
        %v1657 = vsel %vm1401, 1, 0
        %v1658 = vsel %vm1402, 1, 0
        %v1659 = vsel %vm1403, 1, 0
        %v1660 = vsel %vm1404, 1, 0
        %v1661 = vsel %vm1405, 1, 0
        %v1662 = vsel %vm1406, 1, 0
        %v1663 = vsel %vm1407, 1, 0
        %v1664 = vsel %vm1408, 1, 0
        %v1665 = vsel %vm1409, 1, 0
        %v1666 = vsel %vm1410, 1, 0
        %v1667 = vsel %vm1411, 1, 0
        %v1668 = vsel %vm1412, 1, 0
        %v1669 = vsel %vm1413, 1, 0
        %v1670 = vsel %vm1414, 1, 0
        %v1671 = vsel %vm1415, 1, 0
        %v1672 = vsel %vm1416, 1, 0
        %v1673 = vsel %vm1417, 1, 0
        %v1674 = vsel %vm1418, 1, 0
        %v1675 = vsel %vm1419, 1, 0
        %v1676 = vsel %vm1420, 1, 0
        %v1677 = vsel %vm1421, 1, 0
        %v1678 = vsel %vm1422, 1, 0
        %v1679 = vsel %vm1423, 1, 0
        %v1680 = vsel %vm1424, 1, 0
        %v1681 = vsel %vm1425, 1, 0
        %v1682 = vsel %vm1426, 1, 0
        %v1683 = vsel %vm1427, 1, 0
        %v1684 = vsel %vm1428, 1, 0
        %v1685 = vsel %vm1429, 1, 0
        %v1686 = vsel %vm1430, 1, 0
        %v1687 = vsel %vm1431, 1, 0
        %v1688 = vsel %vm1432, 1, 0
        %v1689 = vsel %vm1433, 1, 0
        %v1690 = vsel %vm1434, 1, 0
        %v1691 = vsel %vm1435, 1, 0
        %v1692 = vsel %vm1436, 1, 0
        %v1693 = vsel %vm1437, 1, 0
        %v1694 = vsel %vm1438, 1, 0
        %v1695 = vsel %vm1439, 1, 0
        %v1696 = vsel %vm1440, 1, 0
        %v1697 = vsel %vm1441, 1, 0
        %v1698 = vsel %vm1442, 1, 0
        %v1699 = vsel %vm1443, 1, 0
        %v1700 = vsel %vm1444, 1, 0
        %v1701 = vsel %vm1445, 1, 0
        %v1702 = vsel %vm1446, 1, 0
        %v1703 = vsel %vm1447, 1, 0
        %v1704 = vsel %vm1448, 1, 0
        %v1705 = vsel %vm1449, 1, 0
        %v1706 = vsel %vm1450, 1, 0
        %v1707 = vsel %vm1451, 1, 0
        %v1708 = vsel %vm1452, 1, 0
        %v1709 = vsel %vm1453, 1, 0
        %v1710 = vsel %vm1454, 1, 0
        %v1711 = vsel %vm1455, 1, 0
        %v1712 = vsel %vm1456, 1, 0
        %v1713 = vsel %vm1457, 1, 0
        %v1714 = vsel %vm1458, 1, 0
        %v1715 = vsel %vm1459, 1, 0
        %v1716 = vsel %vm1460, 1, 0
        %v1717 = vsel %vm1461, 1, 0
        %v1718 = vsel %vm1462, 1, 0
        %v1719 = vsel %vm1463, 1, 0
        %v1720 = vsel %vm1464, 1, 0
        %v1721 = vsel %vm1465, 1, 0
        %v1722 = vsel %vm1466, 1, 0
        %v1723 = vsel %vm1467, 1, 0
        %v1724 = vsel %vm1468, 1, 0
        %v1725 = vsel %vm1469, 1, 0
        %v1726 = vsel %vm1470, 1, 0
        %v1727 = vsel %vm1471, 1, 0
        %v1728 = vsel %vm1472, 1, 0
        %v1729 = vsel %vm1473, 1, 0
        %v1730 = vsel %vm1474, 1, 0
        %v1731 = vsel %vm1475, 1, 0
        %v1732 = vsel %vm1476, 1, 0
        %v1733 = vsel %vm1477, 1, 0
        %v1734 = vsel %vm1478, 1, 0
        %v1735 = vsel %vm1479, 1, 0
        %v1736 = vsel %vm1480, 1, 0
        %v1737 = vsel %vm1481, 1, 0
        %v1738 = vsel %vm1482, 1, 0
        %v1739 = vsel %vm1483, 1, 0
        %v1740 = vsel %vm1484, 1, 0
        %v1741 = vsel %vm1485, 1, 0
        %v1742 = vsel %vm1486, 1, 0
        %v1743 = vsel %vm1487, 1, 0
        %v1744 = vsel %vm1488, 1, 0
        %v1745 = vsel %vm1489, 1, 0
        %v1746 = vsel %vm1490, 1, 0
        %v1747 = vsel %vm1491, 1, 0
        %v1748 = vsel %vm1492, 1, 0
        %v1749 = vsel %vm1493, 1, 0
        %v1750 = vsel %vm1494, 1, 0
        %v1751 = vsel %vm1495, 1, 0
        %v1752 = vsel %vm1496, 1, 0
        %v1753 = vsel %vm1497, 1, 0
        %v1754 = vsel %vm1498, 1, 0
        %v1755 = vsel %vm1499, 1, 0
        %v1756 = vsel %vm1500, 1, 0
        %v1757 = vsel %vm1501, 1, 0
        %v1758 = vsel %vm1502, 1, 0
        %v1759 = vsel %vm1503, 1, 0
        %v1760 = vsel %vm1504, 1, 0
        %v1761 = vsel %vm1505, 1, 0
        %v1762 = vsel %vm1506, 1, 0
        %v1763 = vsel %vm1507, 1, 0
        %v1764 = vsel %vm1508, 1, 0
        %v1765 = vsel %vm1509, 1, 0
        %v1766 = vsel %vm1510, 1, 0
        %v1767 = vsel %vm1511, 1, 0
        %v1768 = vsel %vm1512, 1, 0
        %v1769 = vsel %vm1513, 1, 0
        %v1770 = vsel %vm1514, 1, 0
        %v1771 = vsel %vm1515, 1, 0
        %v1772 = vsel %vm1516, 1, 0
        %v1773 = vsel %vm1517, 1, 0
        %v1774 = vsel %vm1518, 1, 0
        %v1775 = vsel %vm1519, 1, 0
        %v1776 = vsel %vm1520, 1, 0
        %v1777 = vsel %vm1521, 1, 0
        %v1778 = vsel %vm1522, 1, 0
        %v1779 = vsel %vm1523, 1, 0
        %v1780 = vsel %vm1524, 1, 0
        %v1781 = vsel %vm1525, 1, 0
        %v1782 = vsel %vm1526, 1, 0
        %v1783 = vsel %vm1527, 1, 0
        %v1784 = vsel %vm1528, 1, 0
        %v1785 = vsel %vm1529, 1, 0
        %v1786 = vsel %vm1530, 1, 0
        %v1787 = vsel %vm1531, 1, 0
        %v1788 = vsel %vm1532, 1, 0
        %v1789 = vsel %vm1533, 1, 0
        %v1790 = vcvt.s32.f32 %v1534
        %v1791 = vcvt.s32.f32 %v1535
        %v1792 = vcvt.s32.f32 %v1536
        %v1793 = vcvt.s32.f32 %v1537
        %v1794 = vcvt.s32.f32 %v1538
        %v1795 = vcvt.s32.f32 %v1539
        %v1796 = vcvt.s32.f32 %v1540
        %v1797 = vcvt.s32.f32 %v1541
        %v1798 = vcvt.s32.f32 %v1542
        %v1799 = vcvt.s32.f32 %v1543
        %v1800 = vcvt.s32.f32 %v1544
        %v1801 = vcvt.s32.f32 %v1545
        %v1802 = vcvt.s32.f32 %v1546
        %v1803 = vcvt.s32.f32 %v1547
        %v1804 = vcvt.s32.f32 %v1548
        %v1805 = vcvt.s32.f32 %v1549
        %v1806 = vcvt.s32.f32 %v1550
        %v1807 = vcvt.s32.f32 %v1551
        %v1808 = vcvt.s32.f32 %v1552
        %v1809 = vcvt.s32.f32 %v1553
        %v1810 = vcvt.s32.f32 %v1554
        %v1811 = vcvt.s32.f32 %v1555
        %v1812 = vcvt.s32.f32 %v1556
        %v1813 = vcvt.s32.f32 %v1557
        %v1814 = vcvt.s32.f32 %v1558
        %v1815 = vcvt.s32.f32 %v1559
        %v1816 = vcvt.s32.f32 %v1560
        %v1817 = vcvt.s32.f32 %v1561
        %v1818 = vcvt.s32.f32 %v1562
        %v1819 = vcvt.s32.f32 %v1563
        %v1820 = vcvt.s32.f32 %v1564
        %v1821 = vcvt.s32.f32 %v1565
        %v1822 = vcvt.s32.f32 %v1566
        %v1823 = vcvt.s32.f32 %v1567
        %v1824 = vcvt.s32.f32 %v1568
        %v1825 = vcvt.s32.f32 %v1569
        %v1826 = vcvt.s32.f32 %v1570
        %v1827 = vcvt.s32.f32 %v1571
        %v1828 = vcvt.s32.f32 %v1572
        %v1829 = vcvt.s32.f32 %v1573
        %v1830 = vcvt.s32.f32 %v1574
        %v1831 = vcvt.s32.f32 %v1575
        %v1832 = vcvt.s32.f32 %v1576
        %v1833 = vcvt.s32.f32 %v1577
        %v1834 = vcvt.s32.f32 %v1578
        %v1835 = vcvt.s32.f32 %v1579
        %v1836 = vcvt.s32.f32 %v1580
        %v1837 = vcvt.s32.f32 %v1581
        %v1838 = vcvt.s32.f32 %v1582
        %v1839 = vcvt.s32.f32 %v1583
        %v1840 = vcvt.s32.f32 %v1584
        %v1841 = vcvt.s32.f32 %v1585
        %v1842 = vcvt.s32.f32 %v1586
        %v1843 = vcvt.s32.f32 %v1587
        %v1844 = vcvt.s32.f32 %v1588
        %v1845 = vcvt.s32.f32 %v1589
        %v1846 = vcvt.s32.f32 %v1590
        %v1847 = vcvt.s32.f32 %v1591
        %v1848 = vcvt.s32.f32 %v1592
        %v1849 = vcvt.s32.f32 %v1593
        %v1850 = vcvt.s32.f32 %v1594
        %v1851 = vcvt.s32.f32 %v1595
        %v1852 = vcvt.s32.f32 %v1596
        %v1853 = vcvt.s32.f32 %v1597
        %v1854 = vcvt.s32.f32 %v1598
        %v1855 = vcvt.s32.f32 %v1599
        %v1856 = vcvt.s32.f32 %v1600
        %v1857 = vcvt.s32.f32 %v1601
        %v1858 = vcvt.s32.f32 %v1602
        %v1859 = vcvt.s32.f32 %v1603
        %v1860 = vcvt.s32.f32 %v1604
        %v1861 = vcvt.s32.f32 %v1605
        %v1862 = vcvt.s32.f32 %v1606
        %v1863 = vcvt.s32.f32 %v1607
        %v1864 = vcvt.s32.f32 %v1608
        %v1865 = vcvt.s32.f32 %v1609
        %v1866 = vcvt.s32.f32 %v1610
        %v1867 = vcvt.s32.f32 %v1611
        %v1868 = vcvt.s32.f32 %v1612
        %v1869 = vcvt.s32.f32 %v1613
        %v1870 = vcvt.s32.f32 %v1614
        %v1871 = vcvt.s32.f32 %v1615
        %v1872 = vcvt.s32.f32 %v1616
        %v1873 = vcvt.s32.f32 %v1617
        %v1874 = vcvt.s32.f32 %v1618
        %v1875 = vcvt.s32.f32 %v1619
        %v1876 = vcvt.s32.f32 %v1620
        %v1877 = vcvt.s32.f32 %v1621
        %v1878 = vcvt.s32.f32 %v1622
        %v1879 = vcvt.s32.f32 %v1623
        %v1880 = vcvt.s32.f32 %v1624
        %v1881 = vcvt.s32.f32 %v1625
        %v1882 = vcvt.s32.f32 %v1626
        %v1883 = vcvt.s32.f32 %v1627
        %v1884 = vcvt.s32.f32 %v1628
        %v1885 = vcvt.s32.f32 %v1629
        %v1886 = vcvt.s32.f32 %v1630
        %v1887 = vcvt.s32.f32 %v1631
        %v1888 = vcvt.s32.f32 %v1632
        %v1889 = vcvt.s32.f32 %v1633
        %v1890 = vcvt.s32.f32 %v1634
        %v1891 = vcvt.s32.f32 %v1635
        %v1892 = vcvt.s32.f32 %v1636
        %v1893 = vcvt.s32.f32 %v1637
        %v1894 = vcvt.s32.f32 %v1638
        %v1895 = vcvt.s32.f32 %v1639
        %v1896 = vcvt.s32.f32 %v1640
        %v1897 = vcvt.s32.f32 %v1641
        %v1898 = vcvt.s32.f32 %v1642
        %v1899 = vcvt.s32.f32 %v1643
        %v1900 = vcvt.s32.f32 %v1644
        %v1901 = vcvt.s32.f32 %v1645
        %v1902 = vcvt.s32.f32 %v1646
        %v1903 = vcvt.s32.f32 %v1647
        %v1904 = vcvt.s32.f32 %v1648
        %v1905 = vcvt.s32.f32 %v1649
        %v1906 = vcvt.s32.f32 %v1650
        %v1907 = vcvt.s32.f32 %v1651
        %v1908 = vcvt.s32.f32 %v1652
        %v1909 = vcvt.s32.f32 %v1653
        %v1910 = vcvt.s32.f32 %v1654
        %v1911 = vcvt.s32.f32 %v1655
        %v1912 = vcvt.s32.f32 %v1656
        %v1913 = vcvt.s32.f32 %v1657
        %v1914 = vcvt.s32.f32 %v1658
        %v1915 = vcvt.s32.f32 %v1659
        %v1916 = vcvt.s32.f32 %v1660
        %v1917 = vcvt.s32.f32 %v1661
        %v1918 = vcvt.s32.f32 %v1662
        %v1919 = vcvt.s32.f32 %v1663
        %v1920 = vcvt.s32.f32 %v1664
        %v1921 = vcvt.s32.f32 %v1665
        %v1922 = vcvt.s32.f32 %v1666
        %v1923 = vcvt.s32.f32 %v1667
        %v1924 = vcvt.s32.f32 %v1668
        %v1925 = vcvt.s32.f32 %v1669
        %v1926 = vcvt.s32.f32 %v1670
        %v1927 = vcvt.s32.f32 %v1671
        %v1928 = vcvt.s32.f32 %v1672
        %v1929 = vcvt.s32.f32 %v1673
        %v1930 = vcvt.s32.f32 %v1674
        %v1931 = vcvt.s32.f32 %v1675
        %v1932 = vcvt.s32.f32 %v1676
        %v1933 = vcvt.s32.f32 %v1677
        %v1934 = vcvt.s32.f32 %v1678
        %v1935 = vcvt.s32.f32 %v1679
        %v1936 = vcvt.s32.f32 %v1680
        %v1937 = vcvt.s32.f32 %v1681
        %v1938 = vcvt.s32.f32 %v1682
        %v1939 = vcvt.s32.f32 %v1683
        %v1940 = vcvt.s32.f32 %v1684
        %v1941 = vcvt.s32.f32 %v1685
        %v1942 = vcvt.s32.f32 %v1686
        %v1943 = vcvt.s32.f32 %v1687
        %v1944 = vcvt.s32.f32 %v1688
        %v1945 = vcvt.s32.f32 %v1689
        %v1946 = vcvt.s32.f32 %v1690
        %v1947 = vcvt.s32.f32 %v1691
        %v1948 = vcvt.s32.f32 %v1692
        %v1949 = vcvt.s32.f32 %v1693
        %v1950 = vcvt.s32.f32 %v1694
        %v1951 = vcvt.s32.f32 %v1695
        %v1952 = vcvt.s32.f32 %v1696
        %v1953 = vcvt.s32.f32 %v1697
        %v1954 = vcvt.s32.f32 %v1698
        %v1955 = vcvt.s32.f32 %v1699
        %v1956 = vcvt.s32.f32 %v1700
        %v1957 = vcvt.s32.f32 %v1701
        %v1958 = vcvt.s32.f32 %v1702
        %v1959 = vcvt.s32.f32 %v1703
        %v1960 = vcvt.s32.f32 %v1704
        %v1961 = vcvt.s32.f32 %v1705
        %v1962 = vcvt.s32.f32 %v1706
        %v1963 = vcvt.s32.f32 %v1707
        %v1964 = vcvt.s32.f32 %v1708
        %v1965 = vcvt.s32.f32 %v1709
        %v1966 = vcvt.s32.f32 %v1710
        %v1967 = vcvt.s32.f32 %v1711
        %v1968 = vcvt.s32.f32 %v1712
        %v1969 = vcvt.s32.f32 %v1713
        %v1970 = vcvt.s32.f32 %v1714
        %v1971 = vcvt.s32.f32 %v1715
        %v1972 = vcvt.s32.f32 %v1716
        %v1973 = vcvt.s32.f32 %v1717
        %v1974 = vcvt.s32.f32 %v1718
        %v1975 = vcvt.s32.f32 %v1719
        %v1976 = vcvt.s32.f32 %v1720
        %v1977 = vcvt.s32.f32 %v1721
        %v1978 = vcvt.s32.f32 %v1722
        %v1979 = vcvt.s32.f32 %v1723
        %v1980 = vcvt.s32.f32 %v1724
        %v1981 = vcvt.s32.f32 %v1725
        %v1982 = vcvt.s32.f32 %v1726
        %v1983 = vcvt.s32.f32 %v1727
        %v1984 = vcvt.s32.f32 %v1728
        %v1985 = vcvt.s32.f32 %v1729
        %v1986 = vcvt.s32.f32 %v1730
        %v1987 = vcvt.s32.f32 %v1731
        %v1988 = vcvt.s32.f32 %v1732
        %v1989 = vcvt.s32.f32 %v1733
        %v1990 = vcvt.s32.f32 %v1734
        %v1991 = vcvt.s32.f32 %v1735
        %v1992 = vcvt.s32.f32 %v1736
        %v1993 = vcvt.s32.f32 %v1737
        %v1994 = vcvt.s32.f32 %v1738
        %v1995 = vcvt.s32.f32 %v1739
        %v1996 = vcvt.s32.f32 %v1740
        %v1997 = vcvt.s32.f32 %v1741
        %v1998 = vcvt.s32.f32 %v1742
        %v1999 = vcvt.s32.f32 %v1743
        %v2000 = vcvt.s32.f32 %v1744
        %v2001 = vcvt.s32.f32 %v1745
        %v2002 = vcvt.s32.f32 %v1746
        %v2003 = vcvt.s32.f32 %v1747
        %v2004 = vcvt.s32.f32 %v1748
        %v2005 = vcvt.s32.f32 %v1749
        %v2006 = vcvt.s32.f32 %v1750
        %v2007 = vcvt.s32.f32 %v1751
        %v2008 = vcvt.s32.f32 %v1752
        %v2009 = vcvt.s32.f32 %v1753
        %v2010 = vcvt.s32.f32 %v1754
        %v2011 = vcvt.s32.f32 %v1755
        %v2012 = vcvt.s32.f32 %v1756
        %v2013 = vcvt.s32.f32 %v1757
        %v2014 = vcvt.s32.f32 %v1758
        %v2015 = vcvt.s32.f32 %v1759
        %v2016 = vcvt.s32.f32 %v1760
        %v2017 = vcvt.s32.f32 %v1761
        %v2018 = vcvt.s32.f32 %v1762
        %v2019 = vcvt.s32.f32 %v1763
        %v2020 = vcvt.s32.f32 %v1764
        %v2021 = vcvt.s32.f32 %v1765
        %v2022 = vcvt.s32.f32 %v1766
        %v2023 = vcvt.s32.f32 %v1767
        %v2024 = vcvt.s32.f32 %v1768
        %v2025 = vcvt.s32.f32 %v1769
        %v2026 = vcvt.s32.f32 %v1770
        %v2027 = vcvt.s32.f32 %v1771
        %v2028 = vcvt.s32.f32 %v1772
        %v2029 = vcvt.s32.f32 %v1773
        %v2030 = vcvt.s32.f32 %v1774
        %v2031 = vcvt.s32.f32 %v1775
        %v2032 = vcvt.s32.f32 %v1776
        %v2033 = vcvt.s32.f32 %v1777
        %v2034 = vcvt.s32.f32 %v1778
        %v2035 = vcvt.s32.f32 %v1779
        %v2036 = vcvt.s32.f32 %v1780
        %v2037 = vcvt.s32.f32 %v1781
        %v2038 = vcvt.s32.f32 %v1782
        %v2039 = vcvt.s32.f32 %v1783
        %v2040 = vcvt.s32.f32 %v1784
        %v2041 = vcvt.s32.f32 %v1785
        %v2042 = vcvt.s32.f32 %v1786
        %v2043 = vcvt.s32.f32 %v1787
        %v2044 = vcvt.s32.f32 %v1788
        %v2045 = vcvt.s32.f32 %v1789
        %v2046 = vld [vmem:[%s1] sm:$0xff]
        %v2047 = vld [vmem:[%s1 + $0x8] sm:$0xff]
        %v2048 = vld [vmem:[%s1 + $0x10] sm:$0xff]
        %v2049 = vld [vmem:[%s1 + $0x18] sm:$0xff]
        %v2050 = vld [vmem:[%s1 + $0x20] sm:$0xff]
        %v2051 = vld [vmem:[%s1 + $0x28] sm:$0xff]
        %v2052 = vld [vmem:[%s1 + $0x30] sm:$0xff]
        %v2053 = vld [vmem:[%s1 + $0x38] sm:$0xff]
        %v2054 = vld [vmem:[%s1 + $0x40] sm:$0xff]
        %v2055 = vld [vmem:[%s1 + $0x48] sm:$0xff]
        %v2056 = vld [vmem:[%s1 + $0x50] sm:$0xff]
        %v2057 = vld [vmem:[%s1 + $0x58] sm:$0xff]
        %v2058 = vld [vmem:[%s1 + $0x60] sm:$0xff]
        %v2059 = vld [vmem:[%s1 + $0x68] sm:$0xff]
        %v2060 = vld [vmem:[%s1 + $0x70] sm:$0xff]
        %v2061 = vld [vmem:[%s1 + $0x78] sm:$0xff]
        %2062 = vmatprep.subr.mxu0 0.0
        %2063 = vmatpush1.msra.mxu0 %v2061
        %2064 = vmatprep.subr.mxu0 0.0
        %2065 = vmatpush1.msra.mxu0 %v2060
        %2066 = vmatprep.subr.mxu0 0.0
        %2067 = vmatpush1.msra.mxu0 %v2059
        %2068 = vmatprep.subr.mxu0 0.0
        %2069 = vmatpush1.msra.mxu0 %v2058
        %2070 = vmatprep.subr.mxu0 0.0
        %2071 = vmatpush1.msra.mxu0 %v2057
        %2072 = vmatprep.subr.mxu0 0.0
        %2073 = vmatpush1.msra.mxu0 %v2056
        %2074 = vmatprep.subr.mxu0 0.0
        %2075 = vmatpush1.msra.mxu0 %v2055
        %2076 = vmatprep.subr.mxu0 0.0
        %2077 = vmatpush1.msra.mxu0 %v2054
        %2078 = vmatprep.subr.mxu0 0.0
        %2079 = vmatpush1.msra.mxu0 %v2053
        %2080 = vmatprep.subr.mxu0 0.0
        %2081 = vmatpush1.msra.mxu0 %v2052
        %2082 = vmatprep.subr.mxu0 0.0
        %2083 = vmatpush1.msra.mxu0 %v2051
        %2084 = vmatprep.subr.mxu0 0.0
        %2085 = vmatpush1.msra.mxu0 %v2050
        %2086 = vmatprep.subr.mxu0 0.0
        %2087 = vmatpush1.msra.mxu0 %v2049
        %2088 = vmatprep.subr.mxu0 0.0
        %2089 = vmatpush1.msra.mxu0 %v2048
        %2090 = vmatprep.subr.mxu0 0.0
        %2091 = vmatpush1.msra.mxu0 %v2047
        %2092 = vmatprep.subr.mxu0 0.0
        %2093 = vmatpush1.msra.mxu0 %v2046
        %2094 = vmatprep.subr.mxu0 0.0
        %2095 = vmatpush2.msra.mxu0 0.0
        %2096 = vmatprep.subr.mxu0 0.0
        %2097 = vmatpush2.msra.mxu0 0.0
        %2098 = vmatprep.subr.mxu0 0.0
        %2099 = vmatpush2.msra.mxu0 0.0
        %2100 = vmatprep.subr.mxu0 0.0
        %2101 = vmatpush2.msra.mxu0 0.0
        %2102 = vmatprep.subr.mxu0 0.0
        %2103 = vmatpush2.msra.mxu0 0.0
        %2104 = vmatprep.subr.mxu0 0.0
        %2105 = vmatpush2.msra.mxu0 0.0
        %2106 = vmatprep.subr.mxu0 0.0
        %2107 = vmatpush2.msra.mxu0 0.0
        %2108 = vmatprep.subr.mxu0 0.0
        %2109 = vmatpush2.msra.mxu0 0.0
        %2110 = vmatprep.subr.mxu0 0.0
        %2111 = vmatpush2.msra.mxu0 0.0
        %2112 = vmatprep.subr.mxu0 0.0
        %2113 = vmatpush2.msra.mxu0 0.0
        %2114 = vmatprep.subr.mxu0 0.0
        %2115 = vmatpush2.msra.mxu0 0.0
        %2116 = vmatprep.subr.mxu0 0.0
        %2117 = vmatpush2.msra.mxu0 0.0
        %2118 = vmatprep.subr.mxu0 0.0
        %2119 = vmatpush2.msra.mxu0 0.0
        %2120 = vmatprep.subr.mxu0 0.0
        %2121 = vmatpush2.msra.mxu0 0.0
        %2122 = vmatprep.subr.mxu0 0.0
        %2123 = vmatpush2.msra.mxu0 0.0
        %2124 = vmatprep.subr.mxu0 0.0
        %2125 = vmatpush2.msra.mxu0 0.0
        %2126 = vmatprep.mubr.f32.mxu0 0.0
        %2127 = vmatmul.mubr.f32.gmra.mxu0 %v1790
        %v2128 = vpop.f32.mrf.mxu0
        %v2129 = vadd.f32 0.0, %v2128
        %v2130 = vpop.f32.mrf.mxu0
        %2131 = vmatprep.mubr.f32.mxu0 0.0
        %2132 = vmatmul.mubr.f32.gmra.mxu0 %v1791
        %v2133 = vpop.f32.mrf.mxu0
        %v2134 = vadd.f32 0.0, %v2133
        %v2135 = vpop.f32.mrf.mxu0
        %2136 = vmatprep.mubr.f32.mxu0 0.0
        %2137 = vmatmul.mubr.f32.gmra.mxu0 %v1792
        %v2138 = vpop.f32.mrf.mxu0
        %v2139 = vadd.f32 0.0, %v2138
        %v2140 = vpop.f32.mrf.mxu0
        %2141 = vmatprep.mubr.f32.mxu0 0.0
        %2142 = vmatmul.mubr.f32.gmra.mxu0 %v1793
        %v2143 = vpop.f32.mrf.mxu0
        %v2144 = vadd.f32 0.0, %v2143
        %v2145 = vpop.f32.mrf.mxu0
        %2146 = vmatprep.mubr.f32.mxu0 0.0
        %2147 = vmatmul.mubr.f32.gmra.mxu0 %v1794
        %v2148 = vpop.f32.mrf.mxu0
        %v2149 = vadd.f32 0.0, %v2148
        %v2150 = vpop.f32.mrf.mxu0
        %2151 = vmatprep.mubr.f32.mxu0 0.0
        %2152 = vmatmul.mubr.f32.gmra.mxu0 %v1795
        %v2153 = vpop.f32.mrf.mxu0
        %v2154 = vadd.f32 0.0, %v2153
        %v2155 = vpop.f32.mrf.mxu0
        %2156 = vmatprep.mubr.f32.mxu0 0.0
        %2157 = vmatmul.mubr.f32.gmra.mxu0 %v1796
        %v2158 = vpop.f32.mrf.mxu0
        %v2159 = vadd.f32 0.0, %v2158
        %v2160 = vpop.f32.mrf.mxu0
        %2161 = vmatprep.mubr.f32.mxu0 0.0
        %2162 = vmatmul.mubr.f32.gmra.mxu0 %v1797
        %v2163 = vpop.f32.mrf.mxu0
        %v2164 = vadd.f32 0.0, %v2163
        %v2165 = vpop.f32.mrf.mxu0
        %2166 = vmatprep.mubr.f32.mxu0 0.0
        %2167 = vmatmul.mubr.f32.gmra.mxu0 %v1798
        %v2168 = vpop.f32.mrf.mxu0
        %v2169 = vadd.f32 0.0, %v2168
        %v2170 = vpop.f32.mrf.mxu0
        %2171 = vmatprep.mubr.f32.mxu0 0.0
        %2172 = vmatmul.mubr.f32.gmra.mxu0 %v1799
        %v2173 = vpop.f32.mrf.mxu0
        %v2174 = vadd.f32 0.0, %v2173
        %v2175 = vpop.f32.mrf.mxu0
        %2176 = vmatprep.mubr.f32.mxu0 0.0
        %2177 = vmatmul.mubr.f32.gmra.mxu0 %v1800
        %v2178 = vpop.f32.mrf.mxu0
        %v2179 = vadd.f32 0.0, %v2178
        %v2180 = vpop.f32.mrf.mxu0
        %2181 = vmatprep.mubr.f32.mxu0 0.0
        %2182 = vmatmul.mubr.f32.gmra.mxu0 %v1801
        %v2183 = vpop.f32.mrf.mxu0
        %v2184 = vadd.f32 0.0, %v2183
        %v2185 = vpop.f32.mrf.mxu0
        %2186 = vmatprep.mubr.f32.mxu0 0.0
        %2187 = vmatmul.mubr.f32.gmra.mxu0 %v1802
        %v2188 = vpop.f32.mrf.mxu0
        %v2189 = vadd.f32 0.0, %v2188
        %v2190 = vpop.f32.mrf.mxu0
        %2191 = vmatprep.mubr.f32.mxu0 0.0
        %2192 = vmatmul.mubr.f32.gmra.mxu0 %v1803
        %v2193 = vpop.f32.mrf.mxu0
        %v2194 = vadd.f32 0.0, %v2193
        %v2195 = vpop.f32.mrf.mxu0
        %2196 = vmatprep.mubr.f32.mxu0 0.0
        %2197 = vmatmul.mubr.f32.gmra.mxu0 %v1804
        %v2198 = vpop.f32.mrf.mxu0
        %v2199 = vadd.f32 0.0, %v2198
        %v2200 = vpop.f32.mrf.mxu0
        %2201 = vmatprep.mubr.f32.mxu0 0.0
        %2202 = vmatmul.mubr.f32.gmra.mxu0 %v1805
        %v2203 = vpop.f32.mrf.mxu0
        %v2204 = vadd.f32 0.0, %v2203
        %v2205 = vpop.f32.mrf.mxu0
        %2206 = vmatprep.mubr.f32.mxu0 0.0
        %2207 = vmatmul.mubr.f32.gmra.mxu0 %v1806
        %v2208 = vpop.f32.mrf.mxu0
        %v2209 = vadd.f32 0.0, %v2208
        %v2210 = vpop.f32.mrf.mxu0
        %2211 = vmatprep.mubr.f32.mxu0 0.0
        %2212 = vmatmul.mubr.f32.gmra.mxu0 %v1807
        %v2213 = vpop.f32.mrf.mxu0
        %v2214 = vadd.f32 0.0, %v2213
        %v2215 = vpop.f32.mrf.mxu0
        %2216 = vmatprep.mubr.f32.mxu0 0.0
        %2217 = vmatmul.mubr.f32.gmra.mxu0 %v1808
        %v2218 = vpop.f32.mrf.mxu0
        %v2219 = vadd.f32 0.0, %v2218
        %v2220 = vpop.f32.mrf.mxu0
        %2221 = vmatprep.mubr.f32.mxu0 0.0
        %2222 = vmatmul.mubr.f32.gmra.mxu0 %v1809
        %v2223 = vpop.f32.mrf.mxu0
        %v2224 = vadd.f32 0.0, %v2223
        %v2225 = vpop.f32.mrf.mxu0
        %2226 = vmatprep.mubr.f32.mxu0 0.0
        %2227 = vmatmul.mubr.f32.gmra.mxu0 %v1810
        %v2228 = vpop.f32.mrf.mxu0
        %v2229 = vadd.f32 0.0, %v2228
        %v2230 = vpop.f32.mrf.mxu0
        %2231 = vmatprep.mubr.f32.mxu0 0.0
        %2232 = vmatmul.mubr.f32.gmra.mxu0 %v1811
        %v2233 = vpop.f32.mrf.mxu0
        %v2234 = vadd.f32 0.0, %v2233
        %v2235 = vpop.f32.mrf.mxu0
        %2236 = vmatprep.mubr.f32.mxu0 0.0
        %2237 = vmatmul.mubr.f32.gmra.mxu0 %v1812
        %v2238 = vpop.f32.mrf.mxu0
        %v2239 = vadd.f32 0.0, %v2238
        %v2240 = vpop.f32.mrf.mxu0
        %2241 = vmatprep.mubr.f32.mxu0 0.0
        %2242 = vmatmul.mubr.f32.gmra.mxu0 %v1813
        %v2243 = vpop.f32.mrf.mxu0
        %v2244 = vadd.f32 0.0, %v2243
        %v2245 = vpop.f32.mrf.mxu0
        %2246 = vmatprep.mubr.f32.mxu0 0.0
        %2247 = vmatmul.mubr.f32.gmra.mxu0 %v1814
        %v2248 = vpop.f32.mrf.mxu0
        %v2249 = vadd.f32 0.0, %v2248
        %v2250 = vpop.f32.mrf.mxu0
        %2251 = vmatprep.mubr.f32.mxu0 0.0
        %2252 = vmatmul.mubr.f32.gmra.mxu0 %v1815
        %v2253 = vpop.f32.mrf.mxu0
        %v2254 = vadd.f32 0.0, %v2253
        %v2255 = vpop.f32.mrf.mxu0
        %2256 = vmatprep.mubr.f32.mxu0 0.0
        %2257 = vmatmul.mubr.f32.gmra.mxu0 %v1816
        %v2258 = vpop.f32.mrf.mxu0
        %v2259 = vadd.f32 0.0, %v2258
        %v2260 = vpop.f32.mrf.mxu0
        %2261 = vmatprep.mubr.f32.mxu0 0.0
        %2262 = vmatmul.mubr.f32.gmra.mxu0 %v1817
        %v2263 = vpop.f32.mrf.mxu0
        %v2264 = vadd.f32 0.0, %v2263
        %v2265 = vpop.f32.mrf.mxu0
        %2266 = vmatprep.mubr.f32.mxu0 0.0
        %2267 = vmatmul.mubr.f32.gmra.mxu0 %v1818
        %v2268 = vpop.f32.mrf.mxu0
        %v2269 = vadd.f32 0.0, %v2268
        %v2270 = vpop.f32.mrf.mxu0
        %2271 = vmatprep.mubr.f32.mxu0 0.0
        %2272 = vmatmul.mubr.f32.gmra.mxu0 %v1819
        %v2273 = vpop.f32.mrf.mxu0
        %v2274 = vadd.f32 0.0, %v2273
        %v2275 = vpop.f32.mrf.mxu0
        %2276 = vmatprep.mubr.f32.mxu0 0.0
        %2277 = vmatmul.mubr.f32.gmra.mxu0 %v1820
        %v2278 = vpop.f32.mrf.mxu0
        %v2279 = vadd.f32 0.0, %v2278
        %v2280 = vpop.f32.mrf.mxu0
        %2281 = vmatprep.mubr.f32.mxu0 0.0
        %2282 = vmatmul.mubr.f32.gmra.mxu0 %v1821
        %v2283 = vpop.f32.mrf.mxu0
        %v2284 = vadd.f32 0.0, %v2283
        %v2285 = vpop.f32.mrf.mxu0
        %2286 = vmatprep.mubr.f32.mxu0 0.0
        %2287 = vmatmul.mubr.f32.gmra.mxu0 %v1822
        %v2288 = vpop.f32.mrf.mxu0
        %v2289 = vadd.f32 0.0, %v2288
        %v2290 = vpop.f32.mrf.mxu0
        %2291 = vmatprep.mubr.f32.mxu0 0.0
        %2292 = vmatmul.mubr.f32.gmra.mxu0 %v1823
        %v2293 = vpop.f32.mrf.mxu0
        %v2294 = vadd.f32 0.0, %v2293
        %v2295 = vpop.f32.mrf.mxu0
        %2296 = vmatprep.mubr.f32.mxu0 0.0
        %2297 = vmatmul.mubr.f32.gmra.mxu0 %v1824
        %v2298 = vpop.f32.mrf.mxu0
        %v2299 = vadd.f32 0.0, %v2298
        %v2300 = vpop.f32.mrf.mxu0
        %2301 = vmatprep.mubr.f32.mxu0 0.0
        %2302 = vmatmul.mubr.f32.gmra.mxu0 %v1825
        %v2303 = vpop.f32.mrf.mxu0
        %v2304 = vadd.f32 0.0, %v2303
        %v2305 = vpop.f32.mrf.mxu0
        %2306 = vmatprep.mubr.f32.mxu0 0.0
        %2307 = vmatmul.mubr.f32.gmra.mxu0 %v1826
        %v2308 = vpop.f32.mrf.mxu0
        %v2309 = vadd.f32 0.0, %v2308
        %v2310 = vpop.f32.mrf.mxu0
        %2311 = vmatprep.mubr.f32.mxu0 0.0
        %2312 = vmatmul.mubr.f32.gmra.mxu0 %v1827
        %v2313 = vpop.f32.mrf.mxu0
        %v2314 = vadd.f32 0.0, %v2313
        %v2315 = vpop.f32.mrf.mxu0
        %2316 = vmatprep.mubr.f32.mxu0 0.0
        %2317 = vmatmul.mubr.f32.gmra.mxu0 %v1828
        %v2318 = vpop.f32.mrf.mxu0
        %v2319 = vadd.f32 0.0, %v2318
        %v2320 = vpop.f32.mrf.mxu0
        %2321 = vmatprep.mubr.f32.mxu0 0.0
        %2322 = vmatmul.mubr.f32.gmra.mxu0 %v1829
        %v2323 = vpop.f32.mrf.mxu0
        %v2324 = vadd.f32 0.0, %v2323
        %v2325 = vpop.f32.mrf.mxu0
        %2326 = vmatprep.mubr.f32.mxu0 0.0
        %2327 = vmatmul.mubr.f32.gmra.mxu0 %v1830
        %v2328 = vpop.f32.mrf.mxu0
        %v2329 = vadd.f32 0.0, %v2328
        %v2330 = vpop.f32.mrf.mxu0
        %2331 = vmatprep.mubr.f32.mxu0 0.0
        %2332 = vmatmul.mubr.f32.gmra.mxu0 %v1831
        %v2333 = vpop.f32.mrf.mxu0
        %v2334 = vadd.f32 0.0, %v2333
        %v2335 = vpop.f32.mrf.mxu0
        %2336 = vmatprep.mubr.f32.mxu0 0.0
        %2337 = vmatmul.mubr.f32.gmra.mxu0 %v1832
        %v2338 = vpop.f32.mrf.mxu0
        %v2339 = vadd.f32 0.0, %v2338
        %v2340 = vpop.f32.mrf.mxu0
        %2341 = vmatprep.mubr.f32.mxu0 0.0
        %2342 = vmatmul.mubr.f32.gmra.mxu0 %v1833
        %v2343 = vpop.f32.mrf.mxu0
        %v2344 = vadd.f32 0.0, %v2343
        %v2345 = vpop.f32.mrf.mxu0
        %2346 = vmatprep.mubr.f32.mxu0 0.0
        %2347 = vmatmul.mubr.f32.gmra.mxu0 %v1834
        %v2348 = vpop.f32.mrf.mxu0
        %v2349 = vadd.f32 0.0, %v2348
        %v2350 = vpop.f32.mrf.mxu0
        %2351 = vmatprep.mubr.f32.mxu0 0.0
        %2352 = vmatmul.mubr.f32.gmra.mxu0 %v1835
        %v2353 = vpop.f32.mrf.mxu0
        %v2354 = vadd.f32 0.0, %v2353
        %v2355 = vpop.f32.mrf.mxu0
        %2356 = vmatprep.mubr.f32.mxu0 0.0
        %2357 = vmatmul.mubr.f32.gmra.mxu0 %v1836
        %v2358 = vpop.f32.mrf.mxu0
        %v2359 = vadd.f32 0.0, %v2358
        %v2360 = vpop.f32.mrf.mxu0
        %2361 = vmatprep.mubr.f32.mxu0 0.0
        %2362 = vmatmul.mubr.f32.gmra.mxu0 %v1837
        %v2363 = vpop.f32.mrf.mxu0
        %v2364 = vadd.f32 0.0, %v2363
        %v2365 = vpop.f32.mrf.mxu0
        %2366 = vmatprep.mubr.f32.mxu0 0.0
        %2367 = vmatmul.mubr.f32.gmra.mxu0 %v1838
        %v2368 = vpop.f32.mrf.mxu0
        %v2369 = vadd.f32 0.0, %v2368
        %v2370 = vpop.f32.mrf.mxu0
        %2371 = vmatprep.mubr.f32.mxu0 0.0
        %2372 = vmatmul.mubr.f32.gmra.mxu0 %v1839
        %v2373 = vpop.f32.mrf.mxu0
        %v2374 = vadd.f32 0.0, %v2373
        %v2375 = vpop.f32.mrf.mxu0
        %2376 = vmatprep.mubr.f32.mxu0 0.0
        %2377 = vmatmul.mubr.f32.gmra.mxu0 %v1840
        %v2378 = vpop.f32.mrf.mxu0
        %v2379 = vadd.f32 0.0, %v2378
        %v2380 = vpop.f32.mrf.mxu0
        %2381 = vmatprep.mubr.f32.mxu0 0.0
        %2382 = vmatmul.mubr.f32.gmra.mxu0 %v1841
        %v2383 = vpop.f32.mrf.mxu0
        %v2384 = vadd.f32 0.0, %v2383
        %v2385 = vpop.f32.mrf.mxu0
        %2386 = vmatprep.mubr.f32.mxu0 0.0
        %2387 = vmatmul.mubr.f32.gmra.mxu0 %v1842
        %v2388 = vpop.f32.mrf.mxu0
        %v2389 = vadd.f32 0.0, %v2388
        %v2390 = vpop.f32.mrf.mxu0
        %2391 = vmatprep.mubr.f32.mxu0 0.0
        %2392 = vmatmul.mubr.f32.gmra.mxu0 %v1843
        %v2393 = vpop.f32.mrf.mxu0
        %v2394 = vadd.f32 0.0, %v2393
        %v2395 = vpop.f32.mrf.mxu0
        %2396 = vmatprep.mubr.f32.mxu0 0.0
        %2397 = vmatmul.mubr.f32.gmra.mxu0 %v1844
        %v2398 = vpop.f32.mrf.mxu0
        %v2399 = vadd.f32 0.0, %v2398
        %v2400 = vpop.f32.mrf.mxu0
        %2401 = vmatprep.mubr.f32.mxu0 0.0
        %2402 = vmatmul.mubr.f32.gmra.mxu0 %v1845
        %v2403 = vpop.f32.mrf.mxu0
        %v2404 = vadd.f32 0.0, %v2403
        %v2405 = vpop.f32.mrf.mxu0
        %2406 = vmatprep.mubr.f32.mxu0 0.0
        %2407 = vmatmul.mubr.f32.gmra.mxu0 %v1846
        %v2408 = vpop.f32.mrf.mxu0
        %v2409 = vadd.f32 0.0, %v2408
        %v2410 = vpop.f32.mrf.mxu0
        %2411 = vmatprep.mubr.f32.mxu0 0.0
        %2412 = vmatmul.mubr.f32.gmra.mxu0 %v1847
        %v2413 = vpop.f32.mrf.mxu0
        %v2414 = vadd.f32 0.0, %v2413
        %v2415 = vpop.f32.mrf.mxu0
        %2416 = vmatprep.mubr.f32.mxu0 0.0
        %2417 = vmatmul.mubr.f32.gmra.mxu0 %v1848
        %v2418 = vpop.f32.mrf.mxu0
        %v2419 = vadd.f32 0.0, %v2418
        %v2420 = vpop.f32.mrf.mxu0
        %2421 = vmatprep.mubr.f32.mxu0 0.0
        %2422 = vmatmul.mubr.f32.gmra.mxu0 %v1849
        %v2423 = vpop.f32.mrf.mxu0
        %v2424 = vadd.f32 0.0, %v2423
        %v2425 = vpop.f32.mrf.mxu0
        %2426 = vmatprep.mubr.f32.mxu0 0.0
        %2427 = vmatmul.mubr.f32.gmra.mxu0 %v1850
        %v2428 = vpop.f32.mrf.mxu0
        %v2429 = vadd.f32 0.0, %v2428
        %v2430 = vpop.f32.mrf.mxu0
        %2431 = vmatprep.mubr.f32.mxu0 0.0
        %2432 = vmatmul.mubr.f32.gmra.mxu0 %v1851
        %v2433 = vpop.f32.mrf.mxu0
        %v2434 = vadd.f32 0.0, %v2433
        %v2435 = vpop.f32.mrf.mxu0
        %2436 = vmatprep.mubr.f32.mxu0 0.0
        %2437 = vmatmul.mubr.f32.gmra.mxu0 %v1852
        %v2438 = vpop.f32.mrf.mxu0
        %v2439 = vadd.f32 0.0, %v2438
        %v2440 = vpop.f32.mrf.mxu0
        %2441 = vmatprep.mubr.f32.mxu0 0.0
        %2442 = vmatmul.mubr.f32.gmra.mxu0 %v1853
        %v2443 = vpop.f32.mrf.mxu0
        %v2444 = vadd.f32 0.0, %v2443
        %v2445 = vpop.f32.mrf.mxu0
        %2446 = vmatprep.mubr.f32.mxu0 0.0
        %2447 = vmatmul.mubr.f32.gmra.mxu0 %v1854
        %v2448 = vpop.f32.mrf.mxu0
        %v2449 = vadd.f32 0.0, %v2448
        %v2450 = vpop.f32.mrf.mxu0
        %2451 = vmatprep.mubr.f32.mxu0 0.0
        %2452 = vmatmul.mubr.f32.gmra.mxu0 %v1855
        %v2453 = vpop.f32.mrf.mxu0
        %v2454 = vadd.f32 0.0, %v2453
        %v2455 = vpop.f32.mrf.mxu0
        %2456 = vmatprep.mubr.f32.mxu0 0.0
        %2457 = vmatmul.mubr.f32.gmra.mxu0 %v1856
        %v2458 = vpop.f32.mrf.mxu0
        %v2459 = vadd.f32 0.0, %v2458
        %v2460 = vpop.f32.mrf.mxu0
        %2461 = vmatprep.mubr.f32.mxu0 0.0
        %2462 = vmatmul.mubr.f32.gmra.mxu0 %v1857
        %v2463 = vpop.f32.mrf.mxu0
        %v2464 = vadd.f32 0.0, %v2463
        %v2465 = vpop.f32.mrf.mxu0
        %2466 = vmatprep.mubr.f32.mxu0 0.0
        %2467 = vmatmul.mubr.f32.gmra.mxu0 %v1858
        %v2468 = vpop.f32.mrf.mxu0
        %v2469 = vadd.f32 0.0, %v2468
        %v2470 = vpop.f32.mrf.mxu0
        %2471 = vmatprep.mubr.f32.mxu0 0.0
        %2472 = vmatmul.mubr.f32.gmra.mxu0 %v1859
        %v2473 = vpop.f32.mrf.mxu0
        %v2474 = vadd.f32 0.0, %v2473
        %v2475 = vpop.f32.mrf.mxu0
        %2476 = vmatprep.mubr.f32.mxu0 0.0
        %2477 = vmatmul.mubr.f32.gmra.mxu0 %v1860
        %v2478 = vpop.f32.mrf.mxu0
        %v2479 = vadd.f32 0.0, %v2478
        %v2480 = vpop.f32.mrf.mxu0
        %2481 = vmatprep.mubr.f32.mxu0 0.0
        %2482 = vmatmul.mubr.f32.gmra.mxu0 %v1861
        %v2483 = vpop.f32.mrf.mxu0
        %v2484 = vadd.f32 0.0, %v2483
        %v2485 = vpop.f32.mrf.mxu0
        %2486 = vmatprep.mubr.f32.mxu0 0.0
        %2487 = vmatmul.mubr.f32.gmra.mxu0 %v1862
        %v2488 = vpop.f32.mrf.mxu0
        %v2489 = vadd.f32 0.0, %v2488
        %v2490 = vpop.f32.mrf.mxu0
        %2491 = vmatprep.mubr.f32.mxu0 0.0
        %2492 = vmatmul.mubr.f32.gmra.mxu0 %v1863
        %v2493 = vpop.f32.mrf.mxu0
        %v2494 = vadd.f32 0.0, %v2493
        %v2495 = vpop.f32.mrf.mxu0
        %2496 = vmatprep.mubr.f32.mxu0 0.0
        %2497 = vmatmul.mubr.f32.gmra.mxu0 %v1864
        %v2498 = vpop.f32.mrf.mxu0
        %v2499 = vadd.f32 0.0, %v2498
        %v2500 = vpop.f32.mrf.mxu0
        %2501 = vmatprep.mubr.f32.mxu0 0.0
        %2502 = vmatmul.mubr.f32.gmra.mxu0 %v1865
        %v2503 = vpop.f32.mrf.mxu0
        %v2504 = vadd.f32 0.0, %v2503
        %v2505 = vpop.f32.mrf.mxu0
        %2506 = vmatprep.mubr.f32.mxu0 0.0
        %2507 = vmatmul.mubr.f32.gmra.mxu0 %v1866
        %v2508 = vpop.f32.mrf.mxu0
        %v2509 = vadd.f32 0.0, %v2508
        %v2510 = vpop.f32.mrf.mxu0
        %2511 = vmatprep.mubr.f32.mxu0 0.0
        %2512 = vmatmul.mubr.f32.gmra.mxu0 %v1867
        %v2513 = vpop.f32.mrf.mxu0
        %v2514 = vadd.f32 0.0, %v2513
        %v2515 = vpop.f32.mrf.mxu0
        %2516 = vmatprep.mubr.f32.mxu0 0.0
        %2517 = vmatmul.mubr.f32.gmra.mxu0 %v1868
        %v2518 = vpop.f32.mrf.mxu0
        %v2519 = vadd.f32 0.0, %v2518
        %v2520 = vpop.f32.mrf.mxu0
        %2521 = vmatprep.mubr.f32.mxu0 0.0
        %2522 = vmatmul.mubr.f32.gmra.mxu0 %v1869
        %v2523 = vpop.f32.mrf.mxu0
        %v2524 = vadd.f32 0.0, %v2523
        %v2525 = vpop.f32.mrf.mxu0
        %2526 = vmatprep.mubr.f32.mxu0 0.0
        %2527 = vmatmul.mubr.f32.gmra.mxu0 %v1870
        %v2528 = vpop.f32.mrf.mxu0
        %v2529 = vadd.f32 0.0, %v2528
        %v2530 = vpop.f32.mrf.mxu0
        %2531 = vmatprep.mubr.f32.mxu0 0.0
        %2532 = vmatmul.mubr.f32.gmra.mxu0 %v1871
        %v2533 = vpop.f32.mrf.mxu0
        %v2534 = vadd.f32 0.0, %v2533
        %v2535 = vpop.f32.mrf.mxu0
        %2536 = vmatprep.mubr.f32.mxu0 0.0
        %2537 = vmatmul.mubr.f32.gmra.mxu0 %v1872
        %v2538 = vpop.f32.mrf.mxu0
        %v2539 = vadd.f32 0.0, %v2538
        %v2540 = vpop.f32.mrf.mxu0
        %2541 = vmatprep.mubr.f32.mxu0 0.0
        %2542 = vmatmul.mubr.f32.gmra.mxu0 %v1873
        %v2543 = vpop.f32.mrf.mxu0
        %v2544 = vadd.f32 0.0, %v2543
        %v2545 = vpop.f32.mrf.mxu0
        %2546 = vmatprep.mubr.f32.mxu0 0.0
        %2547 = vmatmul.mubr.f32.gmra.mxu0 %v1874
        %v2548 = vpop.f32.mrf.mxu0
        %v2549 = vadd.f32 0.0, %v2548
        %v2550 = vpop.f32.mrf.mxu0
        %2551 = vmatprep.mubr.f32.mxu0 0.0
        %2552 = vmatmul.mubr.f32.gmra.mxu0 %v1875
        %v2553 = vpop.f32.mrf.mxu0
        %v2554 = vadd.f32 0.0, %v2553
        %v2555 = vpop.f32.mrf.mxu0
        %2556 = vmatprep.mubr.f32.mxu0 0.0
        %2557 = vmatmul.mubr.f32.gmra.mxu0 %v1876
        %v2558 = vpop.f32.mrf.mxu0
        %v2559 = vadd.f32 0.0, %v2558
        %v2560 = vpop.f32.mrf.mxu0
        %2561 = vmatprep.mubr.f32.mxu0 0.0
        %2562 = vmatmul.mubr.f32.gmra.mxu0 %v1877
        %v2563 = vpop.f32.mrf.mxu0
        %v2564 = vadd.f32 0.0, %v2563
        %v2565 = vpop.f32.mrf.mxu0
        %2566 = vmatprep.mubr.f32.mxu0 0.0
        %2567 = vmatmul.mubr.f32.gmra.mxu0 %v1878
        %v2568 = vpop.f32.mrf.mxu0
        %v2569 = vadd.f32 0.0, %v2568
        %v2570 = vpop.f32.mrf.mxu0
        %2571 = vmatprep.mubr.f32.mxu0 0.0
        %2572 = vmatmul.mubr.f32.gmra.mxu0 %v1879
        %v2573 = vpop.f32.mrf.mxu0
        %v2574 = vadd.f32 0.0, %v2573
        %v2575 = vpop.f32.mrf.mxu0
        %2576 = vmatprep.mubr.f32.mxu0 0.0
        %2577 = vmatmul.mubr.f32.gmra.mxu0 %v1880
        %v2578 = vpop.f32.mrf.mxu0
        %v2579 = vadd.f32 0.0, %v2578
        %v2580 = vpop.f32.mrf.mxu0
        %2581 = vmatprep.mubr.f32.mxu0 0.0
        %2582 = vmatmul.mubr.f32.gmra.mxu0 %v1881
        %v2583 = vpop.f32.mrf.mxu0
        %v2584 = vadd.f32 0.0, %v2583
        %v2585 = vpop.f32.mrf.mxu0
        %2586 = vmatprep.mubr.f32.mxu0 0.0
        %2587 = vmatmul.mubr.f32.gmra.mxu0 %v1882
        %v2588 = vpop.f32.mrf.mxu0
        %v2589 = vadd.f32 0.0, %v2588
        %v2590 = vpop.f32.mrf.mxu0
        %2591 = vmatprep.mubr.f32.mxu0 0.0
        %2592 = vmatmul.mubr.f32.gmra.mxu0 %v1883
        %v2593 = vpop.f32.mrf.mxu0
        %v2594 = vadd.f32 0.0, %v2593
        %v2595 = vpop.f32.mrf.mxu0
        %2596 = vmatprep.mubr.f32.mxu0 0.0
        %2597 = vmatmul.mubr.f32.gmra.mxu0 %v1884
        %v2598 = vpop.f32.mrf.mxu0
        %v2599 = vadd.f32 0.0, %v2598
        %v2600 = vpop.f32.mrf.mxu0
        %2601 = vmatprep.mubr.f32.mxu0 0.0
        %2602 = vmatmul.mubr.f32.gmra.mxu0 %v1885
        %v2603 = vpop.f32.mrf.mxu0
        %v2604 = vadd.f32 0.0, %v2603
        %v2605 = vpop.f32.mrf.mxu0
        %2606 = vmatprep.mubr.f32.mxu0 0.0
        %2607 = vmatmul.mubr.f32.gmra.mxu0 %v1886
        %v2608 = vpop.f32.mrf.mxu0
        %v2609 = vadd.f32 0.0, %v2608
        %v2610 = vpop.f32.mrf.mxu0
        %2611 = vmatprep.mubr.f32.mxu0 0.0
        %2612 = vmatmul.mubr.f32.gmra.mxu0 %v1887
        %v2613 = vpop.f32.mrf.mxu0
        %v2614 = vadd.f32 0.0, %v2613
        %v2615 = vpop.f32.mrf.mxu0
        %2616 = vmatprep.mubr.f32.mxu0 0.0
        %2617 = vmatmul.mubr.f32.gmra.mxu0 %v1888
        %v2618 = vpop.f32.mrf.mxu0
        %v2619 = vadd.f32 0.0, %v2618
        %v2620 = vpop.f32.mrf.mxu0
        %2621 = vmatprep.mubr.f32.mxu0 0.0
        %2622 = vmatmul.mubr.f32.gmra.mxu0 %v1889
        %v2623 = vpop.f32.mrf.mxu0
        %v2624 = vadd.f32 0.0, %v2623
        %v2625 = vpop.f32.mrf.mxu0
        %2626 = vmatprep.mubr.f32.mxu0 0.0
        %2627 = vmatmul.mubr.f32.gmra.mxu0 %v1890
        %v2628 = vpop.f32.mrf.mxu0
        %v2629 = vadd.f32 0.0, %v2628
        %v2630 = vpop.f32.mrf.mxu0
        %2631 = vmatprep.mubr.f32.mxu0 0.0
        %2632 = vmatmul.mubr.f32.gmra.mxu0 %v1891
        %v2633 = vpop.f32.mrf.mxu0
        %v2634 = vadd.f32 0.0, %v2633
        %v2635 = vpop.f32.mrf.mxu0
        %2636 = vmatprep.mubr.f32.mxu0 0.0
        %2637 = vmatmul.mubr.f32.gmra.mxu0 %v1892
        %v2638 = vpop.f32.mrf.mxu0
        %v2639 = vadd.f32 0.0, %v2638
        %v2640 = vpop.f32.mrf.mxu0
        %2641 = vmatprep.mubr.f32.mxu0 0.0
        %2642 = vmatmul.mubr.f32.gmra.mxu0 %v1893
        %v2643 = vpop.f32.mrf.mxu0
        %v2644 = vadd.f32 0.0, %v2643
        %v2645 = vpop.f32.mrf.mxu0
        %2646 = vmatprep.mubr.f32.mxu0 0.0
        %2647 = vmatmul.mubr.f32.gmra.mxu0 %v1894
        %v2648 = vpop.f32.mrf.mxu0
        %v2649 = vadd.f32 0.0, %v2648
        %v2650 = vpop.f32.mrf.mxu0
        %2651 = vmatprep.mubr.f32.mxu0 0.0
        %2652 = vmatmul.mubr.f32.gmra.mxu0 %v1895
        %v2653 = vpop.f32.mrf.mxu0
        %v2654 = vadd.f32 0.0, %v2653
        %v2655 = vpop.f32.mrf.mxu0
        %2656 = vmatprep.mubr.f32.mxu0 0.0
        %2657 = vmatmul.mubr.f32.gmra.mxu0 %v1896
        %v2658 = vpop.f32.mrf.mxu0
        %v2659 = vadd.f32 0.0, %v2658
        %v2660 = vpop.f32.mrf.mxu0
        %2661 = vmatprep.mubr.f32.mxu0 0.0
        %2662 = vmatmul.mubr.f32.gmra.mxu0 %v1897
        %v2663 = vpop.f32.mrf.mxu0
        %v2664 = vadd.f32 0.0, %v2663
        %v2665 = vpop.f32.mrf.mxu0
        %2666 = vmatprep.mubr.f32.mxu0 0.0
        %2667 = vmatmul.mubr.f32.gmra.mxu0 %v1898
        %v2668 = vpop.f32.mrf.mxu0
        %v2669 = vadd.f32 0.0, %v2668
        %v2670 = vpop.f32.mrf.mxu0
        %2671 = vmatprep.mubr.f32.mxu0 0.0
        %2672 = vmatmul.mubr.f32.gmra.mxu0 %v1899
        %v2673 = vpop.f32.mrf.mxu0
        %v2674 = vadd.f32 0.0, %v2673
        %v2675 = vpop.f32.mrf.mxu0
        %2676 = vmatprep.mubr.f32.mxu0 0.0
        %2677 = vmatmul.mubr.f32.gmra.mxu0 %v1900
        %v2678 = vpop.f32.mrf.mxu0
        %v2679 = vadd.f32 0.0, %v2678
        %v2680 = vpop.f32.mrf.mxu0
        %2681 = vmatprep.mubr.f32.mxu0 0.0
        %2682 = vmatmul.mubr.f32.gmra.mxu0 %v1901
        %v2683 = vpop.f32.mrf.mxu0
        %v2684 = vadd.f32 0.0, %v2683
        %v2685 = vpop.f32.mrf.mxu0
        %2686 = vmatprep.mubr.f32.mxu0 0.0
        %2687 = vmatmul.mubr.f32.gmra.mxu0 %v1902
        %v2688 = vpop.f32.mrf.mxu0
        %v2689 = vadd.f32 0.0, %v2688
        %v2690 = vpop.f32.mrf.mxu0
        %2691 = vmatprep.mubr.f32.mxu0 0.0
        %2692 = vmatmul.mubr.f32.gmra.mxu0 %v1903
        %v2693 = vpop.f32.mrf.mxu0
        %v2694 = vadd.f32 0.0, %v2693
        %v2695 = vpop.f32.mrf.mxu0
        %2696 = vmatprep.mubr.f32.mxu0 0.0
        %2697 = vmatmul.mubr.f32.gmra.mxu0 %v1904
        %v2698 = vpop.f32.mrf.mxu0
        %v2699 = vadd.f32 0.0, %v2698
        %v2700 = vpop.f32.mrf.mxu0
        %2701 = vmatprep.mubr.f32.mxu0 0.0
        %2702 = vmatmul.mubr.f32.gmra.mxu0 %v1905
        %v2703 = vpop.f32.mrf.mxu0
        %v2704 = vadd.f32 0.0, %v2703
        %v2705 = vpop.f32.mrf.mxu0
        %2706 = vmatprep.mubr.f32.mxu0 0.0
        %2707 = vmatmul.mubr.f32.gmra.mxu0 %v1906
        %v2708 = vpop.f32.mrf.mxu0
        %v2709 = vadd.f32 0.0, %v2708
        %v2710 = vpop.f32.mrf.mxu0
        %2711 = vmatprep.mubr.f32.mxu0 0.0
        %2712 = vmatmul.mubr.f32.gmra.mxu0 %v1907
        %v2713 = vpop.f32.mrf.mxu0
        %v2714 = vadd.f32 0.0, %v2713
        %v2715 = vpop.f32.mrf.mxu0
        %2716 = vmatprep.mubr.f32.mxu0 0.0
        %2717 = vmatmul.mubr.f32.gmra.mxu0 %v1908
        %v2718 = vpop.f32.mrf.mxu0
        %v2719 = vadd.f32 0.0, %v2718
        %v2720 = vpop.f32.mrf.mxu0
        %2721 = vmatprep.mubr.f32.mxu0 0.0
        %2722 = vmatmul.mubr.f32.gmra.mxu0 %v1909
        %v2723 = vpop.f32.mrf.mxu0
        %v2724 = vadd.f32 0.0, %v2723
        %v2725 = vpop.f32.mrf.mxu0
        %2726 = vmatprep.mubr.f32.mxu0 0.0
        %2727 = vmatmul.mubr.f32.gmra.mxu0 %v1910
        %v2728 = vpop.f32.mrf.mxu0
        %v2729 = vadd.f32 0.0, %v2728
        %v2730 = vpop.f32.mrf.mxu0
        %2731 = vmatprep.mubr.f32.mxu0 0.0
        %2732 = vmatmul.mubr.f32.gmra.mxu0 %v1911
        %v2733 = vpop.f32.mrf.mxu0
        %v2734 = vadd.f32 0.0, %v2733
        %v2735 = vpop.f32.mrf.mxu0
        %2736 = vmatprep.mubr.f32.mxu0 0.0
        %2737 = vmatmul.mubr.f32.gmra.mxu0 %v1912
        %v2738 = vpop.f32.mrf.mxu0
        %v2739 = vadd.f32 0.0, %v2738
        %v2740 = vpop.f32.mrf.mxu0
        %2741 = vmatprep.mubr.f32.mxu0 0.0
        %2742 = vmatmul.mubr.f32.gmra.mxu0 %v1913
        %v2743 = vpop.f32.mrf.mxu0
        %v2744 = vadd.f32 0.0, %v2743
        %v2745 = vpop.f32.mrf.mxu0
        %2746 = vmatprep.mubr.f32.mxu0 0.0
        %2747 = vmatmul.mubr.f32.gmra.mxu0 %v1914
        %v2748 = vpop.f32.mrf.mxu0
        %v2749 = vadd.f32 0.0, %v2748
        %v2750 = vpop.f32.mrf.mxu0
        %2751 = vmatprep.mubr.f32.mxu0 0.0
        %2752 = vmatmul.mubr.f32.gmra.mxu0 %v1915
        %v2753 = vpop.f32.mrf.mxu0
        %v2754 = vadd.f32 0.0, %v2753
        %v2755 = vpop.f32.mrf.mxu0
        %2756 = vmatprep.mubr.f32.mxu0 0.0
        %2757 = vmatmul.mubr.f32.gmra.mxu0 %v1916
        %v2758 = vpop.f32.mrf.mxu0
        %v2759 = vadd.f32 0.0, %v2758
        %v2760 = vpop.f32.mrf.mxu0
        %2761 = vmatprep.mubr.f32.mxu0 0.0
        %2762 = vmatmul.mubr.f32.gmra.mxu0 %v1917
        %v2763 = vpop.f32.mrf.mxu0
        %v2764 = vadd.f32 0.0, %v2763
        %v2765 = vpop.f32.mrf.mxu0
        %2766 = vmatprep.mubr.f32.mxu0 0.0
        %2767 = vmatmul.mubr.f32.gmra.mxu0 %v1918
        %v2768 = vpop.f32.mrf.mxu0
        %v2769 = vadd.f32 0.0, %v2768
        %v2770 = vpop.f32.mrf.mxu0
        %2771 = vmatprep.mubr.f32.mxu0 0.0
        %2772 = vmatmul.mubr.f32.gmra.mxu0 %v1919
        %v2773 = vpop.f32.mrf.mxu0
        %v2774 = vadd.f32 0.0, %v2773
        %v2775 = vpop.f32.mrf.mxu0
        %2776 = vmatprep.mubr.f32.mxu0 0.0
        %2777 = vmatmul.mubr.f32.gmra.mxu0 %v1920
        %v2778 = vpop.f32.mrf.mxu0
        %v2779 = vadd.f32 0.0, %v2778
        %v2780 = vpop.f32.mrf.mxu0
        %2781 = vmatprep.mubr.f32.mxu0 0.0
        %2782 = vmatmul.mubr.f32.gmra.mxu0 %v1921
        %v2783 = vpop.f32.mrf.mxu0
        %v2784 = vadd.f32 0.0, %v2783
        %v2785 = vpop.f32.mrf.mxu0
        %2786 = vmatprep.mubr.f32.mxu0 0.0
        %2787 = vmatmul.mubr.f32.gmra.mxu0 %v1922
        %v2788 = vpop.f32.mrf.mxu0
        %v2789 = vadd.f32 0.0, %v2788
        %v2790 = vpop.f32.mrf.mxu0
        %2791 = vmatprep.mubr.f32.mxu0 0.0
        %2792 = vmatmul.mubr.f32.gmra.mxu0 %v1923
        %v2793 = vpop.f32.mrf.mxu0
        %v2794 = vadd.f32 0.0, %v2793
        %v2795 = vpop.f32.mrf.mxu0
        %2796 = vmatprep.mubr.f32.mxu0 0.0
        %2797 = vmatmul.mubr.f32.gmra.mxu0 %v1924
        %v2798 = vpop.f32.mrf.mxu0
        %v2799 = vadd.f32 0.0, %v2798
        %v2800 = vpop.f32.mrf.mxu0
        %2801 = vmatprep.mubr.f32.mxu0 0.0
        %2802 = vmatmul.mubr.f32.gmra.mxu0 %v1925
        %v2803 = vpop.f32.mrf.mxu0
        %v2804 = vadd.f32 0.0, %v2803
        %v2805 = vpop.f32.mrf.mxu0
        %2806 = vmatprep.mubr.f32.mxu0 0.0
        %2807 = vmatmul.mubr.f32.gmra.mxu0 %v1926
        %v2808 = vpop.f32.mrf.mxu0
        %v2809 = vadd.f32 0.0, %v2808
        %v2810 = vpop.f32.mrf.mxu0
        %2811 = vmatprep.mubr.f32.mxu0 0.0
        %2812 = vmatmul.mubr.f32.gmra.mxu0 %v1927
        %v2813 = vpop.f32.mrf.mxu0
        %v2814 = vadd.f32 0.0, %v2813
        %v2815 = vpop.f32.mrf.mxu0
        %2816 = vmatprep.mubr.f32.mxu0 0.0
        %2817 = vmatmul.mubr.f32.gmra.mxu0 %v1928
        %v2818 = vpop.f32.mrf.mxu0
        %v2819 = vadd.f32 0.0, %v2818
        %v2820 = vpop.f32.mrf.mxu0
        %2821 = vmatprep.mubr.f32.mxu0 0.0
        %2822 = vmatmul.mubr.f32.gmra.mxu0 %v1929
        %v2823 = vpop.f32.mrf.mxu0
        %v2824 = vadd.f32 0.0, %v2823
        %v2825 = vpop.f32.mrf.mxu0
        %2826 = vmatprep.mubr.f32.mxu0 0.0
        %2827 = vmatmul.mubr.f32.gmra.mxu0 %v1930
        %v2828 = vpop.f32.mrf.mxu0
        %v2829 = vadd.f32 0.0, %v2828
        %v2830 = vpop.f32.mrf.mxu0
        %2831 = vmatprep.mubr.f32.mxu0 0.0
        %2832 = vmatmul.mubr.f32.gmra.mxu0 %v1931
        %v2833 = vpop.f32.mrf.mxu0
        %v2834 = vadd.f32 0.0, %v2833
        %v2835 = vpop.f32.mrf.mxu0
        %2836 = vmatprep.mubr.f32.mxu0 0.0
        %2837 = vmatmul.mubr.f32.gmra.mxu0 %v1932
        %v2838 = vpop.f32.mrf.mxu0
        %v2839 = vadd.f32 0.0, %v2838
        %v2840 = vpop.f32.mrf.mxu0
        %2841 = vmatprep.mubr.f32.mxu0 0.0
        %2842 = vmatmul.mubr.f32.gmra.mxu0 %v1933
        %v2843 = vpop.f32.mrf.mxu0
        %v2844 = vadd.f32 0.0, %v2843
        %v2845 = vpop.f32.mrf.mxu0
        %2846 = vmatprep.mubr.f32.mxu0 0.0
        %2847 = vmatmul.mubr.f32.gmra.mxu0 %v1934
        %v2848 = vpop.f32.mrf.mxu0
        %v2849 = vadd.f32 0.0, %v2848
        %v2850 = vpop.f32.mrf.mxu0
        %2851 = vmatprep.mubr.f32.mxu0 0.0
        %2852 = vmatmul.mubr.f32.gmra.mxu0 %v1935
        %v2853 = vpop.f32.mrf.mxu0
        %v2854 = vadd.f32 0.0, %v2853
        %v2855 = vpop.f32.mrf.mxu0
        %2856 = vmatprep.mubr.f32.mxu0 0.0
        %2857 = vmatmul.mubr.f32.gmra.mxu0 %v1936
        %v2858 = vpop.f32.mrf.mxu0
        %v2859 = vadd.f32 0.0, %v2858
        %v2860 = vpop.f32.mrf.mxu0
        %2861 = vmatprep.mubr.f32.mxu0 0.0
        %2862 = vmatmul.mubr.f32.gmra.mxu0 %v1937
        %v2863 = vpop.f32.mrf.mxu0
        %v2864 = vadd.f32 0.0, %v2863
        %v2865 = vpop.f32.mrf.mxu0
        %2866 = vmatprep.mubr.f32.mxu0 0.0
        %2867 = vmatmul.mubr.f32.gmra.mxu0 %v1938
        %v2868 = vpop.f32.mrf.mxu0
        %v2869 = vadd.f32 0.0, %v2868
        %v2870 = vpop.f32.mrf.mxu0
        %2871 = vmatprep.mubr.f32.mxu0 0.0
        %2872 = vmatmul.mubr.f32.gmra.mxu0 %v1939
        %v2873 = vpop.f32.mrf.mxu0
        %v2874 = vadd.f32 0.0, %v2873
        %v2875 = vpop.f32.mrf.mxu0
        %2876 = vmatprep.mubr.f32.mxu0 0.0
        %2877 = vmatmul.mubr.f32.gmra.mxu0 %v1940
        %v2878 = vpop.f32.mrf.mxu0
        %v2879 = vadd.f32 0.0, %v2878
        %v2880 = vpop.f32.mrf.mxu0
        %2881 = vmatprep.mubr.f32.mxu0 0.0
        %2882 = vmatmul.mubr.f32.gmra.mxu0 %v1941
        %v2883 = vpop.f32.mrf.mxu0
        %v2884 = vadd.f32 0.0, %v2883
        %v2885 = vpop.f32.mrf.mxu0
        %2886 = vmatprep.mubr.f32.mxu0 0.0
        %2887 = vmatmul.mubr.f32.gmra.mxu0 %v1942
        %v2888 = vpop.f32.mrf.mxu0
        %v2889 = vadd.f32 0.0, %v2888
        %v2890 = vpop.f32.mrf.mxu0
        %2891 = vmatprep.mubr.f32.mxu0 0.0
        %2892 = vmatmul.mubr.f32.gmra.mxu0 %v1943
        %v2893 = vpop.f32.mrf.mxu0
        %v2894 = vadd.f32 0.0, %v2893
        %v2895 = vpop.f32.mrf.mxu0
        %2896 = vmatprep.mubr.f32.mxu0 0.0
        %2897 = vmatmul.mubr.f32.gmra.mxu0 %v1944
        %v2898 = vpop.f32.mrf.mxu0
        %v2899 = vadd.f32 0.0, %v2898
        %v2900 = vpop.f32.mrf.mxu0
        %2901 = vmatprep.mubr.f32.mxu0 0.0
        %2902 = vmatmul.mubr.f32.gmra.mxu0 %v1945
        %v2903 = vpop.f32.mrf.mxu0
        %v2904 = vadd.f32 0.0, %v2903
        %v2905 = vpop.f32.mrf.mxu0
        %2906 = vmatprep.mubr.f32.mxu0 0.0
        %2907 = vmatmul.mubr.f32.gmra.mxu0 %v1946
        %v2908 = vpop.f32.mrf.mxu0
        %v2909 = vadd.f32 0.0, %v2908
        %v2910 = vpop.f32.mrf.mxu0
        %2911 = vmatprep.mubr.f32.mxu0 0.0
        %2912 = vmatmul.mubr.f32.gmra.mxu0 %v1947
        %v2913 = vpop.f32.mrf.mxu0
        %v2914 = vadd.f32 0.0, %v2913
        %v2915 = vpop.f32.mrf.mxu0
        %2916 = vmatprep.mubr.f32.mxu0 0.0
        %2917 = vmatmul.mubr.f32.gmra.mxu0 %v1948
        %v2918 = vpop.f32.mrf.mxu0
        %v2919 = vadd.f32 0.0, %v2918
        %v2920 = vpop.f32.mrf.mxu0
        %2921 = vmatprep.mubr.f32.mxu0 0.0
        %2922 = vmatmul.mubr.f32.gmra.mxu0 %v1949
        %v2923 = vpop.f32.mrf.mxu0
        %v2924 = vadd.f32 0.0, %v2923
        %v2925 = vpop.f32.mrf.mxu0
        %2926 = vmatprep.mubr.f32.mxu0 0.0
        %2927 = vmatmul.mubr.f32.gmra.mxu0 %v1950
        %v2928 = vpop.f32.mrf.mxu0
        %v2929 = vadd.f32 0.0, %v2928
        %v2930 = vpop.f32.mrf.mxu0
        %2931 = vmatprep.mubr.f32.mxu0 0.0
        %2932 = vmatmul.mubr.f32.gmra.mxu0 %v1951
        %v2933 = vpop.f32.mrf.mxu0
        %v2934 = vadd.f32 0.0, %v2933
        %v2935 = vpop.f32.mrf.mxu0
        %2936 = vmatprep.mubr.f32.mxu0 0.0
        %2937 = vmatmul.mubr.f32.gmra.mxu0 %v1952
        %v2938 = vpop.f32.mrf.mxu0
        %v2939 = vadd.f32 0.0, %v2938
        %v2940 = vpop.f32.mrf.mxu0
        %2941 = vmatprep.mubr.f32.mxu0 0.0
        %2942 = vmatmul.mubr.f32.gmra.mxu0 %v1953
        %v2943 = vpop.f32.mrf.mxu0
        %v2944 = vadd.f32 0.0, %v2943
        %v2945 = vpop.f32.mrf.mxu0
        %2946 = vmatprep.mubr.f32.mxu0 0.0
        %2947 = vmatmul.mubr.f32.gmra.mxu0 %v1954
        %v2948 = vpop.f32.mrf.mxu0
        %v2949 = vadd.f32 0.0, %v2948
        %v2950 = vpop.f32.mrf.mxu0
        %2951 = vmatprep.mubr.f32.mxu0 0.0
        %2952 = vmatmul.mubr.f32.gmra.mxu0 %v1955
        %v2953 = vpop.f32.mrf.mxu0
        %v2954 = vadd.f32 0.0, %v2953
        %v2955 = vpop.f32.mrf.mxu0
        %2956 = vmatprep.mubr.f32.mxu0 0.0
        %2957 = vmatmul.mubr.f32.gmra.mxu0 %v1956
        %v2958 = vpop.f32.mrf.mxu0
        %v2959 = vadd.f32 0.0, %v2958
        %v2960 = vpop.f32.mrf.mxu0
        %2961 = vmatprep.mubr.f32.mxu0 0.0
        %2962 = vmatmul.mubr.f32.gmra.mxu0 %v1957
        %v2963 = vpop.f32.mrf.mxu0
        %v2964 = vadd.f32 0.0, %v2963
        %v2965 = vpop.f32.mrf.mxu0
        %2966 = vmatprep.mubr.f32.mxu0 0.0
        %2967 = vmatmul.mubr.f32.gmra.mxu0 %v1958
        %v2968 = vpop.f32.mrf.mxu0
        %v2969 = vadd.f32 0.0, %v2968
        %v2970 = vpop.f32.mrf.mxu0
        %2971 = vmatprep.mubr.f32.mxu0 0.0
        %2972 = vmatmul.mubr.f32.gmra.mxu0 %v1959
        %v2973 = vpop.f32.mrf.mxu0
        %v2974 = vadd.f32 0.0, %v2973
        %v2975 = vpop.f32.mrf.mxu0
        %2976 = vmatprep.mubr.f32.mxu0 0.0
        %2977 = vmatmul.mubr.f32.gmra.mxu0 %v1960
        %v2978 = vpop.f32.mrf.mxu0
        %v2979 = vadd.f32 0.0, %v2978
        %v2980 = vpop.f32.mrf.mxu0
        %2981 = vmatprep.mubr.f32.mxu0 0.0
        %2982 = vmatmul.mubr.f32.gmra.mxu0 %v1961
        %v2983 = vpop.f32.mrf.mxu0
        %v2984 = vadd.f32 0.0, %v2983
        %v2985 = vpop.f32.mrf.mxu0
        %2986 = vmatprep.mubr.f32.mxu0 0.0
        %2987 = vmatmul.mubr.f32.gmra.mxu0 %v1962
        %v2988 = vpop.f32.mrf.mxu0
        %v2989 = vadd.f32 0.0, %v2988
        %v2990 = vpop.f32.mrf.mxu0
        %2991 = vmatprep.mubr.f32.mxu0 0.0
        %2992 = vmatmul.mubr.f32.gmra.mxu0 %v1963
        %v2993 = vpop.f32.mrf.mxu0
        %v2994 = vadd.f32 0.0, %v2993
        %v2995 = vpop.f32.mrf.mxu0
        %2996 = vmatprep.mubr.f32.mxu0 0.0
        %2997 = vmatmul.mubr.f32.gmra.mxu0 %v1964
        %v2998 = vpop.f32.mrf.mxu0
        %v2999 = vadd.f32 0.0, %v2998
        %v3000 = vpop.f32.mrf.mxu0
        %3001 = vmatprep.mubr.f32.mxu0 0.0
        %3002 = vmatmul.mubr.f32.gmra.mxu0 %v1965
        %v3003 = vpop.f32.mrf.mxu0
        %v3004 = vadd.f32 0.0, %v3003
        %v3005 = vpop.f32.mrf.mxu0
        %3006 = vmatprep.mubr.f32.mxu0 0.0
        %3007 = vmatmul.mubr.f32.gmra.mxu0 %v1966
        %v3008 = vpop.f32.mrf.mxu0
        %v3009 = vadd.f32 0.0, %v3008
        %v3010 = vpop.f32.mrf.mxu0
        %3011 = vmatprep.mubr.f32.mxu0 0.0
        %3012 = vmatmul.mubr.f32.gmra.mxu0 %v1967
        %v3013 = vpop.f32.mrf.mxu0
        %v3014 = vadd.f32 0.0, %v3013
        %v3015 = vpop.f32.mrf.mxu0
        %3016 = vmatprep.mubr.f32.mxu0 0.0
        %3017 = vmatmul.mubr.f32.gmra.mxu0 %v1968
        %v3018 = vpop.f32.mrf.mxu0
        %v3019 = vadd.f32 0.0, %v3018
        %v3020 = vpop.f32.mrf.mxu0
        %3021 = vmatprep.mubr.f32.mxu0 0.0
        %3022 = vmatmul.mubr.f32.gmra.mxu0 %v1969
        %v3023 = vpop.f32.mrf.mxu0
        %v3024 = vadd.f32 0.0, %v3023
        %v3025 = vpop.f32.mrf.mxu0
        %3026 = vmatprep.mubr.f32.mxu0 0.0
        %3027 = vmatmul.mubr.f32.gmra.mxu0 %v1970
        %v3028 = vpop.f32.mrf.mxu0
        %v3029 = vadd.f32 0.0, %v3028
        %v3030 = vpop.f32.mrf.mxu0
        %3031 = vmatprep.mubr.f32.mxu0 0.0
        %3032 = vmatmul.mubr.f32.gmra.mxu0 %v1971
        %v3033 = vpop.f32.mrf.mxu0
        %v3034 = vadd.f32 0.0, %v3033
        %v3035 = vpop.f32.mrf.mxu0
        %3036 = vmatprep.mubr.f32.mxu0 0.0
        %3037 = vmatmul.mubr.f32.gmra.mxu0 %v1972
        %v3038 = vpop.f32.mrf.mxu0
        %v3039 = vadd.f32 0.0, %v3038
        %v3040 = vpop.f32.mrf.mxu0
        %3041 = vmatprep.mubr.f32.mxu0 0.0
        %3042 = vmatmul.mubr.f32.gmra.mxu0 %v1973
        %v3043 = vpop.f32.mrf.mxu0
        %v3044 = vadd.f32 0.0, %v3043
        %v3045 = vpop.f32.mrf.mxu0
        %3046 = vmatprep.mubr.f32.mxu0 0.0
        %3047 = vmatmul.mubr.f32.gmra.mxu0 %v1974
        %v3048 = vpop.f32.mrf.mxu0
        %v3049 = vadd.f32 0.0, %v3048
        %v3050 = vpop.f32.mrf.mxu0
        %3051 = vmatprep.mubr.f32.mxu0 0.0
        %3052 = vmatmul.mubr.f32.gmra.mxu0 %v1975
        %v3053 = vpop.f32.mrf.mxu0
        %v3054 = vadd.f32 0.0, %v3053
        %v3055 = vpop.f32.mrf.mxu0
        %3056 = vmatprep.mubr.f32.mxu0 0.0
        %3057 = vmatmul.mubr.f32.gmra.mxu0 %v1976
        %v3058 = vpop.f32.mrf.mxu0
        %v3059 = vadd.f32 0.0, %v3058
        %v3060 = vpop.f32.mrf.mxu0
        %3061 = vmatprep.mubr.f32.mxu0 0.0
        %3062 = vmatmul.mubr.f32.gmra.mxu0 %v1977
        %v3063 = vpop.f32.mrf.mxu0
        %v3064 = vadd.f32 0.0, %v3063
        %v3065 = vpop.f32.mrf.mxu0
        %3066 = vmatprep.mubr.f32.mxu0 0.0
        %3067 = vmatmul.mubr.f32.gmra.mxu0 %v1978
        %v3068 = vpop.f32.mrf.mxu0
        %v3069 = vadd.f32 0.0, %v3068
        %v3070 = vpop.f32.mrf.mxu0
        %3071 = vmatprep.mubr.f32.mxu0 0.0
        %3072 = vmatmul.mubr.f32.gmra.mxu0 %v1979
        %v3073 = vpop.f32.mrf.mxu0
        %v3074 = vadd.f32 0.0, %v3073
        %v3075 = vpop.f32.mrf.mxu0
        %3076 = vmatprep.mubr.f32.mxu0 0.0
        %3077 = vmatmul.mubr.f32.gmra.mxu0 %v1980
        %v3078 = vpop.f32.mrf.mxu0
        %v3079 = vadd.f32 0.0, %v3078
        %v3080 = vpop.f32.mrf.mxu0
        %3081 = vmatprep.mubr.f32.mxu0 0.0
        %3082 = vmatmul.mubr.f32.gmra.mxu0 %v1981
        %v3083 = vpop.f32.mrf.mxu0
        %v3084 = vadd.f32 0.0, %v3083
        %v3085 = vpop.f32.mrf.mxu0
        %3086 = vmatprep.mubr.f32.mxu0 0.0
        %3087 = vmatmul.mubr.f32.gmra.mxu0 %v1982
        %v3088 = vpop.f32.mrf.mxu0
        %v3089 = vadd.f32 0.0, %v3088
        %v3090 = vpop.f32.mrf.mxu0
        %3091 = vmatprep.mubr.f32.mxu0 0.0
        %3092 = vmatmul.mubr.f32.gmra.mxu0 %v1983
        %v3093 = vpop.f32.mrf.mxu0
        %v3094 = vadd.f32 0.0, %v3093
        %v3095 = vpop.f32.mrf.mxu0
        %3096 = vmatprep.mubr.f32.mxu0 0.0
        %3097 = vmatmul.mubr.f32.gmra.mxu0 %v1984
        %v3098 = vpop.f32.mrf.mxu0
        %v3099 = vadd.f32 0.0, %v3098
        %v3100 = vpop.f32.mrf.mxu0
        %3101 = vmatprep.mubr.f32.mxu0 0.0
        %3102 = vmatmul.mubr.f32.gmra.mxu0 %v1985
        %v3103 = vpop.f32.mrf.mxu0
        %v3104 = vadd.f32 0.0, %v3103
        %v3105 = vpop.f32.mrf.mxu0
        %3106 = vmatprep.mubr.f32.mxu0 0.0
        %3107 = vmatmul.mubr.f32.gmra.mxu0 %v1986
        %v3108 = vpop.f32.mrf.mxu0
        %v3109 = vadd.f32 0.0, %v3108
        %v3110 = vpop.f32.mrf.mxu0
        %3111 = vmatprep.mubr.f32.mxu0 0.0
        %3112 = vmatmul.mubr.f32.gmra.mxu0 %v1987
        %v3113 = vpop.f32.mrf.mxu0
        %v3114 = vadd.f32 0.0, %v3113
        %v3115 = vpop.f32.mrf.mxu0
        %3116 = vmatprep.mubr.f32.mxu0 0.0
        %3117 = vmatmul.mubr.f32.gmra.mxu0 %v1988
        %v3118 = vpop.f32.mrf.mxu0
        %v3119 = vadd.f32 0.0, %v3118
        %v3120 = vpop.f32.mrf.mxu0
        %3121 = vmatprep.mubr.f32.mxu0 0.0
        %3122 = vmatmul.mubr.f32.gmra.mxu0 %v1989
        %v3123 = vpop.f32.mrf.mxu0
        %v3124 = vadd.f32 0.0, %v3123
        %v3125 = vpop.f32.mrf.mxu0
        %3126 = vmatprep.mubr.f32.mxu0 0.0
        %3127 = vmatmul.mubr.f32.gmra.mxu0 %v1990
        %v3128 = vpop.f32.mrf.mxu0
        %v3129 = vadd.f32 0.0, %v3128
        %v3130 = vpop.f32.mrf.mxu0
        %3131 = vmatprep.mubr.f32.mxu0 0.0
        %3132 = vmatmul.mubr.f32.gmra.mxu0 %v1991
        %v3133 = vpop.f32.mrf.mxu0
        %v3134 = vadd.f32 0.0, %v3133
        %v3135 = vpop.f32.mrf.mxu0
        %3136 = vmatprep.mubr.f32.mxu0 0.0
        %3137 = vmatmul.mubr.f32.gmra.mxu0 %v1992
        %v3138 = vpop.f32.mrf.mxu0
        %v3139 = vadd.f32 0.0, %v3138
        %v3140 = vpop.f32.mrf.mxu0
        %3141 = vmatprep.mubr.f32.mxu0 0.0
        %3142 = vmatmul.mubr.f32.gmra.mxu0 %v1993
        %v3143 = vpop.f32.mrf.mxu0
        %v3144 = vadd.f32 0.0, %v3143
        %v3145 = vpop.f32.mrf.mxu0
        %3146 = vmatprep.mubr.f32.mxu0 0.0
        %3147 = vmatmul.mubr.f32.gmra.mxu0 %v1994
        %v3148 = vpop.f32.mrf.mxu0
        %v3149 = vadd.f32 0.0, %v3148
        %v3150 = vpop.f32.mrf.mxu0
        %3151 = vmatprep.mubr.f32.mxu0 0.0
        %3152 = vmatmul.mubr.f32.gmra.mxu0 %v1995
        %v3153 = vpop.f32.mrf.mxu0
        %v3154 = vadd.f32 0.0, %v3153
        %v3155 = vpop.f32.mrf.mxu0
        %3156 = vmatprep.mubr.f32.mxu0 0.0
        %3157 = vmatmul.mubr.f32.gmra.mxu0 %v1996
        %v3158 = vpop.f32.mrf.mxu0
        %v3159 = vadd.f32 0.0, %v3158
        %v3160 = vpop.f32.mrf.mxu0
        %3161 = vmatprep.mubr.f32.mxu0 0.0
        %3162 = vmatmul.mubr.f32.gmra.mxu0 %v1997
        %v3163 = vpop.f32.mrf.mxu0
        %v3164 = vadd.f32 0.0, %v3163
        %v3165 = vpop.f32.mrf.mxu0
        %3166 = vmatprep.mubr.f32.mxu0 0.0
        %3167 = vmatmul.mubr.f32.gmra.mxu0 %v1998
        %v3168 = vpop.f32.mrf.mxu0
        %v3169 = vadd.f32 0.0, %v3168
        %v3170 = vpop.f32.mrf.mxu0
        %3171 = vmatprep.mubr.f32.mxu0 0.0
        %3172 = vmatmul.mubr.f32.gmra.mxu0 %v1999
        %v3173 = vpop.f32.mrf.mxu0
        %v3174 = vadd.f32 0.0, %v3173
        %v3175 = vpop.f32.mrf.mxu0
        %3176 = vmatprep.mubr.f32.mxu0 0.0
        %3177 = vmatmul.mubr.f32.gmra.mxu0 %v2000
        %v3178 = vpop.f32.mrf.mxu0
        %v3179 = vadd.f32 0.0, %v3178
        %v3180 = vpop.f32.mrf.mxu0
        %3181 = vmatprep.mubr.f32.mxu0 0.0
        %3182 = vmatmul.mubr.f32.gmra.mxu0 %v2001
        %v3183 = vpop.f32.mrf.mxu0
        %v3184 = vadd.f32 0.0, %v3183
        %v3185 = vpop.f32.mrf.mxu0
        %3186 = vmatprep.mubr.f32.mxu0 0.0
        %3187 = vmatmul.mubr.f32.gmra.mxu0 %v2002
        %v3188 = vpop.f32.mrf.mxu0
        %v3189 = vadd.f32 0.0, %v3188
        %v3190 = vpop.f32.mrf.mxu0
        %3191 = vmatprep.mubr.f32.mxu0 0.0
        %3192 = vmatmul.mubr.f32.gmra.mxu0 %v2003
        %v3193 = vpop.f32.mrf.mxu0
        %v3194 = vadd.f32 0.0, %v3193
        %v3195 = vpop.f32.mrf.mxu0
        %3196 = vmatprep.mubr.f32.mxu0 0.0
        %3197 = vmatmul.mubr.f32.gmra.mxu0 %v2004
        %v3198 = vpop.f32.mrf.mxu0
        %v3199 = vadd.f32 0.0, %v3198
        %v3200 = vpop.f32.mrf.mxu0
        %3201 = vmatprep.mubr.f32.mxu0 0.0
        %3202 = vmatmul.mubr.f32.gmra.mxu0 %v2005
        %v3203 = vpop.f32.mrf.mxu0
        %v3204 = vadd.f32 0.0, %v3203
        %v3205 = vpop.f32.mrf.mxu0
        %3206 = vmatprep.mubr.f32.mxu0 0.0
        %3207 = vmatmul.mubr.f32.gmra.mxu0 %v2006
        %v3208 = vpop.f32.mrf.mxu0
        %v3209 = vadd.f32 0.0, %v3208
        %v3210 = vpop.f32.mrf.mxu0
        %3211 = vmatprep.mubr.f32.mxu0 0.0
        %3212 = vmatmul.mubr.f32.gmra.mxu0 %v2007
        %v3213 = vpop.f32.mrf.mxu0
        %v3214 = vadd.f32 0.0, %v3213
        %v3215 = vpop.f32.mrf.mxu0
        %3216 = vmatprep.mubr.f32.mxu0 0.0
        %3217 = vmatmul.mubr.f32.gmra.mxu0 %v2008
        %v3218 = vpop.f32.mrf.mxu0
        %v3219 = vadd.f32 0.0, %v3218
        %v3220 = vpop.f32.mrf.mxu0
        %3221 = vmatprep.mubr.f32.mxu0 0.0
        %3222 = vmatmul.mubr.f32.gmra.mxu0 %v2009
        %v3223 = vpop.f32.mrf.mxu0
        %v3224 = vadd.f32 0.0, %v3223
        %v3225 = vpop.f32.mrf.mxu0
        %3226 = vmatprep.mubr.f32.mxu0 0.0
        %3227 = vmatmul.mubr.f32.gmra.mxu0 %v2010
        %v3228 = vpop.f32.mrf.mxu0
        %v3229 = vadd.f32 0.0, %v3228
        %v3230 = vpop.f32.mrf.mxu0
        %3231 = vmatprep.mubr.f32.mxu0 0.0
        %3232 = vmatmul.mubr.f32.gmra.mxu0 %v2011
        %v3233 = vpop.f32.mrf.mxu0
        %v3234 = vadd.f32 0.0, %v3233
        %v3235 = vpop.f32.mrf.mxu0
        %3236 = vmatprep.mubr.f32.mxu0 0.0
        %3237 = vmatmul.mubr.f32.gmra.mxu0 %v2012
        %v3238 = vpop.f32.mrf.mxu0
        %v3239 = vadd.f32 0.0, %v3238
        %v3240 = vpop.f32.mrf.mxu0
        %3241 = vmatprep.mubr.f32.mxu0 0.0
        %3242 = vmatmul.mubr.f32.gmra.mxu0 %v2013
        %v3243 = vpop.f32.mrf.mxu0
        %v3244 = vadd.f32 0.0, %v3243
        %v3245 = vpop.f32.mrf.mxu0
        %3246 = vmatprep.mubr.f32.mxu0 0.0
        %3247 = vmatmul.mubr.f32.gmra.mxu0 %v2014
        %v3248 = vpop.f32.mrf.mxu0
        %v3249 = vadd.f32 0.0, %v3248
        %v3250 = vpop.f32.mrf.mxu0
        %3251 = vmatprep.mubr.f32.mxu0 0.0
        %3252 = vmatmul.mubr.f32.gmra.mxu0 %v2015
        %v3253 = vpop.f32.mrf.mxu0
        %v3254 = vadd.f32 0.0, %v3253
        %v3255 = vpop.f32.mrf.mxu0
        %3256 = vmatprep.mubr.f32.mxu0 0.0
        %3257 = vmatmul.mubr.f32.gmra.mxu0 %v2016
        %v3258 = vpop.f32.mrf.mxu0
        %v3259 = vadd.f32 0.0, %v3258
        %v3260 = vpop.f32.mrf.mxu0
        %3261 = vmatprep.mubr.f32.mxu0 0.0
        %3262 = vmatmul.mubr.f32.gmra.mxu0 %v2017
        %v3263 = vpop.f32.mrf.mxu0
        %v3264 = vadd.f32 0.0, %v3263
        %v3265 = vpop.f32.mrf.mxu0
        %3266 = vmatprep.mubr.f32.mxu0 0.0
        %3267 = vmatmul.mubr.f32.gmra.mxu0 %v2018
        %v3268 = vpop.f32.mrf.mxu0
        %v3269 = vadd.f32 0.0, %v3268
        %v3270 = vpop.f32.mrf.mxu0
        %3271 = vmatprep.mubr.f32.mxu0 0.0
        %3272 = vmatmul.mubr.f32.gmra.mxu0 %v2019
        %v3273 = vpop.f32.mrf.mxu0
        %v3274 = vadd.f32 0.0, %v3273
        %v3275 = vpop.f32.mrf.mxu0
        %3276 = vmatprep.mubr.f32.mxu0 0.0
        %3277 = vmatmul.mubr.f32.gmra.mxu0 %v2020
        %v3278 = vpop.f32.mrf.mxu0
        %v3279 = vadd.f32 0.0, %v3278
        %v3280 = vpop.f32.mrf.mxu0
        %3281 = vmatprep.mubr.f32.mxu0 0.0
        %3282 = vmatmul.mubr.f32.gmra.mxu0 %v2021
        %v3283 = vpop.f32.mrf.mxu0
        %v3284 = vadd.f32 0.0, %v3283
        %v3285 = vpop.f32.mrf.mxu0
        %3286 = vmatprep.mubr.f32.mxu0 0.0
        %3287 = vmatmul.mubr.f32.gmra.mxu0 %v2022
        %v3288 = vpop.f32.mrf.mxu0
        %v3289 = vadd.f32 0.0, %v3288
        %v3290 = vpop.f32.mrf.mxu0
        %3291 = vmatprep.mubr.f32.mxu0 0.0
        %3292 = vmatmul.mubr.f32.gmra.mxu0 %v2023
        %v3293 = vpop.f32.mrf.mxu0
        %v3294 = vadd.f32 0.0, %v3293
        %v3295 = vpop.f32.mrf.mxu0
        %3296 = vmatprep.mubr.f32.mxu0 0.0
        %3297 = vmatmul.mubr.f32.gmra.mxu0 %v2024
        %v3298 = vpop.f32.mrf.mxu0
        %v3299 = vadd.f32 0.0, %v3298
        %v3300 = vpop.f32.mrf.mxu0
        %3301 = vmatprep.mubr.f32.mxu0 0.0
        %3302 = vmatmul.mubr.f32.gmra.mxu0 %v2025
        %v3303 = vpop.f32.mrf.mxu0
        %v3304 = vadd.f32 0.0, %v3303
        %v3305 = vpop.f32.mrf.mxu0
        %3306 = vmatprep.mubr.f32.mxu0 0.0
        %3307 = vmatmul.mubr.f32.gmra.mxu0 %v2026
        %v3308 = vpop.f32.mrf.mxu0
        %v3309 = vadd.f32 0.0, %v3308
        %v3310 = vpop.f32.mrf.mxu0
        %3311 = vmatprep.mubr.f32.mxu0 0.0
        %3312 = vmatmul.mubr.f32.gmra.mxu0 %v2027
        %v3313 = vpop.f32.mrf.mxu0
        %v3314 = vadd.f32 0.0, %v3313
        %v3315 = vpop.f32.mrf.mxu0
        %3316 = vmatprep.mubr.f32.mxu0 0.0
        %3317 = vmatmul.mubr.f32.gmra.mxu0 %v2028
        %v3318 = vpop.f32.mrf.mxu0
        %v3319 = vadd.f32 0.0, %v3318
        %v3320 = vpop.f32.mrf.mxu0
        %3321 = vmatprep.mubr.f32.mxu0 0.0
        %3322 = vmatmul.mubr.f32.gmra.mxu0 %v2029
        %v3323 = vpop.f32.mrf.mxu0
        %v3324 = vadd.f32 0.0, %v3323
        %v3325 = vpop.f32.mrf.mxu0
        %3326 = vmatprep.mubr.f32.mxu0 0.0
        %3327 = vmatmul.mubr.f32.gmra.mxu0 %v2030
        %v3328 = vpop.f32.mrf.mxu0
        %v3329 = vadd.f32 0.0, %v3328
        %v3330 = vpop.f32.mrf.mxu0
        %3331 = vmatprep.mubr.f32.mxu0 0.0
        %3332 = vmatmul.mubr.f32.gmra.mxu0 %v2031
        %v3333 = vpop.f32.mrf.mxu0
        %v3334 = vadd.f32 0.0, %v3333
        %v3335 = vpop.f32.mrf.mxu0
        %3336 = vmatprep.mubr.f32.mxu0 0.0
        %3337 = vmatmul.mubr.f32.gmra.mxu0 %v2032
        %v3338 = vpop.f32.mrf.mxu0
        %v3339 = vadd.f32 0.0, %v3338
        %v3340 = vpop.f32.mrf.mxu0
        %3341 = vmatprep.mubr.f32.mxu0 0.0
        %3342 = vmatmul.mubr.f32.gmra.mxu0 %v2033
        %v3343 = vpop.f32.mrf.mxu0
        %v3344 = vadd.f32 0.0, %v3343
        %v3345 = vpop.f32.mrf.mxu0
        %3346 = vmatprep.mubr.f32.mxu0 0.0
        %3347 = vmatmul.mubr.f32.gmra.mxu0 %v2034
        %v3348 = vpop.f32.mrf.mxu0
        %v3349 = vadd.f32 0.0, %v3348
        %v3350 = vpop.f32.mrf.mxu0
        %3351 = vmatprep.mubr.f32.mxu0 0.0
        %3352 = vmatmul.mubr.f32.gmra.mxu0 %v2035
        %v3353 = vpop.f32.mrf.mxu0
        %v3354 = vadd.f32 0.0, %v3353
        %v3355 = vpop.f32.mrf.mxu0
        %3356 = vmatprep.mubr.f32.mxu0 0.0
        %3357 = vmatmul.mubr.f32.gmra.mxu0 %v2036
        %v3358 = vpop.f32.mrf.mxu0
        %v3359 = vadd.f32 0.0, %v3358
        %v3360 = vpop.f32.mrf.mxu0
        %3361 = vmatprep.mubr.f32.mxu0 0.0
        %3362 = vmatmul.mubr.f32.gmra.mxu0 %v2037
        %v3363 = vpop.f32.mrf.mxu0
        %v3364 = vadd.f32 0.0, %v3363
        %v3365 = vpop.f32.mrf.mxu0
        %3366 = vmatprep.mubr.f32.mxu0 0.0
        %3367 = vmatmul.mubr.f32.gmra.mxu0 %v2038
        %v3368 = vpop.f32.mrf.mxu0
        %v3369 = vadd.f32 0.0, %v3368
        %v3370 = vpop.f32.mrf.mxu0
        %3371 = vmatprep.mubr.f32.mxu0 0.0
        %3372 = vmatmul.mubr.f32.gmra.mxu0 %v2039
        %v3373 = vpop.f32.mrf.mxu0
        %v3374 = vadd.f32 0.0, %v3373
        %v3375 = vpop.f32.mrf.mxu0
        %3376 = vmatprep.mubr.f32.mxu0 0.0
        %3377 = vmatmul.mubr.f32.gmra.mxu0 %v2040
        %v3378 = vpop.f32.mrf.mxu0
        %v3379 = vadd.f32 0.0, %v3378
        %v3380 = vpop.f32.mrf.mxu0
        %3381 = vmatprep.mubr.f32.mxu0 0.0
        %3382 = vmatmul.mubr.f32.gmra.mxu0 %v2041
        %v3383 = vpop.f32.mrf.mxu0
        %v3384 = vadd.f32 0.0, %v3383
        %v3385 = vpop.f32.mrf.mxu0
        %3386 = vmatprep.mubr.f32.mxu0 0.0
        %3387 = vmatmul.mubr.f32.gmra.mxu0 %v2042
        %v3388 = vpop.f32.mrf.mxu0
        %v3389 = vadd.f32 0.0, %v3388
        %v3390 = vpop.f32.mrf.mxu0
        %3391 = vmatprep.mubr.f32.mxu0 0.0
        %3392 = vmatmul.mubr.f32.gmra.mxu0 %v2043
        %v3393 = vpop.f32.mrf.mxu0
        %v3394 = vadd.f32 0.0, %v3393
        %v3395 = vpop.f32.mrf.mxu0
        %3396 = vmatprep.mubr.f32.mxu0 0.0
        %3397 = vmatmul.mubr.f32.gmra.mxu0 %v2044
        %v3398 = vpop.f32.mrf.mxu0
        %v3399 = vadd.f32 0.0, %v3398
        %v3400 = vpop.f32.mrf.mxu0
        %3401 = vmatprep.mubr.f32.mxu0 0.0
        %3402 = vmatmul.mubr.f32.gmra.mxu0 %v2045
        %v3403 = vpop.f32.mrf.mxu0
        %v3404 = vadd.f32 0.0, %v3403
        %v3405 = vpop.f32.mrf.mxu0
        %3406 = vdwg.mxu0
        %v3407 = vmax.f32 %v2129, %v2134
        %v3408 = vmax.f32 %v3407, %v2139
        %v3409 = vmax.f32 %v3408, %v2144
        %v3410 = vmax.f32 %v3409, %v2149
        %v3411 = vmax.f32 %v3410, %v2154
        %v3412 = vmax.f32 %v3411, %v2159
        %v3413 = vmax.f32 %v3412, %v2164
        %v3414 = vmax.f32 %v3413, %v2169
        %v3415 = vmax.f32 %v3414, %v2174
        %v3416 = vmax.f32 %v3415, %v2179
        %v3417 = vmax.f32 %v3416, %v2184
        %v3418 = vmax.f32 %v3417, %v2189
        %v3419 = vmax.f32 %v3418, %v2194
        %v3420 = vmax.f32 %v3419, %v2199
        %v3421 = vmax.f32 %v3420, %v2204
        %v3422 = vmax.f32 %v3421, %v2209
        %v3423 = vmax.f32 %v3422, %v2214
        %v3424 = vmax.f32 %v3423, %v2219
        %v3425 = vmax.f32 %v3424, %v2224
        %v3426 = vmax.f32 %v3425, %v2229
        %v3427 = vmax.f32 %v3426, %v2234
        %v3428 = vmax.f32 %v3427, %v2239
        %v3429 = vmax.f32 %v3428, %v2244
        %v3430 = vmax.f32 %v3429, %v2249
        %v3431 = vmax.f32 %v3430, %v2254
        %v3432 = vmax.f32 %v3431, %v2259
        %v3433 = vmax.f32 %v3432, %v2264
        %v3434 = vmax.f32 %v3433, %v2269
        %v3435 = vmax.f32 %v3434, %v2274
        %v3436 = vmax.f32 %v3435, %v2279
        %v3437 = vmax.f32 %v3436, %v2284
        %v3438 = vrot.slane %v3437, 4
        %v3439 = vmax.f32 %v3437, %v3438
        %v3440 = vrot.slane %v3439, 2
        %v3441 = vmax.f32 %v3439, %v3440
        %v3442 = vrot.slane %v3441, 1
        %v3443 = vmax.f32 %v3441, %v3442
        %v3444 = vmax.f32 %v2289, %v2294
        %v3445 = vmax.f32 %v3444, %v2299
        %v3446 = vmax.f32 %v3445, %v2304
        %v3447 = vmax.f32 %v3446, %v2309
        %v3448 = vmax.f32 %v3447, %v2314
        %v3449 = vmax.f32 %v3448, %v2319
        %v3450 = vmax.f32 %v3449, %v2324
        %v3451 = vmax.f32 %v3450, %v2329
        %v3452 = vmax.f32 %v3451, %v2334
        %v3453 = vmax.f32 %v3452, %v2339
        %v3454 = vmax.f32 %v3453, %v2344
        %v3455 = vmax.f32 %v3454, %v2349
        %v3456 = vmax.f32 %v3455, %v2354
        %v3457 = vmax.f32 %v3456, %v2359
        %v3458 = vmax.f32 %v3457, %v2364
        %v3459 = vmax.f32 %v3458, %v2369
        %v3460 = vmax.f32 %v3459, %v2374
        %v3461 = vmax.f32 %v3460, %v2379
        %v3462 = vmax.f32 %v3461, %v2384
        %v3463 = vmax.f32 %v3462, %v2389
        %v3464 = vmax.f32 %v3463, %v2394
        %v3465 = vmax.f32 %v3464, %v2399
        %v3466 = vmax.f32 %v3465, %v2404
        %v3467 = vmax.f32 %v3466, %v2409
        %v3468 = vmax.f32 %v3467, %v2414
        %v3469 = vmax.f32 %v3468, %v2419
        %v3470 = vmax.f32 %v3469, %v2424
        %v3471 = vmax.f32 %v3470, %v2429
        %v3472 = vmax.f32 %v3471, %v2434
        %v3473 = vmax.f32 %v3472, %v2439
        %v3474 = vmax.f32 %v3473, %v2444
        %v3475 = vrot.slane %v3474, 4
        %v3476 = vmax.f32 %v3474, %v3475
        %v3477 = vrot.slane %v3476, 2
        %v3478 = vmax.f32 %v3476, %v3477
        %v3479 = vrot.slane %v3478, 1
        %v3480 = vmax.f32 %v3478, %v3479
        %v3481 = vmax.f32 %v2449, %v2454
        %v3482 = vmax.f32 %v3481, %v2459
        %v3483 = vmax.f32 %v3482, %v2464
        %v3484 = vmax.f32 %v3483, %v2469
        %v3485 = vmax.f32 %v3484, %v2474
        %v3486 = vmax.f32 %v3485, %v2479
        %v3487 = vmax.f32 %v3486, %v2484
        %v3488 = vmax.f32 %v3487, %v2489
        %v3489 = vmax.f32 %v3488, %v2494
        %v3490 = vmax.f32 %v3489, %v2499
        %v3491 = vmax.f32 %v3490, %v2504
        %v3492 = vmax.f32 %v3491, %v2509
        %v3493 = vmax.f32 %v3492, %v2514
        %v3494 = vmax.f32 %v3493, %v2519
        %v3495 = vmax.f32 %v3494, %v2524
        %v3496 = vmax.f32 %v3495, %v2529
        %v3497 = vmax.f32 %v3496, %v2534
        %v3498 = vmax.f32 %v3497, %v2539
        %v3499 = vmax.f32 %v3498, %v2544
        %v3500 = vmax.f32 %v3499, %v2549
        %v3501 = vmax.f32 %v3500, %v2554
        %v3502 = vmax.f32 %v3501, %v2559
        %v3503 = vmax.f32 %v3502, %v2564
        %v3504 = vmax.f32 %v3503, %v2569
        %v3505 = vmax.f32 %v3504, %v2574
        %v3506 = vmax.f32 %v3505, %v2579
        %v3507 = vmax.f32 %v3506, %v2584
        %v3508 = vmax.f32 %v3507, %v2589
        %v3509 = vmax.f32 %v3508, %v2594
        %v3510 = vmax.f32 %v3509, %v2599
        %v3511 = vmax.f32 %v3510, %v2604
        %v3512 = vrot.slane %v3511, 4
        %v3513 = vmax.f32 %v3511, %v3512
        %v3514 = vrot.slane %v3513, 2
        %v3515 = vmax.f32 %v3513, %v3514
        %v3516 = vrot.slane %v3515, 1
        %v3517 = vmax.f32 %v3515, %v3516
        %v3518 = vmax.f32 %v2609, %v2614
        %v3519 = vmax.f32 %v3518, %v2619
        %v3520 = vmax.f32 %v3519, %v2624
        %v3521 = vmax.f32 %v3520, %v2629
        %v3522 = vmax.f32 %v3521, %v2634
        %v3523 = vmax.f32 %v3522, %v2639
        %v3524 = vmax.f32 %v3523, %v2644
        %v3525 = vmax.f32 %v3524, %v2649
        %v3526 = vmax.f32 %v3525, %v2654
        %v3527 = vmax.f32 %v3526, %v2659
        %v3528 = vmax.f32 %v3527, %v2664
        %v3529 = vmax.f32 %v3528, %v2669
        %v3530 = vmax.f32 %v3529, %v2674
        %v3531 = vmax.f32 %v3530, %v2679
        %v3532 = vmax.f32 %v3531, %v2684
        %v3533 = vmax.f32 %v3532, %v2689
        %v3534 = vmax.f32 %v3533, %v2694
        %v3535 = vmax.f32 %v3534, %v2699
        %v3536 = vmax.f32 %v3535, %v2704
        %v3537 = vmax.f32 %v3536, %v2709
        %v3538 = vmax.f32 %v3537, %v2714
        %v3539 = vmax.f32 %v3538, %v2719
        %v3540 = vmax.f32 %v3539, %v2724
        %v3541 = vmax.f32 %v3540, %v2729
        %v3542 = vmax.f32 %v3541, %v2734
        %v3543 = vmax.f32 %v3542, %v2739
        %v3544 = vmax.f32 %v3543, %v2744
        %v3545 = vmax.f32 %v3544, %v2749
        %v3546 = vmax.f32 %v3545, %v2754
        %v3547 = vmax.f32 %v3546, %v2759
        %v3548 = vmax.f32 %v3547, %v2764
        %v3549 = vrot.slane %v3548, 4
        %v3550 = vmax.f32 %v3548, %v3549
        %v3551 = vrot.slane %v3550, 2
        %v3552 = vmax.f32 %v3550, %v3551
        %v3553 = vrot.slane %v3552, 1
        %v3554 = vmax.f32 %v3552, %v3553
        %v3555 = vmax.f32 %v2769, %v2774
        %v3556 = vmax.f32 %v3555, %v2779
        %v3557 = vmax.f32 %v3556, %v2784
        %v3558 = vmax.f32 %v3557, %v2789
        %v3559 = vmax.f32 %v3558, %v2794
        %v3560 = vmax.f32 %v3559, %v2799
        %v3561 = vmax.f32 %v3560, %v2804
        %v3562 = vmax.f32 %v3561, %v2809
        %v3563 = vmax.f32 %v3562, %v2814
        %v3564 = vmax.f32 %v3563, %v2819
        %v3565 = vmax.f32 %v3564, %v2824
        %v3566 = vmax.f32 %v3565, %v2829
        %v3567 = vmax.f32 %v3566, %v2834
        %v3568 = vmax.f32 %v3567, %v2839
        %v3569 = vmax.f32 %v3568, %v2844
        %v3570 = vmax.f32 %v3569, %v2849
        %v3571 = vmax.f32 %v3570, %v2854
        %v3572 = vmax.f32 %v3571, %v2859
        %v3573 = vmax.f32 %v3572, %v2864
        %v3574 = vmax.f32 %v3573, %v2869
        %v3575 = vmax.f32 %v3574, %v2874
        %v3576 = vmax.f32 %v3575, %v2879
        %v3577 = vmax.f32 %v3576, %v2884
        %v3578 = vmax.f32 %v3577, %v2889
        %v3579 = vmax.f32 %v3578, %v2894
        %v3580 = vmax.f32 %v3579, %v2899
        %v3581 = vmax.f32 %v3580, %v2904
        %v3582 = vmax.f32 %v3581, %v2909
        %v3583 = vmax.f32 %v3582, %v2914
        %v3584 = vmax.f32 %v3583, %v2919
        %v3585 = vmax.f32 %v3584, %v2924
        %v3586 = vrot.slane %v3585, 4
        %v3587 = vmax.f32 %v3585, %v3586
        %v3588 = vrot.slane %v3587, 2
        %v3589 = vmax.f32 %v3587, %v3588
        %v3590 = vrot.slane %v3589, 1
        %v3591 = vmax.f32 %v3589, %v3590
        %v3592 = vmax.f32 %v2929, %v2934
        %v3593 = vmax.f32 %v3592, %v2939
        %v3594 = vmax.f32 %v3593, %v2944
        %v3595 = vmax.f32 %v3594, %v2949
        %v3596 = vmax.f32 %v3595, %v2954
        %v3597 = vmax.f32 %v3596, %v2959
        %v3598 = vmax.f32 %v3597, %v2964
        %v3599 = vmax.f32 %v3598, %v2969
        %v3600 = vmax.f32 %v3599, %v2974
        %v3601 = vmax.f32 %v3600, %v2979
        %v3602 = vmax.f32 %v3601, %v2984
        %v3603 = vmax.f32 %v3602, %v2989
        %v3604 = vmax.f32 %v3603, %v2994
        %v3605 = vmax.f32 %v3604, %v2999
        %v3606 = vmax.f32 %v3605, %v3004
        %v3607 = vmax.f32 %v3606, %v3009
        %v3608 = vmax.f32 %v3607, %v3014
        %v3609 = vmax.f32 %v3608, %v3019
        %v3610 = vmax.f32 %v3609, %v3024
        %v3611 = vmax.f32 %v3610, %v3029
        %v3612 = vmax.f32 %v3611, %v3034
        %v3613 = vmax.f32 %v3612, %v3039
        %v3614 = vmax.f32 %v3613, %v3044
        %v3615 = vmax.f32 %v3614, %v3049
        %v3616 = vmax.f32 %v3615, %v3054
        %v3617 = vmax.f32 %v3616, %v3059
        %v3618 = vmax.f32 %v3617, %v3064
        %v3619 = vmax.f32 %v3618, %v3069
        %v3620 = vmax.f32 %v3619, %v3074
        %v3621 = vmax.f32 %v3620, %v3079
        %v3622 = vmax.f32 %v3621, %v3084
        %v3623 = vrot.slane %v3622, 4
        %v3624 = vmax.f32 %v3622, %v3623
        %v3625 = vrot.slane %v3624, 2
        %v3626 = vmax.f32 %v3624, %v3625
        %v3627 = vrot.slane %v3626, 1
        %v3628 = vmax.f32 %v3626, %v3627
        %v3629 = vmax.f32 %v3089, %v3094
        %v3630 = vmax.f32 %v3629, %v3099
        %v3631 = vmax.f32 %v3630, %v3104
        %v3632 = vmax.f32 %v3631, %v3109
        %v3633 = vmax.f32 %v3632, %v3114
        %v3634 = vmax.f32 %v3633, %v3119
        %v3635 = vmax.f32 %v3634, %v3124
        %v3636 = vmax.f32 %v3635, %v3129
        %v3637 = vmax.f32 %v3636, %v3134
        %v3638 = vmax.f32 %v3637, %v3139
        %v3639 = vmax.f32 %v3638, %v3144
        %v3640 = vmax.f32 %v3639, %v3149
        %v3641 = vmax.f32 %v3640, %v3154
        %v3642 = vmax.f32 %v3641, %v3159
        %v3643 = vmax.f32 %v3642, %v3164
        %v3644 = vmax.f32 %v3643, %v3169
        %v3645 = vmax.f32 %v3644, %v3174
        %v3646 = vmax.f32 %v3645, %v3179
        %v3647 = vmax.f32 %v3646, %v3184
        %v3648 = vmax.f32 %v3647, %v3189
        %v3649 = vmax.f32 %v3648, %v3194
        %v3650 = vmax.f32 %v3649, %v3199
        %v3651 = vmax.f32 %v3650, %v3204
        %v3652 = vmax.f32 %v3651, %v3209
        %v3653 = vmax.f32 %v3652, %v3214
        %v3654 = vmax.f32 %v3653, %v3219
        %v3655 = vmax.f32 %v3654, %v3224
        %v3656 = vmax.f32 %v3655, %v3229
        %v3657 = vmax.f32 %v3656, %v3234
        %v3658 = vmax.f32 %v3657, %v3239
        %v3659 = vmax.f32 %v3658, %v3244
        %v3660 = vrot.slane %v3659, 4
        %v3661 = vmax.f32 %v3659, %v3660
        %v3662 = vrot.slane %v3661, 2
        %v3663 = vmax.f32 %v3661, %v3662
        %v3664 = vrot.slane %v3663, 1
        %v3665 = vmax.f32 %v3663, %v3664
        %v3666 = vmax.f32 %v3249, %v3254
        %v3667 = vmax.f32 %v3666, %v3259
        %v3668 = vmax.f32 %v3667, %v3264
        %v3669 = vmax.f32 %v3668, %v3269
        %v3670 = vmax.f32 %v3669, %v3274
        %v3671 = vmax.f32 %v3670, %v3279
        %v3672 = vmax.f32 %v3671, %v3284
        %v3673 = vmax.f32 %v3672, %v3289
        %v3674 = vmax.f32 %v3673, %v3294
        %v3675 = vmax.f32 %v3674, %v3299
        %v3676 = vmax.f32 %v3675, %v3304
        %v3677 = vmax.f32 %v3676, %v3309
        %v3678 = vmax.f32 %v3677, %v3314
        %v3679 = vmax.f32 %v3678, %v3319
        %v3680 = vmax.f32 %v3679, %v3324
        %v3681 = vmax.f32 %v3680, %v3329
        %v3682 = vmax.f32 %v3681, %v3334
        %v3683 = vmax.f32 %v3682, %v3339
        %v3684 = vmax.f32 %v3683, %v3344
        %v3685 = vmax.f32 %v3684, %v3349
        %v3686 = vmax.f32 %v3685, %v3354
        %v3687 = vmax.f32 %v3686, %v3359
        %v3688 = vmax.f32 %v3687, %v3364
        %v3689 = vmax.f32 %v3688, %v3369
        %v3690 = vmax.f32 %v3689, %v3374
        %v3691 = vmax.f32 %v3690, %v3379
        %v3692 = vmax.f32 %v3691, %v3384
        %v3693 = vmax.f32 %v3692, %v3389
        %v3694 = vmax.f32 %v3693, %v3394
        %v3695 = vmax.f32 %v3694, %v3399
        %v3696 = vmax.f32 %v3695, %v3404
        %v3697 = vrot.slane %v3696, 4
        %v3698 = vmax.f32 %v3696, %v3697
        %v3699 = vrot.slane %v3698, 2
        %v3700 = vmax.f32 %v3698, %v3699
        %v3701 = vrot.slane %v3700, 1
        %v3702 = vmax.f32 %v3700, %v3701
        %v3703 = vld [vmem:[%s2] sm:$0xff]
        %v3704 = vld [vmem:[%s2 + $0x8] sm:$0xff]
        %v3705 = vld [vmem:[%s2 + $0x10] sm:$0xff]
        %v3706 = vld [vmem:[%s2 + $0x18] sm:$0xff]
        %v3707 = vld [vmem:[%s2 + $0x20] sm:$0xff]
        %v3708 = vld [vmem:[%s2 + $0x28] sm:$0xff]
        %v3709 = vld [vmem:[%s2 + $0x30] sm:$0xff]
        %v3710 = vld [vmem:[%s2 + $0x38] sm:$0xff]
        %v3711 = vld [vmem:[%s2 + $0x40] sm:$0xff]
        %v3712 = vld [vmem:[%s2 + $0x48] sm:$0xff]
        %v3713 = vld [vmem:[%s2 + $0x50] sm:$0xff]
        %v3714 = vld [vmem:[%s2 + $0x58] sm:$0xff]
        %v3715 = vld [vmem:[%s2 + $0x60] sm:$0xff]
        %v3716 = vld [vmem:[%s2 + $0x68] sm:$0xff]
        %v3717 = vld [vmem:[%s2 + $0x70] sm:$0xff]
        %v3718 = vld [vmem:[%s2 + $0x78] sm:$0xff]
        %v3719 = vld [vmem:[%s3] sm:$0x1]
        %v3721 = vlaneseq
        %v3722 = vshrl.u32 %v3721, 7
        %v3723 = vsub.s32 0, %v3722
        %v3724 = vrot.slane %v3719, %v3723
        %vm3734 = vcmask 1041409
        %v3735 = vsel %vm3734, %v3480, %v3443
        %vm3736 = vcmask 1042434
        %v3737 = vsel %vm3736, %v3517, %v3735
        %vm3738 = vcmask 1043459
        %v3739 = vsel %vm3738, %v3554, %v3737
        %vm3740 = vcmask 1044484
        %v3741 = vsel %vm3740, %v3591, %v3739
        %vm3742 = vcmask 1045509
        %v3743 = vsel %vm3742, %v3628, %v3741
        %vm3744 = vcmask 1046534
        %v3745 = vsel %vm3744, %v3665, %v3743
        %vm3746 = vcmask 1047559
        %v3747 = vsel %vm3746, %v3702, %v3745
        %3749 = vmatprep.subr.mxu0 0.0
        %3750 = vmatpush1.msra.mxu0 %v3718
        %3751 = vmatprep.subr.mxu0 0.0
        %3752 = vmatpush1.msra.mxu0 %v3717
        %3753 = vmatprep.subr.mxu0 0.0
        %3754 = vmatpush1.msra.mxu0 %v3716
        %3755 = vmatprep.subr.mxu0 0.0
        %3756 = vmatpush1.msra.mxu0 %v3715
        %3757 = vmatprep.subr.mxu0 0.0
        %3758 = vmatpush1.msra.mxu0 %v3714
        %3759 = vmatprep.subr.mxu0 0.0
        %3760 = vmatpush1.msra.mxu0 %v3713
        %3761 = vmatprep.subr.mxu0 0.0
        %3762 = vmatpush1.msra.mxu0 %v3712
        %3763 = vmatprep.subr.mxu0 0.0
        %3764 = vmatpush1.msra.mxu0 %v3711
        %3765 = vmatprep.subr.mxu0 0.0
        %3766 = vmatpush1.msra.mxu0 %v3710
        %3767 = vmatprep.subr.mxu0 0.0
        %3768 = vmatpush1.msra.mxu0 %v3709
        %3769 = vmatprep.subr.mxu0 0.0
        %3770 = vmatpush1.msra.mxu0 %v3708
        %3771 = vmatprep.subr.mxu0 0.0
        %3772 = vmatpush1.msra.mxu0 %v3707
        %3773 = vmatprep.subr.mxu0 0.0
        %3774 = vmatpush1.msra.mxu0 %v3706
        %3775 = vmatprep.subr.mxu0 0.0
        %3776 = vmatpush1.msra.mxu0 %v3705
        %3777 = vmatprep.subr.mxu0 0.0
        %3778 = vmatpush1.msra.mxu0 %v3704
        %3779 = vmatprep.subr.mxu0 0.0
        %3780 = vmatpush1.msra.mxu0 %v3703
        %3781 = vmatprep.subr.mxu0 0.0
        %3782 = vmatpush2.msra.mxu0 0.0
        %3783 = vmatprep.subr.mxu0 0.0
        %3784 = vmatpush2.msra.mxu0 0.0
        %3785 = vmatprep.subr.mxu0 0.0
        %3786 = vmatpush2.msra.mxu0 0.0
        %3787 = vmatprep.subr.mxu0 0.0
        %3788 = vmatpush2.msra.mxu0 0.0
        %3789 = vmatprep.subr.mxu0 0.0
        %3790 = vmatpush2.msra.mxu0 0.0
        %3791 = vmatprep.subr.mxu0 0.0
        %3792 = vmatpush2.msra.mxu0 0.0
        %3793 = vmatprep.subr.mxu0 0.0
        %3794 = vmatpush2.msra.mxu0 0.0
        %3795 = vmatprep.subr.mxu0 0.0
        %3796 = vmatpush2.msra.mxu0 0.0
        %3797 = vmatprep.subr.mxu0 0.0
        %3798 = vmatpush2.msra.mxu0 0.0
        %3799 = vmatprep.subr.mxu0 0.0
        %3800 = vmatpush2.msra.mxu0 0.0
        %3801 = vmatprep.subr.mxu0 0.0
        %3802 = vmatpush2.msra.mxu0 0.0
        %3803 = vmatprep.subr.mxu0 0.0
        %3804 = vmatpush2.msra.mxu0 0.0
        %3805 = vmatprep.subr.mxu0 0.0
        %3806 = vmatpush2.msra.mxu0 0.0
        %3807 = vmatprep.subr.mxu0 0.0
        %3808 = vmatpush2.msra.mxu0 0.0
        %3809 = vmatprep.subr.mxu0 0.0
        %3810 = vmatpush2.msra.mxu0 0.0
        %3811 = vmatprep.subr.mxu0 0.0
        %3812 = vmatpush2.msra.mxu0 0.0
        %3813 = vmatprep.mubr.f32.mxu0 0.0
        %3814 = vmatmul.mubr.f32.gmra.mxu0 %v3747
        %v3815 = vpop.f32.mrf.mxu0
        %v3816 = vadd.f32 %v3724, %v3815
        %v3817 = vpop.f32.mrf.mxu0
        %3818 = vdwg.mxu0
        %v3819 = vmax.f32 %v3816, 0.0
        %v3820 = vld [vmem:[%s4] sm:$0xff]
        %v3821 = vld [vmem:[%s4 + $0x8] sm:$0xff]
        %v3822 = vld [vmem:[%s4 + $0x10] sm:$0xff]
        %v3823 = vld [vmem:[%s4 + $0x18] sm:$0xff]
        %v3824 = vld [vmem:[%s4 + $0x20] sm:$0xff]
        %v3825 = vld [vmem:[%s4 + $0x28] sm:$0xff]
        %v3826 = vld [vmem:[%s4 + $0x30] sm:$0xff]
        %v3827 = vld [vmem:[%s4 + $0x38] sm:$0xff]
        %v3828 = vld [vmem:[%s4 + $0x40] sm:$0xff]
        %v3829 = vld [vmem:[%s4 + $0x48] sm:$0xff]
        %v3830 = vld [vmem:[%s4 + $0x50] sm:$0xff]
        %v3831 = vld [vmem:[%s4 + $0x58] sm:$0xff]
        %v3832 = vld [vmem:[%s4 + $0x60] sm:$0xff]
        %v3833 = vld [vmem:[%s4 + $0x68] sm:$0xff]
        %v3834 = vld [vmem:[%s4 + $0x70] sm:$0xff]
        %v3835 = vld [vmem:[%s4 + $0x78] sm:$0xff]
        %v3836 = vld [vmem:[%s5] sm:$0x1]
        %v3838 = vlaneseq
        %v3839 = vshrl.u32 %v3838, 7
        %v3840 = vsub.s32 0, %v3839
        %v3841 = vrot.slane %v3836, %v3840
        %3843 = vmatprep.subr.mxu0 0.0
        %3844 = vmatpush1.msra.mxu0 %v3835
        %3845 = vmatprep.subr.mxu0 0.0
        %3846 = vmatpush1.msra.mxu0 %v3834
        %3847 = vmatprep.subr.mxu0 0.0
        %3848 = vmatpush1.msra.mxu0 %v3833
        %3849 = vmatprep.subr.mxu0 0.0
        %3850 = vmatpush1.msra.mxu0 %v3832
        %3851 = vmatprep.subr.mxu0 0.0
        %3852 = vmatpush1.msra.mxu0 %v3831
        %3853 = vmatprep.subr.mxu0 0.0
        %3854 = vmatpush1.msra.mxu0 %v3830
        %3855 = vmatprep.subr.mxu0 0.0
        %3856 = vmatpush1.msra.mxu0 %v3829
        %3857 = vmatprep.subr.mxu0 0.0
        %3858 = vmatpush1.msra.mxu0 %v3828
        %3859 = vmatprep.subr.mxu0 0.0
        %3860 = vmatpush1.msra.mxu0 %v3827
        %3861 = vmatprep.subr.mxu0 0.0
        %3862 = vmatpush1.msra.mxu0 %v3826
        %3863 = vmatprep.subr.mxu0 0.0
        %3864 = vmatpush1.msra.mxu0 %v3825
        %3865 = vmatprep.subr.mxu0 0.0
        %3866 = vmatpush1.msra.mxu0 %v3824
        %3867 = vmatprep.subr.mxu0 0.0
        %3868 = vmatpush1.msra.mxu0 %v3823
        %3869 = vmatprep.subr.mxu0 0.0
        %3870 = vmatpush1.msra.mxu0 %v3822
        %3871 = vmatprep.subr.mxu0 0.0
        %3872 = vmatpush1.msra.mxu0 %v3821
        %3873 = vmatprep.subr.mxu0 0.0
        %3874 = vmatpush1.msra.mxu0 %v3820
        %3875 = vmatprep.subr.mxu0 0.0
        %3876 = vmatpush2.msra.mxu0 0.0
        %3877 = vmatprep.subr.mxu0 0.0
        %3878 = vmatpush2.msra.mxu0 0.0
        %3879 = vmatprep.subr.mxu0 0.0
        %3880 = vmatpush2.msra.mxu0 0.0
        %3881 = vmatprep.subr.mxu0 0.0
        %3882 = vmatpush2.msra.mxu0 0.0
        %3883 = vmatprep.subr.mxu0 0.0
        %3884 = vmatpush2.msra.mxu0 0.0
        %3885 = vmatprep.subr.mxu0 0.0
        %3886 = vmatpush2.msra.mxu0 0.0
        %3887 = vmatprep.subr.mxu0 0.0
        %3888 = vmatpush2.msra.mxu0 0.0
        %3889 = vmatprep.subr.mxu0 0.0
        %3890 = vmatpush2.msra.mxu0 0.0
        %3891 = vmatprep.subr.mxu0 0.0
        %3892 = vmatpush2.msra.mxu0 0.0
        %3893 = vmatprep.subr.mxu0 0.0
        %3894 = vmatpush2.msra.mxu0 0.0
        %3895 = vmatprep.subr.mxu0 0.0
        %3896 = vmatpush2.msra.mxu0 0.0
        %3897 = vmatprep.subr.mxu0 0.0
        %3898 = vmatpush2.msra.mxu0 0.0
        %3899 = vmatprep.subr.mxu0 0.0
        %3900 = vmatpush2.msra.mxu0 0.0
        %3901 = vmatprep.subr.mxu0 0.0
        %3902 = vmatpush2.msra.mxu0 0.0
        %3903 = vmatprep.subr.mxu0 0.0
        %3904 = vmatpush2.msra.mxu0 0.0
        %3905 = vmatprep.subr.mxu0 0.0
        %3906 = vmatpush2.msra.mxu0 0.0
        %3907 = vmatprep.mubr.f32.mxu0 0.0
        %3908 = vmatmul.mubr.f32.gmra.mxu0 %v3819
        %v3909 = vpop.f32.mrf.mxu0
        %v3910 = vadd.f32 %v3841, %v3909
        %v3911 = vpop.f32.mrf.mxu0
        %3912 = vdwg.mxu0
        %3913 = vst [vmem:[%s245] sm:$0xff] %v3910
        %s3914 = sand.u32 %s159, 1
        %s3915 = scalar_lea.sflag [#allocation3], %s3914
        %s3916 = sand.u32 %s159, 1
        %s3917 = smul.addr %s3916, 8
        %s3918 = scalar_lea.vmem [#allocation2], %s3917
        // Predicated region
        $region45: #{tpu_custom_call.1} parent=43 // pred_check
          %p3919 = pneg %p169
        $region46: #{tpu_custom_call.1} parent=43 // pred_check_branch
          %3921 = sbr.rel (%p3919) target = $region48
        $region47: #{tpu_custom_call.1} parent=43 // pred_region
          %s3923 = ssub.s32 128, 128
          %3924 = vsyncadd %s3915, %s3923
          %s3925 = smul.addr %s20, 128
          %s3926 = scalar_lea.hbm %s6, %s3925
          %s3928 = sshll.u32 %s3918, 4
          %s3929 = int_to_ptr.vmem [resolvable:$true] %s3928
          %3931 = dma.vmem_to_hbm [thread:$0]  %s3929, 128, %s3926, %s3915
        $region48: #{tpu_custom_call.1} parent=43 // pred_fallthru
          _
      $region44: #{tpu_custom_call.1} parent=5 // pred_fallthru
        _
      %p3932 = scmp.le.s32.totalorder 2, %s15
      // Predicated region
      $region49: #{tpu_custom_call.1} parent=5 // pred_check
        %p3933 = pneg %p3932
      $region50: #{tpu_custom_call.1} parent=5 // pred_check_branch
        %3935 = sbr.rel (%p3933) target = $region52
      $region51: #{tpu_custom_call.1} parent=5 // pred_region
        %s3936 = ssub.s32 %s15, 2
        // Predicated region
        $region53: #{tpu_custom_call.1} parent=51 // pred_check
          %p3937 = pneg %p175
        $region54: #{tpu_custom_call.1} parent=51 // pred_check_branch
          %3939 = sbr.rel (%p3937) target = $region56
        $region55: #{tpu_custom_call.1} parent=51 // pred_region
          %s3940 = sand.u32 %s160, 1
          %s3941 = scalar_lea.sflag [#allocation3], %s3940
          %s3942 = sand.u32 %s160, 1
          %s3943 = smul.addr %s3942, 8
          %s3944 = scalar_lea.vmem [#allocation2], %s3943
          %3945 = dma.done %s3941, 128
        $region56: #{tpu_custom_call.1} parent=51 // pred_fallthru
          _
      $region52: #{tpu_custom_call.1} parent=5 // pred_fallthru
        _
    $region6: #{tpu_custom_call.1} parent=1 // loop_footer
      %s19 = sadd.s32 1, %s15
    $region7: #{tpu_custom_call.1} parent=1 // loop_footer_branch
      %14 = sbr.rel target = $region3
    $region8: #{tpu_custom_call.1} parent=1 // loop_exit
      _
    %3946 = vsyncpa [#allocation3], 1
    %s3947 = scalar_lea.sflag [#allocation3], 1
    %3948 = vsyncpa %s3947, 1

</llo_original>
